<compile_context>
chip_gen: v6e
topology: v6e:2x2x1
jax: 0.10.0
libtpu: 0.0.40
codegen_flags: <defaults>
</compile_context>

<pallas_src>
import jax
import jax.numpy as jnp
from jax.experimental import pallas as pl
from jax.experimental.pallas import tpu as pltpu

# ---- synthetic CONFIG (mirrors the PyTorch module's CONFIG) ----
IMG_HEIGHT = 16          # cnn_output_height = IMG_HEIGHT // 4 = 4
IMG_WIDTH = 32           # sequence length after CNN = IMG_WIDTH // 4 = 8
NUM_CLASSES = 10         # classifier output = NUM_CLASSES + 1 = 11
HIDDEN = 48
HPAD = 64                # per-gate lane padding for the LSTM (48 -> 64)
BATCH = 2
EPS = 1e-5
C1, C2 = 16, 32
T_SEQ = IMG_WIDTH // 4   # 8
H2 = IMG_HEIGHT // 4     # 4

VMEM = pltpu.MemorySpace.VMEM


# ----------------------------- Pallas kernels -----------------------------

def conv1_pool_kernel(p_ref, w_ref, scale_ref, shift_ref, o_ref):
    """conv1 (bias folded into last weight row) -> ReLU -> BN1 -> 2x2 max-pool.

    p: (4*B*Hp*Wp, 10) bf16, rows ordered (hi, wi, b, hp, wp) so pooling is two
    contiguous row-halvings. out: (B*Hp*Wp, C1) f32, rows (b, hp, wp).
    """
    z = jnp.dot(p_ref[...], w_ref[...], preferred_element_type=jnp.float32)
    y = jnp.maximum(z, 0.0) * scale_ref[...] + shift_ref[...]
    n = y.shape[0]
    m = jnp.maximum(y[: n // 2], y[n // 2:])                     # pool over hi
    o_ref[...] = jnp.maximum(m[: n // 4], m[n // 4: n // 2])     # pool over wi


def tail_kernel(p2_ref, w2_ref, scale2_ref, shift2_ref,
                wr_ref, br_ref, wih_ref, whh_ref, bl_ref,
                wc_ref, bc_ref, o_ref, xg_ref, h_ref):
    """conv2+BN2+pool2 -> reshape-Linear -> BiLSTM -> classifier -> log_softmax.

    p2: (4*H2*T*B, 145) bf16, rows ordered (hi2, wi2, hp2, wp2, b).
    Output: (T*B, NUM_CLASSES+1) f32, rows ordered (t, b).
    """
    # ---- conv2 (+bias via ones column) -> ReLU -> BN2 -> 2x2 max-pool ----
    z2 = jnp.dot(p2_ref[...], w2_ref[...], preferred_element_type=jnp.float32)
    y2 = jnp.maximum(z2, 0.0) * scale2_ref[...] + shift2_ref[...]
    n = y2.shape[0]
    m = jnp.maximum(y2[: n // 2], y2[n // 2:])                   # pool over hi2
    pooled2 = jnp.maximum(m[: n // 4], m[n // 4: n // 2])        # (H2*T*B, C2), rows (hp2, t, b)

    tb = pooled2.shape[0] // H2                                  # = T*B
    B = tb // T_SEQ

    # ---- reshape Linear: feature index = c*H2 + h  ->  sum_h pooled2_h @ Wr_h ----
    acc = jnp.dot(pooled2[0:tb, :].astype(jnp.bfloat16), wr_ref[0],
                  preferred_element_type=jnp.float32)
    for h in range(1, H2):
        acc = acc + jnp.dot(pooled2[h * tb:(h + 1) * tb, :].astype(jnp.bfloat16),
                            wr_ref[h], preferred_element_type=jnp.float32)
    seq = acc + br_ref[...]                                      # (T*B, HIDDEN), rows (t, b)
    # TODO(synk): nn.Dropout is identity in eval/inference mode; no mask applied.

    # ---- bidirectional LSTM (gate order i, f, g, o; each gate padded to HPAD lanes) ----
    seq_bf = seq.astype(jnp.bfloat16)
    for d, reverse in ((0, False), (1, True)):
        # hoist the input projection for all timesteps out of the recurrence
        xg_ref[...] = (jnp.dot(seq_bf, wih_ref[d],
                               preferred_element_type=jnp.float32) + bl_ref[d])
        whh_d = whh_ref[d]                                       # (HPAD, 4*HPAD) bf16
        h = jnp.zeros((B, HPAD), jnp.float32)
        c = jnp.zeros((B, HPAD), jnp.float32)
        steps = range(T_SEQ - 1, -1, -1) if reverse else range(T_SEQ)
        for t in steps:                                          # fully unrolled, T=8
            g = (xg_ref[t * B:(t + 1) * B, :]
                 + jnp.dot(h.astype(jnp.bfloat16), whh_d,
                           preferred_element_type=jnp.float32))  # (B, 4*HPAD)
            i_g = jax.nn.sigmoid(g[:, 0 * HPAD:1 * HPAD])
            f_g = jax.nn.sigmoid(g[:, 1 * HPAD:2 * HPAD])
            g_g = jnp.tanh(g[:, 2 * HPAD:3 * HPAD])
            o_g = jax.nn.sigmoid(g[:, 3 * HPAD:4 * HPAD])
            c = f_g * c + i_g * g_g
            h = o_g * jnp.tanh(c)
            h_ref[d, t * B:(t + 1) * B, :] = h                   # pad lanes stay exactly 0

    # ---- classifier + log_softmax ----
    hs = h_ref[...]                                              # (2, T*B, HPAD)
    cls_in = jnp.concatenate([hs[0], hs[1]], axis=-1).astype(jnp.bfloat16)  # (T*B, 2*HPAD)
    logits = (jnp.dot(cls_in, wc_ref[...], preferred_element_type=jnp.float32)
              + bc_ref[...])                                     # (T*B, NUM_CLASSES+1)
    mx = jnp.max(logits, axis=-1, keepdims=True)
    e = jnp.exp(logits - mx)
    o_ref[...] = (logits - mx) - jnp.log(jnp.sum(e, axis=-1, keepdims=True))


# ----------------------------- JAX-side glue / weight packing -----------------------------

def _fold_bn(gamma, beta, mean, var):
    scale = gamma / jnp.sqrt(var + EPS)
    shift = beta - mean * scale
    return scale, shift


def _im2col_pool_order(img_nhwc_or_nhw, khw, out_hw):
    """3x3 pad=1 patches with output-pixel rows ordered (hi, wi, b, hp, wp)."""
    pass  # (documentation only; actual construction is inline below)


def _pack_lstm_dir(wih, whh, bih, bhh):
    """Fuse 4 gates into (HIDDEN, 4*HPAD)/(HPAD, 4*HPAD) matrices, gates padded to HPAD."""
    f32 = jnp.float32
    wih_p = jnp.zeros((HIDDEN, 4 * HPAD), f32)
    whh_p = jnp.zeros((HPAD, 4 * HPAD), f32)
    b_p = jnp.zeros((1, 4 * HPAD), f32)
    b = bih + bhh
    for g in range(4):
        wih_p = wih_p.at[:, g * HPAD: g * HPAD + HIDDEN].set(
            wih[g * HIDDEN:(g + 1) * HIDDEN, :].T)
        whh_p = whh_p.at[:HIDDEN, g * HPAD: g * HPAD + HIDDEN].set(
            whh[g * HIDDEN:(g + 1) * HIDDEN, :].T)
        b_p = b_p.at[0, g * HPAD: g * HPAD + HIDDEN].set(
            b[g * HIDDEN:(g + 1) * HIDDEN])
    return wih_p.astype(jnp.bfloat16), whh_p.astype(jnp.bfloat16), b_p


def forward(params, x_nchw):
    f32, bf16 = jnp.float32, jnp.bfloat16
    B = x_nchw.shape[0]
    H, W = IMG_HEIGHT, IMG_WIDTH
    Hp, Wp = H // 2, W // 2                                      # 8, 16

    # -------- conv block 1: im2col with pooling-friendly row order (hi, wi, b, hp, wp) --------
    img = x_nchw[:, 0, :, :]                                     # (B, H, W)
    xp = jnp.pad(img, ((0, 0), (1, 1), (1, 1)))                  # (B, H+2, W+2)
    cols = jnp.stack([xp[:, kh:kh + H, kw:kw + W]
                      for kh in range(3) for kw in range(3)], axis=-1)   # (B, H, W, 9)
    cols = cols.reshape(B, Hp, 2, Wp, 2, 9)                      # (b, hp, hi, wp, wi, k)
    cols = cols.transpose(2, 4, 0, 1, 3, 5).reshape(B * H * W, 9)
    patches1 = jnp.concatenate(
        [cols, jnp.ones((cols.shape[0], 1), f32)], axis=-1).astype(bf16)  # (B*H*W, 10)

    w1 = jnp.transpose(params["conv1_w"].reshape(C1, 9), (1, 0))          # (9, C1)
    w1 = jnp.concatenate([w1, params["conv1_b"].reshape(1, C1)], 0).astype(bf16)
    s1, t1 = _fold_bn(params["bn1_gamma"], params["bn1_beta"],
                      params["bn1_mean"], params["bn1_var"])

    pooled1 = pl.pallas_call(
        conv1_pool_kernel,
        out_shape=jax.ShapeDtypeStruct((B * Hp * Wp, C1), f32),
        in_specs=[pl.BlockSpec(memory_space=VMEM)] * 4,
        out_specs=pl.BlockSpec(memory_space=VMEM),
    )(patches1, w1, s1.reshape(1, C1), t1.reshape(1, C1))        # rows (b, hp, wp)

    # -------- conv block 2 im2col (rows ordered (hi2, wi2, hp2, wp2, b)) --------
    img1 = pooled1.reshape(B, Hp, Wp, C1)
    img1 = jnp.pad(img1, ((0, 0), (1, 1), (1, 1), (0, 0)))       # (B, Hp+2, Wp+2, C1)
    cols2 = jnp.concatenate([img1[:, kh:kh + Hp, kw:kw + Wp, :]
                             for kh in range(3) for kw in range(3)],
                            axis=-1)                             # (B, Hp, Wp, 9*C1)
    cols2 = cols2.reshape(B, H2, 2, T_SEQ, 2, 9 * C1)            # (b, hp2, hi2, wp2, wi2, f)
    cols2 = cols2.transpose(2, 4, 1, 3, 0, 5).reshape(B * Hp * Wp, 9 * C1)
    patches2 = jnp.concatenate(
        [cols2, jnp.ones((cols2.shape[0], 1), f32)], axis=-1).astype(bf16)  # (B*Hp*Wp, 145)

    w2 = jnp.transpose(params["conv2_w"], (2, 3, 1, 0)).reshape(9 * C1, C2)  # (144, C2)
    w2 = jnp.concatenate([w2, params["conv2_b"].reshape(1, C2)], 0).astype(bf16)
    s2, t2 = _fold_bn(params["bn2_gamma"], params["bn2_beta"],
                      params["bn2_mean"], params["bn2_var"])

    # reshape-Linear decomposed over h: wr[h][c, j] = reshape_w[j, c*H2 + h]
    wr = params["reshape_w"].reshape(HIDDEN, C2, H2).transpose(2, 1, 0).astype(bf16)
    br = params["reshape_b"].reshape(1, HIDDEN)

    wih_f, whh_f, bl_f = _pack_lstm_dir(params["lstm_wih_fwd"], params["lstm_whh_fwd"],
                                        params["lstm_bih_fwd"], params["lstm_bhh_fwd"])
    wih_b, whh_b, bl_b = _pack_lstm_dir(params["lstm_wih_bwd"], params["lstm_whh_bwd"],
                                        params["lstm_bih_bwd"], params["lstm_bhh_bwd"])
    wih = jnp.stack([wih_f, wih_b])                              # (2, HIDDEN, 4*HPAD) bf16
    whh = jnp.stack([whh_f, whh_b])                              # (2, HPAD, 4*HPAD) bf16
    bl = jnp.stack([bl_f, bl_b])                                 # (2, 1, 4*HPAD) f32

    wc = jnp.zeros((2 * HPAD, NUM_CLASSES + 1), f32)
    wc = wc.at[:HIDDEN, :].set(params["cls_w"][:, :HIDDEN].T)
    wc = wc.at[HPAD:HPAD + HIDDEN, :].set(params["cls_w"][:, HIDDEN:].T)
    wc = wc.astype(bf16)
    bc = params["cls_b"].reshape(1, NUM_CLASSES + 1)

    out = pl.pallas_call(
        tail_kernel,
        out_shape=jax.ShapeDtypeStruct((T_SEQ * B, NUM_CLASSES + 1), f32),
        in_specs=[pl.BlockSpec(memory_space=VMEM)] * 11,
        out_specs=pl.BlockSpec(memory_space=VMEM),
        scratch_shapes=[pltpu.VMEM((T_SEQ * B, 4 * HPAD), jnp.float32),   # pre-projected gates
                        pltpu.VMEM((2, T_SEQ * B, HPAD), jnp.float32)],   # per-dir hidden outputs
    )(patches2, w2, s2.reshape(1, C2), t2.reshape(1, C2),
      wr, br, wih, whh, bl, wc, bc)                              # (T*B, 11), rows (t, b)

    return out.reshape(T_SEQ, B, NUM_CLASSES + 1).transpose(1, 0, 2)


# ----------------------------- deterministic init -----------------------------

def init_params(key):
    ks = iter(jax.random.split(key, 32))

    def nrm(shape, s=0.1):
        return s * jax.random.normal(next(ks), shape, jnp.float32)

    p = {}
    p["conv1_w"] = nrm((16, 1, 3, 3)); p["conv1_b"] = nrm((16,))
    p["bn1_gamma"] = 1.0 + nrm((16,)); p["bn1_beta"] = nrm((16,))
    p["bn1_mean"] = nrm((16,)); p["bn1_var"] = 1.0 + jnp.abs(nrm((16,)))
    p["conv2_w"] = nrm((32, 16, 3, 3)); p["conv2_b"] = nrm((32,))
    p["bn2_gamma"] = 1.0 + nrm((32,)); p["bn2_beta"] = nrm((32,))
    p["bn2_mean"] = nrm((32,)); p["bn2_var"] = 1.0 + jnp.abs(nrm((32,)))
    cnn_out_h = IMG_HEIGHT // 4
    p["reshape_w"] = nrm((HIDDEN, 32 * cnn_out_h)); p["reshape_b"] = nrm((HIDDEN,))
    for d in ("fwd", "bwd"):
        p[f"lstm_wih_{d}"] = nrm((4 * HIDDEN, HIDDEN))
        p[f"lstm_whh_{d}"] = nrm((4 * HIDDEN, HIDDEN))
        p[f"lstm_bih_{d}"] = nrm((4 * HIDDEN,))
        p[f"lstm_bhh_{d}"] = nrm((4 * HIDDEN,))
    p["cls_w"] = nrm((NUM_CLASSES + 1, 2 * HIDDEN))
    p["cls_b"] = nrm((NUM_CLASSES + 1,))
    return p


if __name__ == "__main__":
    key = jax.random.PRNGKey(0)
    pkey, xkey = jax.random.split(key)
    params = init_params(pkey)
    x = jax.random.normal(xkey, (BATCH, 1, IMG_HEIGHT, IMG_WIDTH), jnp.float32)

    out = jax.jit(forward)(params, x)
    out = jax.block_until_ready(out)

    assert out.shape == (BATCH, IMG_WIDTH // 4, NUM_CLASSES + 1), out.shape
    assert bool(jnp.all(jnp.isfinite(out)))
    # log_softmax rows should (log-)sum to ~0
    assert bool(jnp.allclose(jax.scipy.special.logsumexp(out, axis=2), 0.0, atol=1e-4))
    print("KERNEL_OK")
</pallas_src>

<mosaic_0001>
module attributes {stable_mosaic.version = 11 : i64} {
  func.func @conv1_pool_kernel(%arg0: memref<1024x10xbf16, #tpu.memory_space<vmem>>, %arg1: memref<10x16xbf16, #tpu.memory_space<vmem>>, %arg2: memref<1x16xf32, #tpu.memory_space<vmem>>, %arg3: memref<1x16xf32, #tpu.memory_space<vmem>>, %arg4: memref<256x16xf32, #tpu.memory_space<vmem>>) attributes {dimension_semantics = [], scalar_prefetch = 0 : i64, scratch_operands = 0 : i64, tpu.core_type = #tpu.core_type<tc>} {
    %c0 = arith.constant 0 : index
    %c0_0 = arith.constant 0 : index
    %0 = vector.load %arg0[%c0, %c0_0] : memref<1024x10xbf16, #tpu.memory_space<vmem>>, vector<1024x10xbf16>
    %c0_1 = arith.constant 0 : index
    %c0_2 = arith.constant 0 : index
    %1 = vector.load %arg1[%c0_1, %c0_2] : memref<10x16xbf16, #tpu.memory_space<vmem>>, vector<10x16xbf16>
    %cst = arith.constant dense<0.000000e+00> : vector<1024x16xf32>
    %2 = tpu.matmul %0, %1, %cst {dimension_numbers = #tpu.dot_dimension_numbers<[1], [0], [0], [1], [0, 0, 1, 1], [], []>} : vector<1024x10xbf16>, vector<10x16xbf16>, vector<1024x16xf32> -> vector<1024x16xf32>
    %cst_3 = arith.constant 0.000000e+00 : f32
    %3 = vector.broadcast %cst_3 : f32 to vector<1024x16xf32>
    %4 = arith.maximumf %2, %3 : vector<1024x16xf32>
    %c0_4 = arith.constant 0 : index
    %c0_5 = arith.constant 0 : index
    %5 = vector.load %arg2[%c0_4, %c0_5] : memref<1x16xf32, #tpu.memory_space<vmem>>, vector<1x16xf32>
    %6 = vector.broadcast %5 : vector<1x16xf32> to vector<1024x16xf32>
    %7 = arith.mulf %4, %6 : vector<1024x16xf32>
    %c0_6 = arith.constant 0 : index
    %c0_7 = arith.constant 0 : index
    %8 = vector.load %arg3[%c0_6, %c0_7] : memref<1x16xf32, #tpu.memory_space<vmem>>, vector<1x16xf32>
    %9 = vector.broadcast %8 : vector<1x16xf32> to vector<1024x16xf32>
    %10 = arith.addf %7, %9 : vector<1024x16xf32>
    %11 = vector.extract_strided_slice %10 {offsets = [0, 0], sizes = [512, 16], strides = [1, 1]} : vector<1024x16xf32> to vector<512x16xf32>
    %12 = vector.extract_strided_slice %10 {offsets = [512, 0], sizes = [512, 16], strides = [1, 1]} : vector<1024x16xf32> to vector<512x16xf32>
    %13 = arith.maximumf %11, %12 : vector<512x16xf32>
    %14 = vector.extract_strided_slice %13 {offsets = [0, 0], sizes = [256, 16], strides = [1, 1]} : vector<512x16xf32> to vector<256x16xf32>
    %15 = vector.extract_strided_slice %13 {offsets = [256, 0], sizes = [256, 16], strides = [1, 1]} : vector<512x16xf32> to vector<256x16xf32>
    %16 = arith.maximumf %14, %15 : vector<256x16xf32>
    %c0_8 = arith.constant 0 : index
    %c0_9 = arith.constant 0 : index
    %17 = vector.load %arg4[%c0_8, %c0_9] : memref<256x16xf32, #tpu.memory_space<vmem>>, vector<256x16xf32>
    tpu.vector_store %arg4[%c0_8, %c0_9], %16 {strides = array<i32>} : memref<256x16xf32, #tpu.memory_space<vmem>>, vector<256x16xf32>,
    return
  }
}

module attributes {stable_mosaic.version = 11 : i64} {
  func.func @tail_kernel(%arg0: memref<256x145xbf16, #tpu.memory_space<vmem>>, %arg1: memref<145x32xbf16, #tpu.memory_space<vmem>>, %arg2: memref<1x32xf32, #tpu.memory_space<vmem>>, %arg3: memref<1x32xf32, #tpu.memory_space<vmem>>, %arg4: memref<4x32x48xbf16, #tpu.memory_space<vmem>>, %arg5: memref<1x48xf32, #tpu.memory_space<vmem>>, %arg6: memref<2x48x256xbf16, #tpu.memory_space<vmem>>, %arg7: memref<2x64x256xbf16, #tpu.memory_space<vmem>>, %arg8: memref<2x1x256xf32, #tpu.memory_space<vmem>>, %arg9: memref<128x11xbf16, #tpu.memory_space<vmem>>, %arg10: memref<1x11xf32, #tpu.memory_space<vmem>>, %arg11: memref<16x11xf32, #tpu.memory_space<vmem>>, %arg12: memref<16x256xf32, #tpu.memory_space<vmem>>, %arg13: memref<2x16x64xf32, #tpu.memory_space<vmem>>) attributes {dimension_semantics = [], scalar_prefetch = 0 : i64, scratch_operands = 2 : i64, tpu.core_type = #tpu.core_type<tc>} {
    %c0 = arith.constant 0 : index
    %c0_0 = arith.constant 0 : index
    %0 = vector.load %arg0[%c0, %c0_0] : memref<256x145xbf16, #tpu.memory_space<vmem>>, vector<256x145xbf16>
    %c0_1 = arith.constant 0 : index
    %c0_2 = arith.constant 0 : index
    %1 = vector.load %arg1[%c0_1, %c0_2] : memref<145x32xbf16, #tpu.memory_space<vmem>>, vector<145x32xbf16>
    %cst = arith.constant dense<0.000000e+00> : vector<256x32xf32>
    %2 = tpu.matmul %0, %1, %cst {dimension_numbers = #tpu.dot_dimension_numbers<[1], [0], [0], [1], [0, 0, 1, 1], [], []>} : vector<256x145xbf16>, vector<145x32xbf16>, vector<256x32xf32> -> vector<256x32xf32>
    %cst_3 = arith.constant 0.000000e+00 : f32
    %3 = vector.broadcast %cst_3 : f32 to vector<256x32xf32>
    %4 = arith.maximumf %2, %3 : vector<256x32xf32>
    %c0_4 = arith.constant 0 : index
    %c0_5 = arith.constant 0 : index
    %5 = vector.load %arg2[%c0_4, %c0_5] : memref<1x32xf32, #tpu.memory_space<vmem>>, vector<1x32xf32>
    %6 = vector.broadcast %5 : vector<1x32xf32> to vector<256x32xf32>
    %7 = arith.mulf %4, %6 : vector<256x32xf32>
    %c0_6 = arith.constant 0 : index
    %c0_7 = arith.constant 0 : index
    %8 = vector.load %arg3[%c0_6, %c0_7] : memref<1x32xf32, #tpu.memory_space<vmem>>, vector<1x32xf32>
    %9 = vector.broadcast %8 : vector<1x32xf32> to vector<256x32xf32>
    %10 = arith.addf %7, %9 : vector<256x32xf32>
    %11 = vector.extract_strided_slice %10 {offsets = [0, 0], sizes = [128, 32], strides = [1, 1]} : vector<256x32xf32> to vector<128x32xf32>
    %12 = vector.extract_strided_slice %10 {offsets = [128, 0], sizes = [128, 32], strides = [1, 1]} : vector<256x32xf32> to vector<128x32xf32>
    %13 = arith.maximumf %11, %12 : vector<128x32xf32>
    %14 = vector.extract_strided_slice %13 {offsets = [0, 0], sizes = [64, 32], strides = [1, 1]} : vector<128x32xf32> to vector<64x32xf32>
    %15 = vector.extract_strided_slice %13 {offsets = [64, 0], sizes = [64, 32], strides = [1, 1]} : vector<128x32xf32> to vector<64x32xf32>
    %16 = arith.maximumf %14, %15 : vector<64x32xf32>
    %17 = vector.extract_strided_slice %16 {offsets = [0, 0], sizes = [16, 32], strides = [1, 1]} : vector<64x32xf32> to vector<16x32xf32>
    %18 = arith.truncf %17 : vector<16x32xf32> to vector<16x32xbf16>
    %c0_8 = arith.constant 0 : index
    %c0_9 = arith.constant 0 : index
    %c0_10 = arith.constant 0 : index
    %19 = vector.load %arg4[%c0_8, %c0_9, %c0_10] : memref<4x32x48xbf16, #tpu.memory_space<vmem>>, vector<1x32x48xbf16>
    %20 = vector.shape_cast %19 : vector<1x32x48xbf16> to vector<32x48xbf16>
    %cst_11 = arith.constant dense<0.000000e+00> : vector<16x48xf32>
    %21 = tpu.matmul %18, %20, %cst_11 {dimension_numbers = #tpu.dot_dimension_numbers<[1], [0], [0], [1], [0, 0, 1, 1], [], []>} : vector<16x32xbf16>, vector<32x48xbf16>, vector<16x48xf32> -> vector<16x48xf32>
    %22 = vector.extract_strided_slice %16 {offsets = [16, 0], sizes = [16, 32], strides = [1, 1]} : vector<64x32xf32> to vector<16x32xf32>
    %23 = arith.truncf %22 : vector<16x32xf32> to vector<16x32xbf16>
    %c1 = arith.constant 1 : index
    %c0_12 = arith.constant 0 : index
    %c0_13 = arith.constant 0 : index
    %24 = vector.load %arg4[%c1, %c0_12, %c0_13] : memref<4x32x48xbf16, #tpu.memory_space<vmem>>, vector<1x32x48xbf16>
    %25 = vector.shape_cast %24 : vector<1x32x48xbf16> to vector<32x48xbf16>
    %cst_14 = arith.constant dense<0.000000e+00> : vector<16x48xf32>
    %26 = tpu.matmul %23, %25, %cst_14 {dimension_numbers = #tpu.dot_dimension_numbers<[1], [0], [0], [1], [0, 0, 1, 1], [], []>} : vector<16x32xbf16>, vector<32x48xbf16>, vector<16x48xf32> -> vector<16x48xf32>
    %27 = arith.addf %21, %26 : vector<16x48xf32>
    %28 = vector.extract_strided_slice %16 {offsets = [32, 0], sizes = [16, 32], strides = [1, 1]} : vector<64x32xf32> to vector<16x32xf32>
    %29 = arith.truncf %28 : vector<16x32xf32> to vector<16x32xbf16>
    %c2 = arith.constant 2 : index
    %c0_15 = arith.constant 0 : index
    %c0_16 = arith.constant 0 : index
    %30 = vector.load %arg4[%c2, %c0_15, %c0_16] : memref<4x32x48xbf16, #tpu.memory_space<vmem>>, vector<1x32x48xbf16>
    %31 = vector.shape_cast %30 : vector<1x32x48xbf16> to vector<32x48xbf16>
    %cst_17 = arith.constant dense<0.000000e+00> : vector<16x48xf32>
    %32 = tpu.matmul %29, %31, %cst_17 {dimension_numbers = #tpu.dot_dimension_numbers<[1], [0], [0], [1], [0, 0, 1, 1], [], []>} : vector<16x32xbf16>, vector<32x48xbf16>, vector<16x48xf32> -> vector<16x48xf32>
    %33 = arith.addf %27, %32 : vector<16x48xf32>
    %34 = vector.extract_strided_slice %16 {offsets = [48, 0], sizes = [16, 32], strides = [1, 1]} : vector<64x32xf32> to vector<16x32xf32>
    %35 = arith.truncf %34 : vector<16x32xf32> to vector<16x32xbf16>
    %c3 = arith.constant 3 : index
    %c0_18 = arith.constant 0 : index
    %c0_19 = arith.constant 0 : index
    %36 = vector.load %arg4[%c3, %c0_18, %c0_19] : memref<4x32x48xbf16, #tpu.memory_space<vmem>>, vector<1x32x48xbf16>
    %37 = vector.shape_cast %36 : vector<1x32x48xbf16> to vector<32x48xbf16>
    %cst_20 = arith.constant dense<0.000000e+00> : vector<16x48xf32>
    %38 = tpu.matmul %35, %37, %cst_20 {dimension_numbers = #tpu.dot_dimension_numbers<[1], [0], [0], [1], [0, 0, 1, 1], [], []>} : vector<16x32xbf16>, vector<32x48xbf16>, vector<16x48xf32> -> vector<16x48xf32>
    %39 = arith.addf %33, %38 : vector<16x48xf32>
    %c0_21 = arith.constant 0 : index
    %c0_22 = arith.constant 0 : index
    %40 = vector.load %arg5[%c0_21, %c0_22] : memref<1x48xf32, #tpu.memory_space<vmem>>, vector<1x48xf32>
    %41 = vector.broadcast %40 : vector<1x48xf32> to vector<16x48xf32>
    %42 = arith.addf %39, %41 : vector<16x48xf32>
    %43 = arith.truncf %42 : vector<16x48xf32> to vector<16x48xbf16>
    %c0_23 = arith.constant 0 : index
    %c0_24 = arith.constant 0 : index
    %c0_25 = arith.constant 0 : index
    %44 = vector.load %arg6[%c0_23, %c0_24, %c0_25] : memref<2x48x256xbf16, #tpu.memory_space<vmem>>, vector<1x48x256xbf16>
    %45 = vector.shape_cast %44 : vector<1x48x256xbf16> to vector<48x256xbf16>
    %cst_26 = arith.constant dense<0.000000e+00> : vector<16x256xf32>
    %46 = tpu.matmul %43, %45, %cst_26 {dimension_numbers = #tpu.dot_dimension_numbers<[1], [0], [0], [1], [0, 0, 1, 1], [], []>} : vector<16x48xbf16>, vector<48x256xbf16>, vector<16x256xf32> -> vector<16x256xf32>
    %c0_27 = arith.constant 0 : index
    %c0_28 = arith.constant 0 : index
    %c0_29 = arith.constant 0 : index
    %47 = vector.load %arg8[%c0_27, %c0_28, %c0_29] : memref<2x1x256xf32, #tpu.memory_space<vmem>>, vector<1x1x256xf32>
    %48 = vector.shape_cast %47 : vector<1x1x256xf32> to vector<1x256xf32>
    %49 = vector.broadcast %48 : vector<1x256xf32> to vector<16x256xf32>
    %50 = arith.addf %46, %49 : vector<16x256xf32>
    %c0_30 = arith.constant 0 : index
    %c0_31 = arith.constant 0 : index
    %51 = vector.load %arg12[%c0_30, %c0_31] : memref<16x256xf32, #tpu.memory_space<vmem>>, vector<16x256xf32>
    tpu.vector_store %arg12[%c0_30, %c0_31], %50 {strides = array<i32>} : memref<16x256xf32, #tpu.memory_space<vmem>>, vector<16x256xf32>,
    %c0_32 = arith.constant 0 : index
    %c0_33 = arith.constant 0 : index
    %c0_34 = arith.constant 0 : index
    %52 = vector.load %arg7[%c0_32, %c0_33, %c0_34] : memref<2x64x256xbf16, #tpu.memory_space<vmem>>, vector<1x64x256xbf16>
    %53 = vector.shape_cast %52 : vector<1x64x256xbf16> to vector<64x256xbf16>
    %cst_35 = arith.constant 0.000000e+00 : f32
    %54 = vector.broadcast %cst_35 : f32 to vector<2x64xf32>
    %cst_36 = arith.constant 0.000000e+00 : f32
    %55 = vector.broadcast %cst_36 : f32 to vector<2x64xf32>
    %c0_37 = arith.constant 0 : index
    %c0_38 = arith.constant 0 : index
    %56 = vector.load %arg12[%c0_37, %c0_38] : memref<16x256xf32, #tpu.memory_space<vmem>>, vector<2x256xf32>
    %57 = arith.truncf %54 : vector<2x64xf32> to vector<2x64xbf16>
    %cst_39 = arith.constant dense<0.000000e+00> : vector<2x256xf32>
    %58 = tpu.matmul %57, %53, %cst_39 {dimension_numbers = #tpu.dot_dimension_numbers<[1], [0], [0], [1], [0, 0, 1, 1], [], []>} : vector<2x64xbf16>, vector<64x256xbf16>, vector<2x256xf32> -> vector<2x256xf32>
    %59 = arith.addf %56, %58 : vector<2x256xf32>
    %60 = vector.extract_strided_slice %59 {offsets = [0, 0], sizes = [2, 64], strides = [1, 1]} : vector<2x256xf32> to vector<2x64xf32>
    %61 = arith.negf %60 : vector<2x64xf32>
    %62 = math.exp %61 : vector<2x64xf32>
    %cst_40 = arith.constant 1.000000e+00 : f32
    %63 = vector.broadcast %cst_40 : f32 to vector<2x64xf32>
    %64 = arith.addf %63, %62 : vector<2x64xf32>
    %65 = arith.divf %63, %64 : vector<2x64xf32>
    %66 = vector.extract_strided_slice %59 {offsets = [0, 64], sizes = [2, 64], strides = [1, 1]} : vector<2x256xf32> to vector<2x64xf32>
    %67 = arith.negf %66 : vector<2x64xf32>
    %68 = math.exp %67 : vector<2x64xf32>
    %cst_41 = arith.constant 1.000000e+00 : f32
    %69 = vector.broadcast %cst_41 : f32 to vector<2x64xf32>
    %70 = arith.addf %69, %68 : vector<2x64xf32>
    %71 = arith.divf %69, %70 : vector<2x64xf32>
    %72 = vector.extract_strided_slice %59 {offsets = [0, 128], sizes = [2, 64], strides = [1, 1]} : vector<2x256xf32> to vector<2x64xf32>
    %73 = math.tanh %72 : vector<2x64xf32>
    %74 = vector.extract_strided_slice %59 {offsets = [0, 192], sizes = [2, 64], strides = [1, 1]} : vector<2x256xf32> to vector<2x64xf32>
    %75 = arith.negf %74 : vector<2x64xf32>
    %76 = math.exp %75 : vector<2x64xf32>
    %cst_42 = arith.constant 1.000000e+00 : f32
    %77 = vector.broadcast %cst_42 : f32 to vector<2x64xf32>
    %78 = arith.addf %77, %76 : vector<2x64xf32>
    %79 = arith.divf %77, %78 : vector<2x64xf32>
    %80 = arith.mulf %71, %55 : vector<2x64xf32>
    %81 = arith.mulf %65, %73 : vector<2x64xf32>
    %82 = arith.addf %80, %81 : vector<2x64xf32>
    %83 = math.tanh %82 : vector<2x64xf32>
    %84 = arith.mulf %79, %83 : vector<2x64xf32>
    %c0_43 = arith.constant 0 : index
    %c0_44 = arith.constant 0 : index
    %c0_45 = arith.constant 0 : index
    %85 = vector.load %arg13[%c0_43, %c0_44, %c0_45] : memref<2x16x64xf32, #tpu.memory_space<vmem>>, vector<1x2x64xf32>
    %86 = vector.shape_cast %85 : vector<1x2x64xf32> to vector<2x64xf32>
    %87 = vector.shape_cast %84 : vector<2x64xf32> to vector<1x2x64xf32>
    tpu.vector_store %arg13[%c0_43, %c0_44, %c0_45], %87 {strides = array<i32>} : memref<2x16x64xf32, #tpu.memory_space<vmem>>, vector<1x2x64xf32>,
    %c2_46 = arith.constant 2 : index
    %c0_47 = arith.constant 0 : index
    %88 = vector.load %arg12[%c2_46, %c0_47] : memref<16x256xf32, #tpu.memory_space<vmem>>, vector<2x256xf32>
    %89 = arith.truncf %84 : vector<2x64xf32> to vector<2x64xbf16>
    %cst_48 = arith.constant dense<0.000000e+00> : vector<2x256xf32>
    %90 = tpu.matmul %89, %53, %cst_48 {dimension_numbers = #tpu.dot_dimension_numbers<[1], [0], [0], [1], [0, 0, 1, 1], [], []>} : vector<2x64xbf16>, vector<64x256xbf16>, vector<2x256xf32> -> vector<2x256xf32>
    %91 = arith.addf %88, %90 : vector<2x256xf32>
    %92 = vector.extract_strided_slice %91 {offsets = [0, 0], sizes = [2, 64], strides = [1, 1]} : vector<2x256xf32> to vector<2x64xf32>
    %93 = arith.negf %92 : vector<2x64xf32>
    %94 = math.exp %93 : vector<2x64xf32>
    %cst_49 = arith.constant 1.000000e+00 : f32
    %95 = vector.broadcast %cst_49 : f32 to vector<2x64xf32>
    %96 = arith.addf %95, %94 : vector<2x64xf32>
    %97 = arith.divf %95, %96 : vector<2x64xf32>
    %98 = vector.extract_strided_slice %91 {offsets = [0, 64], sizes = [2, 64], strides = [1, 1]} : vector<2x256xf32> to vector<2x64xf32>
    %99 = arith.negf %98 : vector<2x64xf32>
    %100 = math.exp %99 : vector<2x64xf32>
    %cst_50 = arith.constant 1.000000e+00 : f32
    %101 = vector.broadcast %cst_50 : f32 to vector<2x64xf32>
    %102 = arith.addf %101, %100 : vector<2x64xf32>
    %103 = arith.divf %101, %102 : vector<2x64xf32>
    %104 = vector.extract_strided_slice %91 {offsets = [0, 128], sizes = [2, 64], strides = [1, 1]} : vector<2x256xf32> to vector<2x64xf32>
    %105 = math.tanh %104 : vector<2x64xf32>
    %106 = vector.extract_strided_slice %91 {offsets = [0, 192], sizes = [2, 64], strides = [1, 1]} : vector<2x256xf32> to vector<2x64xf32>
    %107 = arith.negf %106 : vector<2x64xf32>
    %108 = math.exp %107 : vector<2x64xf32>
    %cst_51 = arith.constant 1.000000e+00 : f32
    %109 = vector.broadcast %cst_51 : f32 to vector<2x64xf32>
    %110 = arith.addf %109, %108 : vector<2x64xf32>
    %111 = arith.divf %109, %110 : vector<2x64xf32>
    %112 = arith.mulf %103, %82 : vector<2x64xf32>
    %113 = arith.mulf %97, %105 : vector<2x64xf32>
    %114 = arith.addf %112, %113 : vector<2x64xf32>
    %115 = math.tanh %114 : vector<2x64xf32>
    %116 = arith.mulf %111, %115 : vector<2x64xf32>
    %c0_52 = arith.constant 0 : index
    %c2_53 = arith.constant 2 : index
    %c0_54 = arith.constant 0 : index
    %117 = vector.load %arg13[%c0_52, %c2_53, %c0_54] : memref<2x16x64xf32, #tpu.memory_space<vmem>>, vector<1x2x64xf32>
    %118 = vector.shape_cast %117 : vector<1x2x64xf32> to vector<2x64xf32>
    %119 = vector.shape_cast %116 : vector<2x64xf32> to vector<1x2x64xf32>
    tpu.vector_store %arg13[%c0_52, %c2_53, %c0_54], %119 {strides = array<i32>} : memref<2x16x64xf32, #tpu.memory_space<vmem>>, vector<1x2x64xf32>,
    %c4 = arith.constant 4 : index
    %c0_55 = arith.constant 0 : index
    %120 = vector.load %arg12[%c4, %c0_55] : memref<16x256xf32, #tpu.memory_space<vmem>>, vector<2x256xf32>
    %121 = arith.truncf %116 : vector<2x64xf32> to vector<2x64xbf16>
    %cst_56 = arith.constant dense<0.000000e+00> : vector<2x256xf32>
    %122 = tpu.matmul %121, %53, %cst_56 {dimension_numbers = #tpu.dot_dimension_numbers<[1], [0], [0], [1], [0, 0, 1, 1], [], []>} : vector<2x64xbf16>, vector<64x256xbf16>, vector<2x256xf32> -> vector<2x256xf32>
    %123 = arith.addf %120, %122 : vector<2x256xf32>
    %124 = vector.extract_strided_slice %123 {offsets = [0, 0], sizes = [2, 64], strides = [1, 1]} : vector<2x256xf32> to vector<2x64xf32>
    %125 = arith.negf %124 : vector<2x64xf32>
    %126 = math.exp %125 : vector<2x64xf32>
    %cst_57 = arith.constant 1.000000e+00 : f32
    %127 = vector.broadcast %cst_57 : f32 to vector<2x64xf32>
    %128 = arith.addf %127, %126 : vector<2x64xf32>
    %129 = arith.divf %127, %128 : vector<2x64xf32>
    %130 = vector.extract_strided_slice %123 {offsets = [0, 64], sizes = [2, 64], strides = [1, 1]} : vector<2x256xf32> to vector<2x64xf32>
    %131 = arith.negf %130 : vector<2x64xf32>
    %132 = math.exp %131 : vector<2x64xf32>
    %cst_58 = arith.constant 1.000000e+00 : f32
    %133 = vector.broadcast %cst_58 : f32 to vector<2x64xf32>
    %134 = arith.addf %133, %132 : vector<2x64xf32>
    %135 = arith.divf %133, %134 : vector<2x64xf32>
    %136 = vector.extract_strided_slice %123 {offsets = [0, 128], sizes = [2, 64], strides = [1, 1]} : vector<2x256xf32> to vector<2x64xf32>
    %137 = math.tanh %136 : vector<2x64xf32>
    %138 = vector.extract_strided_slice %123 {offsets = [0, 192], sizes = [2, 64], strides = [1, 1]} : vector<2x256xf32> to vector<2x64xf32>
    %139 = arith.negf %138 : vector<2x64xf32>
    %140 = math.exp %139 : vector<2x64xf32>
    %cst_59 = arith.constant 1.000000e+00 : f32
    %141 = vector.broadcast %cst_59 : f32 to vector<2x64xf32>
    %142 = arith.addf %141, %140 : vector<2x64xf32>
    %143 = arith.divf %141, %142 : vector<2x64xf32>
    %144 = arith.mulf %135, %114 : vector<2x64xf32>
    %145 = arith.mulf %129, %137 : vector<2x64xf32>
    %146 = arith.addf %144, %145 : vector<2x64xf32>
    %147 = math.tanh %146 : vector<2x64xf32>
    %148 = arith.mulf %143, %147 : vector<2x64xf32>
    %c0_60 = arith.constant 0 : index
    %c4_61 = arith.constant 4 : index
    %c0_62 = arith.constant 0 : index
    %149 = vector.load %arg13[%c0_60, %c4_61, %c0_62] : memref<2x16x64xf32, #tpu.memory_space<vmem>>, vector<1x2x64xf32>
    %150 = vector.shape_cast %149 : vector<1x2x64xf32> to vector<2x64xf32>
    %151 = vector.shape_cast %148 : vector<2x64xf32> to vector<1x2x64xf32>
    tpu.vector_store %arg13[%c0_60, %c4_61, %c0_62], %151 {strides = array<i32>} : memref<2x16x64xf32, #tpu.memory_space<vmem>>, vector<1x2x64xf32>,
    %c6 = arith.constant 6 : index
    %c0_63 = arith.constant 0 : index
    %152 = vector.load %arg12[%c6, %c0_63] : memref<16x256xf32, #tpu.memory_space<vmem>>, vector<2x256xf32>
    %153 = arith.truncf %148 : vector<2x64xf32> to vector<2x64xbf16>
    %cst_64 = arith.constant dense<0.000000e+00> : vector<2x256xf32>
    %154 = tpu.matmul %153, %53, %cst_64 {dimension_numbers = #tpu.dot_dimension_numbers<[1], [0], [0], [1], [0, 0, 1, 1], [], []>} : vector<2x64xbf16>, vector<64x256xbf16>, vector<2x256xf32> -> vector<2x256xf32>
    %155 = arith.addf %152, %154 : vector<2x256xf32>
    %156 = vector.extract_strided_slice %155 {offsets = [0, 0], sizes = [2, 64], strides = [1, 1]} : vector<2x256xf32> to vector<2x64xf32>
    %157 = arith.negf %156 : vector<2x64xf32>
    %158 = math.exp %157 : vector<2x64xf32>
    %cst_65 = arith.constant 1.000000e+00 : f32
    %159 = vector.broadcast %cst_65 : f32 to vector<2x64xf32>
    %160 = arith.addf %159, %158 : vector<2x64xf32>
    %161 = arith.divf %159, %160 : vector<2x64xf32>
    %162 = vector.extract_strided_slice %155 {offsets = [0, 64], sizes = [2, 64], strides = [1, 1]} : vector<2x256xf32> to vector<2x64xf32>
    %163 = arith.negf %162 : vector<2x64xf32>
    %164 = math.exp %163 : vector<2x64xf32>
    %cst_66 = arith.constant 1.000000e+00 : f32
    %165 = vector.broadcast %cst_66 : f32 to vector<2x64xf32>
    %166 = arith.addf %165, %164 : vector<2x64xf32>
    %167 = arith.divf %165, %166 : vector<2x64xf32>
    %168 = vector.extract_strided_slice %155 {offsets = [0, 128], sizes = [2, 64], strides = [1, 1]} : vector<2x256xf32> to vector<2x64xf32>
    %169 = math.tanh %168 : vector<2x64xf32>
    %170 = vector.extract_strided_slice %155 {offsets = [0, 192], sizes = [2, 64], strides = [1, 1]} : vector<2x256xf32> to vector<2x64xf32>
    %171 = arith.negf %170 : vector<2x64xf32>
    %172 = math.exp %171 : vector<2x64xf32>
    %cst_67 = arith.constant 1.000000e+00 : f32
    %173 = vector.broadcast %cst_67 : f32 to vector<2x64xf32>
    %174 = arith.addf %173, %172 : vector<2x64xf32>
    %175 = arith.divf %173, %174 : vector<2x64xf32>
    %176 = arith.mulf %167, %146 : vector<2x64xf32>
    %177 = arith.mulf %161, %169 : vector<2x64xf32>
    %178 = arith.addf %176, %177 : vector<2x64xf32>
    %179 = math.tanh %178 : vector<2x64xf32>
    %180 = arith.mulf %175, %179 : vector<2x64xf32>
    %c0_68 = arith.constant 0 : index
    %c6_69 = arith.constant 6 : index
    %c0_70 = arith.constant 0 : index
    %181 = vector.load %arg13[%c0_68, %c6_69, %c0_70] : memref<2x16x64xf32, #tpu.memory_space<vmem>>, vector<1x2x64xf32>
    %182 = vector.shape_cast %181 : vector<1x2x64xf32> to vector<2x64xf32>
    %183 = vector.shape_cast %180 : vector<2x64xf32> to vector<1x2x64xf32>
    tpu.vector_store %arg13[%c0_68, %c6_69, %c0_70], %183 {strides = array<i32>} : memref<2x16x64xf32, #tpu.memory_space<vmem>>, vector<1x2x64xf32>,
    %c8 = arith.constant 8 : index
    %c0_71 = arith.constant 0 : index
    %184 = vector.load %arg12[%c8, %c0_71] : memref<16x256xf32, #tpu.memory_space<vmem>>, vector<2x256xf32>
    %185 = arith.truncf %180 : vector<2x64xf32> to vector<2x64xbf16>
    %cst_72 = arith.constant dense<0.000000e+00> : vector<2x256xf32>
    %186 = tpu.matmul %185, %53, %cst_72 {dimension_numbers = #tpu.dot_dimension_numbers<[1], [0], [0], [1], [0, 0, 1, 1], [], []>} : vector<2x64xbf16>, vector<64x256xbf16>, vector<2x256xf32> -> vector<2x256xf32>
    %187 = arith.addf %184, %186 : vector<2x256xf32>
    %188 = vector.extract_strided_slice %187 {offsets = [0, 0], sizes = [2, 64], strides = [1, 1]} : vector<2x256xf32> to vector<2x64xf32>
    %189 = arith.negf %188 : vector<2x64xf32>
    %190 = math.exp %189 : vector<2x64xf32>
    %cst_73 = arith.constant 1.000000e+00 : f32
    %191 = vector.broadcast %cst_73 : f32 to vector<2x64xf32>
    %192 = arith.addf %191, %190 : vector<2x64xf32>
    %193 = arith.divf %191, %192 : vector<2x64xf32>
    %194 = vector.extract_strided_slice %187 {offsets = [0, 64], sizes = [2, 64], strides = [1, 1]} : vector<2x256xf32> to vector<2x64xf32>
    %195 = arith.negf %194 : vector<2x64xf32>
    %196 = math.exp %195 : vector<2x64xf32>
    %cst_74 = arith.constant 1.000000e+00 : f32
    %197 = vector.broadcast %cst_74 : f32 to vector<2x64xf32>
    %198 = arith.addf %197, %196 : vector<2x64xf32>
    %199 = arith.divf %197, %198 : vector<2x64xf32>
    %200 = vector.extract_strided_slice %187 {offsets = [0, 128], sizes = [2, 64], strides = [1, 1]} : vector<2x256xf32> to vector<2x64xf32>
    %201 = math.tanh %200 : vector<2x64xf32>
    %202 = vector.extract_strided_slice %187 {offsets = [0, 192], sizes = [2, 64], strides = [1, 1]} : vector<2x256xf32> to vector<2x64xf32>
    %203 = arith.negf %202 : vector<2x64xf32>
    %204 = math.exp %203 : vector<2x64xf32>
    %cst_75 = arith.constant 1.000000e+00 : f32
    %205 = vector.broadcast %cst_75 : f32 to vector<2x64xf32>
    %206 = arith.addf %205, %204 : vector<2x64xf32>
    %207 = arith.divf %205, %206 : vector<2x64xf32>
    %208 = arith.mulf %199, %178 : vector<2x64xf32>
    %209 = arith.mulf %193, %201 : vector<2x64xf32>
    %210 = arith.addf %208, %209 : vector<2x64xf32>
    %211 = math.tanh %210 : vector<2x64xf32>
    %212 = arith.mulf %207, %211 : vector<2x64xf32>
    %c0_76 = arith.constant 0 : index
    %c8_77 = arith.constant 8 : index
    %c0_78 = arith.constant 0 : index
    %213 = vector.load %arg13[%c0_76, %c8_77, %c0_78] : memref<2x16x64xf32, #tpu.memory_space<vmem>>, vector<1x2x64xf32>
    %214 = vector.shape_cast %213 : vector<1x2x64xf32> to vector<2x64xf32>
    %215 = vector.shape_cast %212 : vector<2x64xf32> to vector<1x2x64xf32>
    tpu.vector_store %arg13[%c0_76, %c8_77, %c0_78], %215 {strides = array<i32>} : memref<2x16x64xf32, #tpu.memory_space<vmem>>, vector<1x2x64xf32>,
    %c10 = arith.constant 10 : index
    %c0_79 = arith.constant 0 : index
    %216 = vector.load %arg12[%c10, %c0_79] : memref<16x256xf32, #tpu.memory_space<vmem>>, vector<2x256xf32>
    %217 = arith.truncf %212 : vector<2x64xf32> to vector<2x64xbf16>
    %cst_80 = arith.constant dense<0.000000e+00> : vector<2x256xf32>
    %218 = tpu.matmul %217, %53, %cst_80 {dimension_numbers = #tpu.dot_dimension_numbers<[1], [0], [0], [1], [0, 0, 1, 1], [], []>} : vector<2x64xbf16>, vector<64x256xbf16>, vector<2x256xf32> -> vector<2x256xf32>
    %219 = arith.addf %216, %218 : vector<2x256xf32>
    %220 = vector.extract_strided_slice %219 {offsets = [0, 0], sizes = [2, 64], strides = [1, 1]} : vector<2x256xf32> to vector<2x64xf32>
    %221 = arith.negf %220 : vector<2x64xf32>
    %222 = math.exp %221 : vector<2x64xf32>
    %cst_81 = arith.constant 1.000000e+00 : f32
    %223 = vector.broadcast %cst_81 : f32 to vector<2x64xf32>
    %224 = arith.addf %223, %222 : vector<2x64xf32>
    %225 = arith.divf %223, %224 : vector<2x64xf32>
    %226 = vector.extract_strided_slice %219 {offsets = [0, 64], sizes = [2, 64], strides = [1, 1]} : vector<2x256xf32> to vector<2x64xf32>
    %227 = arith.negf %226 : vector<2x64xf32>
    %228 = math.exp %227 : vector<2x64xf32>
    %cst_82 = arith.constant 1.000000e+00 : f32
    %229 = vector.broadcast %cst_82 : f32 to vector<2x64xf32>
    %230 = arith.addf %229, %228 : vector<2x64xf32>
    %231 = arith.divf %229, %230 : vector<2x64xf32>
    %232 = vector.extract_strided_slice %219 {offsets = [0, 128], sizes = [2, 64], strides = [1, 1]} : vector<2x256xf32> to vector<2x64xf32>
    %233 = math.tanh %232 : vector<2x64xf32>
    %234 = vector.extract_strided_slice %219 {offsets = [0, 192], sizes = [2, 64], strides = [1, 1]} : vector<2x256xf32> to vector<2x64xf32>
    %235 = arith.negf %234 : vector<2x64xf32>
    %236 = math.exp %235 : vector<2x64xf32>
    %cst_83 = arith.constant 1.000000e+00 : f32
    %237 = vector.broadcast %cst_83 : f32 to vector<2x64xf32>
    %238 = arith.addf %237, %236 : vector<2x64xf32>
    %239 = arith.divf %237, %238 : vector<2x64xf32>
    %240 = arith.mulf %231, %210 : vector<2x64xf32>
    %241 = arith.mulf %225, %233 : vector<2x64xf32>
    %242 = arith.addf %240, %241 : vector<2x64xf32>
    %243 = math.tanh %242 : vector<2x64xf32>
    %244 = arith.mulf %239, %243 : vector<2x64xf32>
    %c0_84 = arith.constant 0 : index
    %c10_85 = arith.constant 10 : index
    %c0_86 = arith.constant 0 : index
    %245 = vector.load %arg13[%c0_84, %c10_85, %c0_86] : memref<2x16x64xf32, #tpu.memory_space<vmem>>, vector<1x2x64xf32>
    %246 = vector.shape_cast %245 : vector<1x2x64xf32> to vector<2x64xf32>
    %247 = vector.shape_cast %244 : vector<2x64xf32> to vector<1x2x64xf32>
    tpu.vector_store %arg13[%c0_84, %c10_85, %c0_86], %247 {strides = array<i32>} : memref<2x16x64xf32, #tpu.memory_space<vmem>>, vector<1x2x64xf32>,
    %c12 = arith.constant 12 : index
    %c0_87 = arith.constant 0 : index
    %248 = vector.load %arg12[%c12, %c0_87] : memref<16x256xf32, #tpu.memory_space<vmem>>, vector<2x256xf32>
    %249 = arith.truncf %244 : vector<2x64xf32> to vector<2x64xbf16>
    %cst_88 = arith.constant dense<0.000000e+00> : vector<2x256xf32>
    %250 = tpu.matmul %249, %53, %cst_88 {dimension_numbers = #tpu.dot_dimension_numbers<[1], [0], [0], [1], [0, 0, 1, 1], [], []>} : vector<2x64xbf16>, vector<64x256xbf16>, vector<2x256xf32> -> vector<2x256xf32>
    %251 = arith.addf %248, %250 : vector<2x256xf32>
    %252 = vector.extract_strided_slice %251 {offsets = [0, 0], sizes = [2, 64], strides = [1, 1]} : vector<2x256xf32> to vector<2x64xf32>
    %253 = arith.negf %252 : vector<2x64xf32>
    %254 = math.exp %253 : vector<2x64xf32>
    %cst_89 = arith.constant 1.000000e+00 : f32
    %255 = vector.broadcast %cst_89 : f32 to vector<2x64xf32>
    %256 = arith.addf %255, %254 : vector<2x64xf32>
    %257 = arith.divf %255, %256 : vector<2x64xf32>
    %258 = vector.extract_strided_slice %251 {offsets = [0, 64], sizes = [2, 64], strides = [1, 1]} : vector<2x256xf32> to vector<2x64xf32>
    %259 = arith.negf %258 : vector<2x64xf32>
    %260 = math.exp %259 : vector<2x64xf32>
    %cst_90 = arith.constant 1.000000e+00 : f32
    %261 = vector.broadcast %cst_90 : f32 to vector<2x64xf32>
    %262 = arith.addf %261, %260 : vector<2x64xf32>
    %263 = arith.divf %261, %262 : vector<2x64xf32>
    %264 = vector.extract_strided_slice %251 {offsets = [0, 128], sizes = [2, 64], strides = [1, 1]} : vector<2x256xf32> to vector<2x64xf32>
    %265 = math.tanh %264 : vector<2x64xf32>
    %266 = vector.extract_strided_slice %251 {offsets = [0, 192], sizes = [2, 64], strides = [1, 1]} : vector<2x256xf32> to vector<2x64xf32>
    %267 = arith.negf %266 : vector<2x64xf32>
    %268 = math.exp %267 : vector<2x64xf32>
    %cst_91 = arith.constant 1.000000e+00 : f32
    %269 = vector.broadcast %cst_91 : f32 to vector<2x64xf32>
    %270 = arith.addf %269, %268 : vector<2x64xf32>
    %271 = arith.divf %269, %270 : vector<2x64xf32>
    %272 = arith.mulf %263, %242 : vector<2x64xf32>
    %273 = arith.mulf %257, %265 : vector<2x64xf32>
    %274 = arith.addf %272, %273 : vector<2x64xf32>
    %275 = math.tanh %274 : vector<2x64xf32>
    %276 = arith.mulf %271, %275 : vector<2x64xf32>
    %c0_92 = arith.constant 0 : index
    %c12_93 = arith.constant 12 : index
    %c0_94 = arith.constant 0 : index
    %277 = vector.load %arg13[%c0_92, %c12_93, %c0_94] : memref<2x16x64xf32, #tpu.memory_space<vmem>>, vector<1x2x64xf32>
    %278 = vector.shape_cast %277 : vector<1x2x64xf32> to vector<2x64xf32>
    %279 = vector.shape_cast %276 : vector<2x64xf32> to vector<1x2x64xf32>
    tpu.vector_store %arg13[%c0_92, %c12_93, %c0_94], %279 {strides = array<i32>} : memref<2x16x64xf32, #tpu.memory_space<vmem>>, vector<1x2x64xf32>,
    %c14 = arith.constant 14 : index
    %c0_95 = arith.constant 0 : index
    %280 = vector.load %arg12[%c14, %c0_95] : memref<16x256xf32, #tpu.memory_space<vmem>>, vector<2x256xf32>
    %281 = arith.truncf %276 : vector<2x64xf32> to vector<2x64xbf16>
    %cst_96 = arith.constant dense<0.000000e+00> : vector<2x256xf32>
    %282 = tpu.matmul %281, %53, %cst_96 {dimension_numbers = #tpu.dot_dimension_numbers<[1], [0], [0], [1], [0, 0, 1, 1], [], []>} : vector<2x64xbf16>, vector<64x256xbf16>, vector<2x256xf32> -> vector<2x256xf32>
    %283 = arith.addf %280, %282 : vector<2x256xf32>
    %284 = vector.extract_strided_slice %283 {offsets = [0, 0], sizes = [2, 64], strides = [1, 1]} : vector<2x256xf32> to vector<2x64xf32>
    %285 = arith.negf %284 : vector<2x64xf32>
    %286 = math.exp %285 : vector<2x64xf32>
    %cst_97 = arith.constant 1.000000e+00 : f32
    %287 = vector.broadcast %cst_97 : f32 to vector<2x64xf32>
    %288 = arith.addf %287, %286 : vector<2x64xf32>
    %289 = arith.divf %287, %288 : vector<2x64xf32>
    %290 = vector.extract_strided_slice %283 {offsets = [0, 64], sizes = [2, 64], strides = [1, 1]} : vector<2x256xf32> to vector<2x64xf32>
    %291 = arith.negf %290 : vector<2x64xf32>
    %292 = math.exp %291 : vector<2x64xf32>
    %cst_98 = arith.constant 1.000000e+00 : f32
    %293 = vector.broadcast %cst_98 : f32 to vector<2x64xf32>
    %294 = arith.addf %293, %292 : vector<2x64xf32>
    %295 = arith.divf %293, %294 : vector<2x64xf32>
    %296 = vector.extract_strided_slice %283 {offsets = [0, 128], sizes = [2, 64], strides = [1, 1]} : vector<2x256xf32> to vector<2x64xf32>
    %297 = math.tanh %296 : vector<2x64xf32>
    %298 = vector.extract_strided_slice %283 {offsets = [0, 192], sizes = [2, 64], strides = [1, 1]} : vector<2x256xf32> to vector<2x64xf32>
    %299 = arith.negf %298 : vector<2x64xf32>
    %300 = math.exp %299 : vector<2x64xf32>
    %cst_99 = arith.constant 1.000000e+00 : f32
    %301 = vector.broadcast %cst_99 : f32 to vector<2x64xf32>
    %302 = arith.addf %301, %300 : vector<2x64xf32>
    %303 = arith.divf %301, %302 : vector<2x64xf32>
    %304 = arith.mulf %295, %274 : vector<2x64xf32>
    %305 = arith.mulf %289, %297 : vector<2x64xf32>
    %306 = arith.addf %304, %305 : vector<2x64xf32>
    %307 = math.tanh %306 : vector<2x64xf32>
    %308 = arith.mulf %303, %307 : vector<2x64xf32>
    %c0_100 = arith.constant 0 : index
    %c14_101 = arith.constant 14 : index
    %c0_102 = arith.constant 0 : index
    %309 = vector.load %arg13[%c0_100, %c14_101, %c0_102] : memref<2x16x64xf32, #tpu.memory_space<vmem>>, vector<1x2x64xf32>
    %310 = vector.shape_cast %309 : vector<1x2x64xf32> to vector<2x64xf32>
    %311 = vector.shape_cast %308 : vector<2x64xf32> to vector<1x2x64xf32>
    tpu.vector_store %arg13[%c0_100, %c14_101, %c0_102], %311 {strides = array<i32>} : memref<2x16x64xf32, #tpu.memory_space<vmem>>, vector<1x2x64xf32>,
    %c1_103 = arith.constant 1 : index
    %c0_104 = arith.constant 0 : index
    %c0_105 = arith.constant 0 : index
    %312 = vector.load %arg6[%c1_103, %c0_104, %c0_105] : memref<2x48x256xbf16, #tpu.memory_space<vmem>>, vector<1x48x256xbf16>
    %313 = vector.shape_cast %312 : vector<1x48x256xbf16> to vector<48x256xbf16>
    %cst_106 = arith.constant dense<0.000000e+00> : vector<16x256xf32>
    %314 = tpu.matmul %43, %313, %cst_106 {dimension_numbers = #tpu.dot_dimension_numbers<[1], [0], [0], [1], [0, 0, 1, 1], [], []>} : vector<16x48xbf16>, vector<48x256xbf16>, vector<16x256xf32> -> vector<16x256xf32>
    %c1_107 = arith.constant 1 : index
    %c0_108 = arith.constant 0 : index
    %c0_109 = arith.constant 0 : index
    %315 = vector.load %arg8[%c1_107, %c0_108, %c0_109] : memref<2x1x256xf32, #tpu.memory_space<vmem>>, vector<1x1x256xf32>
    %316 = vector.shape_cast %315 : vector<1x1x256xf32> to vector<1x256xf32>
    %317 = vector.broadcast %316 : vector<1x256xf32> to vector<16x256xf32>
    %318 = arith.addf %314, %317 : vector<16x256xf32>
    %c0_110 = arith.constant 0 : index
    %c0_111 = arith.constant 0 : index
    %319 = vector.load %arg12[%c0_110, %c0_111] : memref<16x256xf32, #tpu.memory_space<vmem>>, vector<16x256xf32>
    tpu.vector_store %arg12[%c0_110, %c0_111], %318 {strides = array<i32>} : memref<16x256xf32, #tpu.memory_space<vmem>>, vector<16x256xf32>,
    %c1_112 = arith.constant 1 : index
    %c0_113 = arith.constant 0 : index
    %c0_114 = arith.constant 0 : index
    %320 = vector.load %arg7[%c1_112, %c0_113, %c0_114] : memref<2x64x256xbf16, #tpu.memory_space<vmem>>, vector<1x64x256xbf16>
    %321 = vector.shape_cast %320 : vector<1x64x256xbf16> to vector<64x256xbf16>
    %cst_115 = arith.constant 0.000000e+00 : f32
    %322 = vector.broadcast %cst_115 : f32 to vector<2x64xf32>
    %cst_116 = arith.constant 0.000000e+00 : f32
    %323 = vector.broadcast %cst_116 : f32 to vector<2x64xf32>
    %c14_117 = arith.constant 14 : index
    %c0_118 = arith.constant 0 : index
    %324 = vector.load %arg12[%c14_117, %c0_118] : memref<16x256xf32, #tpu.memory_space<vmem>>, vector<2x256xf32>
    %325 = arith.truncf %322 : vector<2x64xf32> to vector<2x64xbf16>
    %cst_119 = arith.constant dense<0.000000e+00> : vector<2x256xf32>
    %326 = tpu.matmul %325, %321, %cst_119 {dimension_numbers = #tpu.dot_dimension_numbers<[1], [0], [0], [1], [0, 0, 1, 1], [], []>} : vector<2x64xbf16>, vector<64x256xbf16>, vector<2x256xf32> -> vector<2x256xf32>
    %327 = arith.addf %324, %326 : vector<2x256xf32>
    %328 = vector.extract_strided_slice %327 {offsets = [0, 0], sizes = [2, 64], strides = [1, 1]} : vector<2x256xf32> to vector<2x64xf32>
    %329 = arith.negf %328 : vector<2x64xf32>
    %330 = math.exp %329 : vector<2x64xf32>
    %cst_120 = arith.constant 1.000000e+00 : f32
    %331 = vector.broadcast %cst_120 : f32 to vector<2x64xf32>
    %332 = arith.addf %331, %330 : vector<2x64xf32>
    %333 = arith.divf %331, %332 : vector<2x64xf32>
    %334 = vector.extract_strided_slice %327 {offsets = [0, 64], sizes = [2, 64], strides = [1, 1]} : vector<2x256xf32> to vector<2x64xf32>
    %335 = arith.negf %334 : vector<2x64xf32>
    %336 = math.exp %335 : vector<2x64xf32>
    %cst_121 = arith.constant 1.000000e+00 : f32
    %337 = vector.broadcast %cst_121 : f32 to vector<2x64xf32>
    %338 = arith.addf %337, %336 : vector<2x64xf32>
    %339 = arith.divf %337, %338 : vector<2x64xf32>
    %340 = vector.extract_strided_slice %327 {offsets = [0, 128], sizes = [2, 64], strides = [1, 1]} : vector<2x256xf32> to vector<2x64xf32>
    %341 = math.tanh %340 : vector<2x64xf32>
    %342 = vector.extract_strided_slice %327 {offsets = [0, 192], sizes = [2, 64], strides = [1, 1]} : vector<2x256xf32> to vector<2x64xf32>
    %343 = arith.negf %342 : vector<2x64xf32>
    %344 = math.exp %343 : vector<2x64xf32>
    %cst_122 = arith.constant 1.000000e+00 : f32
    %345 = vector.broadcast %cst_122 : f32 to vector<2x64xf32>
    %346 = arith.addf %345, %344 : vector<2x64xf32>
    %347 = arith.divf %345, %346 : vector<2x64xf32>
    %348 = arith.mulf %339, %323 : vector<2x64xf32>
    %349 = arith.mulf %333, %341 : vector<2x64xf32>
    %350 = arith.addf %348, %349 : vector<2x64xf32>
    %351 = math.tanh %350 : vector<2x64xf32>
    %352 = arith.mulf %347, %351 : vector<2x64xf32>
    %c1_123 = arith.constant 1 : index
    %c14_124 = arith.constant 14 : index
    %c0_125 = arith.constant 0 : index
    %353 = vector.load %arg13[%c1_123, %c14_124, %c0_125] : memref<2x16x64xf32, #tpu.memory_space<vmem>>, vector<1x2x64xf32>
    %354 = vector.shape_cast %353 : vector<1x2x64xf32> to vector<2x64xf32>
    %355 = vector.shape_cast %352 : vector<2x64xf32> to vector<1x2x64xf32>
    tpu.vector_store %arg13[%c1_123, %c14_124, %c0_125], %355 {strides = array<i32>} : memref<2x16x64xf32, #tpu.memory_space<vmem>>, vector<1x2x64xf32>,
    %c12_126 = arith.constant 12 : index
    %c0_127 = arith.constant 0 : index
    %356 = vector.load %arg12[%c12_126, %c0_127] : memref<16x256xf32, #tpu.memory_space<vmem>>, vector<2x256xf32>
    %357 = arith.truncf %352 : vector<2x64xf32> to vector<2x64xbf16>
    %cst_128 = arith.constant dense<0.000000e+00> : vector<2x256xf32>
    %358 = tpu.matmul %357, %321, %cst_128 {dimension_numbers = #tpu.dot_dimension_numbers<[1], [0], [0], [1], [0, 0, 1, 1], [], []>} : vector<2x64xbf16>, vector<64x256xbf16>, vector<2x256xf32> -> vector<2x256xf32>
    %359 = arith.addf %356, %358 : vector<2x256xf32>
    %360 = vector.extract_strided_slice %359 {offsets = [0, 0], sizes = [2, 64], strides = [1, 1]} : vector<2x256xf32> to vector<2x64xf32>
    %361 = arith.negf %360 : vector<2x64xf32>
    %362 = math.exp %361 : vector<2x64xf32>
    %cst_129 = arith.constant 1.000000e+00 : f32
    %363 = vector.broadcast %cst_129 : f32 to vector<2x64xf32>
    %364 = arith.addf %363, %362 : vector<2x64xf32>
    %365 = arith.divf %363, %364 : vector<2x64xf32>
    %366 = vector.extract_strided_slice %359 {offsets = [0, 64], sizes = [2, 64], strides = [1, 1]} : vector<2x256xf32> to vector<2x64xf32>
    %367 = arith.negf %366 : vector<2x64xf32>
    %368 = math.exp %367 : vector<2x64xf32>
    %cst_130 = arith.constant 1.000000e+00 : f32
    %369 = vector.broadcast %cst_130 : f32 to vector<2x64xf32>
    %370 = arith.addf %369, %368 : vector<2x64xf32>
    %371 = arith.divf %369, %370 : vector<2x64xf32>
    %372 = vector.extract_strided_slice %359 {offsets = [0, 128], sizes = [2, 64], strides = [1, 1]} : vector<2x256xf32> to vector<2x64xf32>
    %373 = math.tanh %372 : vector<2x64xf32>
    %374 = vector.extract_strided_slice %359 {offsets = [0, 192], sizes = [2, 64], strides = [1, 1]} : vector<2x256xf32> to vector<2x64xf32>
    %375 = arith.negf %374 : vector<2x64xf32>
    %376 = math.exp %375 : vector<2x64xf32>
    %cst_131 = arith.constant 1.000000e+00 : f32
    %377 = vector.broadcast %cst_131 : f32 to vector<2x64xf32>
    %378 = arith.addf %377, %376 : vector<2x64xf32>
    %379 = arith.divf %377, %378 : vector<2x64xf32>
    %380 = arith.mulf %371, %350 : vector<2x64xf32>
    %381 = arith.mulf %365, %373 : vector<2x64xf32>
    %382 = arith.addf %380, %381 : vector<2x64xf32>
    %383 = math.tanh %382 : vector<2x64xf32>
    %384 = arith.mulf %379, %383 : vector<2x64xf32>
    %c1_132 = arith.constant 1 : index
    %c12_133 = arith.constant 12 : index
    %c0_134 = arith.constant 0 : index
    %385 = vector.load %arg13[%c1_132, %c12_133, %c0_134] : memref<2x16x64xf32, #tpu.memory_space<vmem>>, vector<1x2x64xf32>
    %386 = vector.shape_cast %385 : vector<1x2x64xf32> to vector<2x64xf32>
    %387 = vector.shape_cast %384 : vector<2x64xf32> to vector<1x2x64xf32>
    tpu.vector_store %arg13[%c1_132, %c12_133, %c0_134], %387 {strides = array<i32>} : memref<2x16x64xf32, #tpu.memory_space<vmem>>, vector<1x2x64xf32>,
    %c10_135 = arith.constant 10 : index
    %c0_136 = arith.constant 0 : index
    %388 = vector.load %arg12[%c10_135, %c0_136] : memref<16x256xf32, #tpu.memory_space<vmem>>, vector<2x256xf32>
    %389 = arith.truncf %384 : vector<2x64xf32> to vector<2x64xbf16>
    %cst_137 = arith.constant dense<0.000000e+00> : vector<2x256xf32>
    %390 = tpu.matmul %389, %321, %cst_137 {dimension_numbers = #tpu.dot_dimension_numbers<[1], [0], [0], [1], [0, 0, 1, 1], [], []>} : vector<2x64xbf16>, vector<64x256xbf16>, vector<2x256xf32> -> vector<2x256xf32>
    %391 = arith.addf %388, %390 : vector<2x256xf32>
    %392 = vector.extract_strided_slice %391 {offsets = [0, 0], sizes = [2, 64], strides = [1, 1]} : vector<2x256xf32> to vector<2x64xf32>
    %393 = arith.negf %392 : vector<2x64xf32>
    %394 = math.exp %393 : vector<2x64xf32>
    %cst_138 = arith.constant 1.000000e+00 : f32
    %395 = vector.broadcast %cst_138 : f32 to vector<2x64xf32>
    %396 = arith.addf %395, %394 : vector<2x64xf32>
    %397 = arith.divf %395, %396 : vector<2x64xf32>
    %398 = vector.extract_strided_slice %391 {offsets = [0, 64], sizes = [2, 64], strides = [1, 1]} : vector<2x256xf32> to vector<2x64xf32>
    %399 = arith.negf %398 : vector<2x64xf32>
    %400 = math.exp %399 : vector<2x64xf32>
    %cst_139 = arith.constant 1.000000e+00 : f32
    %401 = vector.broadcast %cst_139 : f32 to vector<2x64xf32>
    %402 = arith.addf %401, %400 : vector<2x64xf32>
    %403 = arith.divf %401, %402 : vector<2x64xf32>
    %404 = vector.extract_strided_slice %391 {offsets = [0, 128], sizes = [2, 64], strides = [1, 1]} : vector<2x256xf32> to vector<2x64xf32>
    %405 = math.tanh %404 : vector<2x64xf32>
    %406 = vector.extract_strided_slice %391 {offsets = [0, 192], sizes = [2, 64], strides = [1, 1]} : vector<2x256xf32> to vector<2x64xf32>
    %407 = arith.negf %406 : vector<2x64xf32>
    %408 = math.exp %407 : vector<2x64xf32>
    %cst_140 = arith.constant 1.000000e+00 : f32
    %409 = vector.broadcast %cst_140 : f32 to vector<2x64xf32>
    %410 = arith.addf %409, %408 : vector<2x64xf32>
    %411 = arith.divf %409, %410 : vector<2x64xf32>
    %412 = arith.mulf %403, %382 : vector<2x64xf32>
    %413 = arith.mulf %397, %405 : vector<2x64xf32>
    %414 = arith.addf %412, %413 : vector<2x64xf32>
    %415 = math.tanh %414 : vector<2x64xf32>
    %416 = arith.mulf %411, %415 : vector<2x64xf32>
    %c1_141 = arith.constant 1 : index
    %c10_142 = arith.constant 10 : index
    %c0_143 = arith.constant 0 : index
    %417 = vector.load %arg13[%c1_141, %c10_142, %c0_143] : memref<2x16x64xf32, #tpu.memory_space<vmem>>, vector<1x2x64xf32>
    %418 = vector.shape_cast %417 : vector<1x2x64xf32> to vector<2x64xf32>
    %419 = vector.shape_cast %416 : vector<2x64xf32> to vector<1x2x64xf32>
    tpu.vector_store %arg13[%c1_141, %c10_142, %c0_143], %419 {strides = array<i32>} : memref<2x16x64xf32, #tpu.memory_space<vmem>>, vector<1x2x64xf32>,
    %c8_144 = arith.constant 8 : index
    %c0_145 = arith.constant 0 : index
    %420 = vector.load %arg12[%c8_144, %c0_145] : memref<16x256xf32, #tpu.memory_space<vmem>>, vector<2x256xf32>
    %421 = arith.truncf %416 : vector<2x64xf32> to vector<2x64xbf16>
    %cst_146 = arith.constant dense<0.000000e+00> : vector<2x256xf32>
    %422 = tpu.matmul %421, %321, %cst_146 {dimension_numbers = #tpu.dot_dimension_numbers<[1], [0], [0], [1], [0, 0, 1, 1], [], []>} : vector<2x64xbf16>, vector<64x256xbf16>, vector<2x256xf32> -> vector<2x256xf32>
    %423 = arith.addf %420, %422 : vector<2x256xf32>
    %424 = vector.extract_strided_slice %423 {offsets = [0, 0], sizes = [2, 64], strides = [1, 1]} : vector<2x256xf32> to vector<2x64xf32>
    %425 = arith.negf %424 : vector<2x64xf32>
    %426 = math.exp %425 : vector<2x64xf32>
    %cst_147 = arith.constant 1.000000e+00 : f32
    %427 = vector.broadcast %cst_147 : f32 to vector<2x64xf32>
    %428 = arith.addf %427, %426 : vector<2x64xf32>
    %429 = arith.divf %427, %428 : vector<2x64xf32>
    %430 = vector.extract_strided_slice %423 {offsets = [0, 64], sizes = [2, 64], strides = [1, 1]} : vector<2x256xf32> to vector<2x64xf32>
    %431 = arith.negf %430 : vector<2x64xf32>
    %432 = math.exp %431 : vector<2x64xf32>
    %cst_148 = arith.constant 1.000000e+00 : f32
    %433 = vector.broadcast %cst_148 : f32 to vector<2x64xf32>
    %434 = arith.addf %433, %432 : vector<2x64xf32>
    %435 = arith.divf %433, %434 : vector<2x64xf32>
    %436 = vector.extract_strided_slice %423 {offsets = [0, 128], sizes = [2, 64], strides = [1, 1]} : vector<2x256xf32> to vector<2x64xf32>
    %437 = math.tanh %436 : vector<2x64xf32>
    %438 = vector.extract_strided_slice %423 {offsets = [0, 192], sizes = [2, 64], strides = [1, 1]} : vector<2x256xf32> to vector<2x64xf32>
    %439 = arith.negf %438 : vector<2x64xf32>
    %440 = math.exp %439 : vector<2x64xf32>
    %cst_149 = arith.constant 1.000000e+00 : f32
    %441 = vector.broadcast %cst_149 : f32 to vector<2x64xf32>
    %442 = arith.addf %441, %440 : vector<2x64xf32>
    %443 = arith.divf %441, %442 : vector<2x64xf32>
    %444 = arith.mulf %435, %414 : vector<2x64xf32>
    %445 = arith.mulf %429, %437 : vector<2x64xf32>
    %446 = arith.addf %444, %445 : vector<2x64xf32>
    %447 = math.tanh %446 : vector<2x64xf32>
    %448 = arith.mulf %443, %447 : vector<2x64xf32>
    %c1_150 = arith.constant 1 : index
    %c8_151 = arith.constant 8 : index
    %c0_152 = arith.constant 0 : index
    %449 = vector.load %arg13[%c1_150, %c8_151, %c0_152] : memref<2x16x64xf32, #tpu.memory_space<vmem>>, vector<1x2x64xf32>
    %450 = vector.shape_cast %449 : vector<1x2x64xf32> to vector<2x64xf32>
    %451 = vector.shape_cast %448 : vector<2x64xf32> to vector<1x2x64xf32>
    tpu.vector_store %arg13[%c1_150, %c8_151, %c0_152], %451 {strides = array<i32>} : memref<2x16x64xf32, #tpu.memory_space<vmem>>, vector<1x2x64xf32>,
    %c6_153 = arith.constant 6 : index
    %c0_154 = arith.constant 0 : index
    %452 = vector.load %arg12[%c6_153, %c0_154] : memref<16x256xf32, #tpu.memory_space<vmem>>, vector<2x256xf32>
    %453 = arith.truncf %448 : vector<2x64xf32> to vector<2x64xbf16>
    %cst_155 = arith.constant dense<0.000000e+00> : vector<2x256xf32>
    %454 = tpu.matmul %453, %321, %cst_155 {dimension_numbers = #tpu.dot_dimension_numbers<[1], [0], [0], [1], [0, 0, 1, 1], [], []>} : vector<2x64xbf16>, vector<64x256xbf16>, vector<2x256xf32> -> vector<2x256xf32>
    %455 = arith.addf %452, %454 : vector<2x256xf32>
    %456 = vector.extract_strided_slice %455 {offsets = [0, 0], sizes = [2, 64], strides = [1, 1]} : vector<2x256xf32> to vector<2x64xf32>
    %457 = arith.negf %456 : vector<2x64xf32>
    %458 = math.exp %457 : vector<2x64xf32>
    %cst_156 = arith.constant 1.000000e+00 : f32
    %459 = vector.broadcast %cst_156 : f32 to vector<2x64xf32>
    %460 = arith.addf %459, %458 : vector<2x64xf32>
    %461 = arith.divf %459, %460 : vector<2x64xf32>
    %462 = vector.extract_strided_slice %455 {offsets = [0, 64], sizes = [2, 64], strides = [1, 1]} : vector<2x256xf32> to vector<2x64xf32>
    %463 = arith.negf %462 : vector<2x64xf32>
    %464 = math.exp %463 : vector<2x64xf32>
    %cst_157 = arith.constant 1.000000e+00 : f32
    %465 = vector.broadcast %cst_157 : f32 to vector<2x64xf32>
    %466 = arith.addf %465, %464 : vector<2x64xf32>
    %467 = arith.divf %465, %466 : vector<2x64xf32>
    %468 = vector.extract_strided_slice %455 {offsets = [0, 128], sizes = [2, 64], strides = [1, 1]} : vector<2x256xf32> to vector<2x64xf32>
    %469 = math.tanh %468 : vector<2x64xf32>
    %470 = vector.extract_strided_slice %455 {offsets = [0, 192], sizes = [2, 64], strides = [1, 1]} : vector<2x256xf32> to vector<2x64xf32>
    %471 = arith.negf %470 : vector<2x64xf32>
    %472 = math.exp %471 : vector<2x64xf32>
    %cst_158 = arith.constant 1.000000e+00 : f32
    %473 = vector.broadcast %cst_158 : f32 to vector<2x64xf32>
    %474 = arith.addf %473, %472 : vector<2x64xf32>
    %475 = arith.divf %473, %474 : vector<2x64xf32>
    %476 = arith.mulf %467, %446 : vector<2x64xf32>
    %477 = arith.mulf %461, %469 : vector<2x64xf32>
    %478 = arith.addf %476, %477 : vector<2x64xf32>
    %479 = math.tanh %478 : vector<2x64xf32>
    %480 = arith.mulf %475, %479 : vector<2x64xf32>
    %c1_159 = arith.constant 1 : index
    %c6_160 = arith.constant 6 : index
    %c0_161 = arith.constant 0 : index
    %481 = vector.load %arg13[%c1_159, %c6_160, %c0_161] : memref<2x16x64xf32, #tpu.memory_space<vmem>>, vector<1x2x64xf32>
    %482 = vector.shape_cast %481 : vector<1x2x64xf32> to vector<2x64xf32>
    %483 = vector.shape_cast %480 : vector<2x64xf32> to vector<1x2x64xf32>
    tpu.vector_store %arg13[%c1_159, %c6_160, %c0_161], %483 {strides = array<i32>} : memref<2x16x64xf32, #tpu.memory_space<vmem>>, vector<1x2x64xf32>,
    %c4_162 = arith.constant 4 : index
    %c0_163 = arith.constant 0 : index
    %484 = vector.load %arg12[%c4_162, %c0_163] : memref<16x256xf32, #tpu.memory_space<vmem>>, vector<2x256xf32>
    %485 = arith.truncf %480 : vector<2x64xf32> to vector<2x64xbf16>
    %cst_164 = arith.constant dense<0.000000e+00> : vector<2x256xf32>
    %486 = tpu.matmul %485, %321, %cst_164 {dimension_numbers = #tpu.dot_dimension_numbers<[1], [0], [0], [1], [0, 0, 1, 1], [], []>} : vector<2x64xbf16>, vector<64x256xbf16>, vector<2x256xf32> -> vector<2x256xf32>
    %487 = arith.addf %484, %486 : vector<2x256xf32>
    %488 = vector.extract_strided_slice %487 {offsets = [0, 0], sizes = [2, 64], strides = [1, 1]} : vector<2x256xf32> to vector<2x64xf32>
    %489 = arith.negf %488 : vector<2x64xf32>
    %490 = math.exp %489 : vector<2x64xf32>
    %cst_165 = arith.constant 1.000000e+00 : f32
    %491 = vector.broadcast %cst_165 : f32 to vector<2x64xf32>
    %492 = arith.addf %491, %490 : vector<2x64xf32>
    %493 = arith.divf %491, %492 : vector<2x64xf32>
    %494 = vector.extract_strided_slice %487 {offsets = [0, 64], sizes = [2, 64], strides = [1, 1]} : vector<2x256xf32> to vector<2x64xf32>
    %495 = arith.negf %494 : vector<2x64xf32>
    %496 = math.exp %495 : vector<2x64xf32>
    %cst_166 = arith.constant 1.000000e+00 : f32
    %497 = vector.broadcast %cst_166 : f32 to vector<2x64xf32>
    %498 = arith.addf %497, %496 : vector<2x64xf32>
    %499 = arith.divf %497, %498 : vector<2x64xf32>
    %500 = vector.extract_strided_slice %487 {offsets = [0, 128], sizes = [2, 64], strides = [1, 1]} : vector<2x256xf32> to vector<2x64xf32>
    %501 = math.tanh %500 : vector<2x64xf32>
    %502 = vector.extract_strided_slice %487 {offsets = [0, 192], sizes = [2, 64], strides = [1, 1]} : vector<2x256xf32> to vector<2x64xf32>
    %503 = arith.negf %502 : vector<2x64xf32>
    %504 = math.exp %503 : vector<2x64xf32>
    %cst_167 = arith.constant 1.000000e+00 : f32
    %505 = vector.broadcast %cst_167 : f32 to vector<2x64xf32>
    %506 = arith.addf %505, %504 : vector<2x64xf32>
    %507 = arith.divf %505, %506 : vector<2x64xf32>
    %508 = arith.mulf %499, %478 : vector<2x64xf32>
    %509 = arith.mulf %493, %501 : vector<2x64xf32>
    %510 = arith.addf %508, %509 : vector<2x64xf32>
    %511 = math.tanh %510 : vector<2x64xf32>
    %512 = arith.mulf %507, %511 : vector<2x64xf32>
    %c1_168 = arith.constant 1 : index
    %c4_169 = arith.constant 4 : index
    %c0_170 = arith.constant 0 : index
    %513 = vector.load %arg13[%c1_168, %c4_169, %c0_170] : memref<2x16x64xf32, #tpu.memory_space<vmem>>, vector<1x2x64xf32>
    %514 = vector.shape_cast %513 : vector<1x2x64xf32> to vector<2x64xf32>
    %515 = vector.shape_cast %512 : vector<2x64xf32> to vector<1x2x64xf32>
    tpu.vector_store %arg13[%c1_168, %c4_169, %c0_170], %515 {strides = array<i32>} : memref<2x16x64xf32, #tpu.memory_space<vmem>>, vector<1x2x64xf32>,
    %c2_171 = arith.constant 2 : index
    %c0_172 = arith.constant 0 : index
    %516 = vector.load %arg12[%c2_171, %c0_172] : memref<16x256xf32, #tpu.memory_space<vmem>>, vector<2x256xf32>
    %517 = arith.truncf %512 : vector<2x64xf32> to vector<2x64xbf16>
    %cst_173 = arith.constant dense<0.000000e+00> : vector<2x256xf32>
    %518 = tpu.matmul %517, %321, %cst_173 {dimension_numbers = #tpu.dot_dimension_numbers<[1], [0], [0], [1], [0, 0, 1, 1], [], []>} : vector<2x64xbf16>, vector<64x256xbf16>, vector<2x256xf32> -> vector<2x256xf32>
    %519 = arith.addf %516, %518 : vector<2x256xf32>
    %520 = vector.extract_strided_slice %519 {offsets = [0, 0], sizes = [2, 64], strides = [1, 1]} : vector<2x256xf32> to vector<2x64xf32>
    %521 = arith.negf %520 : vector<2x64xf32>
    %522 = math.exp %521 : vector<2x64xf32>
    %cst_174 = arith.constant 1.000000e+00 : f32
    %523 = vector.broadcast %cst_174 : f32 to vector<2x64xf32>
    %524 = arith.addf %523, %522 : vector<2x64xf32>
    %525 = arith.divf %523, %524 : vector<2x64xf32>
    %526 = vector.extract_strided_slice %519 {offsets = [0, 64], sizes = [2, 64], strides = [1, 1]} : vector<2x256xf32> to vector<2x64xf32>
    %527 = arith.negf %526 : vector<2x64xf32>
    %528 = math.exp %527 : vector<2x64xf32>
    %cst_175 = arith.constant 1.000000e+00 : f32
    %529 = vector.broadcast %cst_175 : f32 to vector<2x64xf32>
    %530 = arith.addf %529, %528 : vector<2x64xf32>
    %531 = arith.divf %529, %530 : vector<2x64xf32>
    %532 = vector.extract_strided_slice %519 {offsets = [0, 128], sizes = [2, 64], strides = [1, 1]} : vector<2x256xf32> to vector<2x64xf32>
    %533 = math.tanh %532 : vector<2x64xf32>
    %534 = vector.extract_strided_slice %519 {offsets = [0, 192], sizes = [2, 64], strides = [1, 1]} : vector<2x256xf32> to vector<2x64xf32>
    %535 = arith.negf %534 : vector<2x64xf32>
    %536 = math.exp %535 : vector<2x64xf32>
    %cst_176 = arith.constant 1.000000e+00 : f32
    %537 = vector.broadcast %cst_176 : f32 to vector<2x64xf32>
    %538 = arith.addf %537, %536 : vector<2x64xf32>
    %539 = arith.divf %537, %538 : vector<2x64xf32>
    %540 = arith.mulf %531, %510 : vector<2x64xf32>
    %541 = arith.mulf %525, %533 : vector<2x64xf32>
    %542 = arith.addf %540, %541 : vector<2x64xf32>
    %543 = math.tanh %542 : vector<2x64xf32>
    %544 = arith.mulf %539, %543 : vector<2x64xf32>
    %c1_177 = arith.constant 1 : index
    %c2_178 = arith.constant 2 : index
    %c0_179 = arith.constant 0 : index
    %545 = vector.load %arg13[%c1_177, %c2_178, %c0_179] : memref<2x16x64xf32, #tpu.memory_space<vmem>>, vector<1x2x64xf32>
    %546 = vector.shape_cast %545 : vector<1x2x64xf32> to vector<2x64xf32>
    %547 = vector.shape_cast %544 : vector<2x64xf32> to vector<1x2x64xf32>
    tpu.vector_store %arg13[%c1_177, %c2_178, %c0_179], %547 {strides = array<i32>} : memref<2x16x64xf32, #tpu.memory_space<vmem>>, vector<1x2x64xf32>,
    %c0_180 = arith.constant 0 : index
    %c0_181 = arith.constant 0 : index
    %548 = vector.load %arg12[%c0_180, %c0_181] : memref<16x256xf32, #tpu.memory_space<vmem>>, vector<2x256xf32>
    %549 = arith.truncf %544 : vector<2x64xf32> to vector<2x64xbf16>
    %cst_182 = arith.constant dense<0.000000e+00> : vector<2x256xf32>
    %550 = tpu.matmul %549, %321, %cst_182 {dimension_numbers = #tpu.dot_dimension_numbers<[1], [0], [0], [1], [0, 0, 1, 1], [], []>} : vector<2x64xbf16>, vector<64x256xbf16>, vector<2x256xf32> -> vector<2x256xf32>
    %551 = arith.addf %548, %550 : vector<2x256xf32>
    %552 = vector.extract_strided_slice %551 {offsets = [0, 0], sizes = [2, 64], strides = [1, 1]} : vector<2x256xf32> to vector<2x64xf32>
    %553 = arith.negf %552 : vector<2x64xf32>
    %554 = math.exp %553 : vector<2x64xf32>
    %cst_183 = arith.constant 1.000000e+00 : f32
    %555 = vector.broadcast %cst_183 : f32 to vector<2x64xf32>
    %556 = arith.addf %555, %554 : vector<2x64xf32>
    %557 = arith.divf %555, %556 : vector<2x64xf32>
    %558 = vector.extract_strided_slice %551 {offsets = [0, 64], sizes = [2, 64], strides = [1, 1]} : vector<2x256xf32> to vector<2x64xf32>
    %559 = arith.negf %558 : vector<2x64xf32>
    %560 = math.exp %559 : vector<2x64xf32>
    %cst_184 = arith.constant 1.000000e+00 : f32
    %561 = vector.broadcast %cst_184 : f32 to vector<2x64xf32>
    %562 = arith.addf %561, %560 : vector<2x64xf32>
    %563 = arith.divf %561, %562 : vector<2x64xf32>
    %564 = vector.extract_strided_slice %551 {offsets = [0, 128], sizes = [2, 64], strides = [1, 1]} : vector<2x256xf32> to vector<2x64xf32>
    %565 = math.tanh %564 : vector<2x64xf32>
    %566 = vector.extract_strided_slice %551 {offsets = [0, 192], sizes = [2, 64], strides = [1, 1]} : vector<2x256xf32> to vector<2x64xf32>
    %567 = arith.negf %566 : vector<2x64xf32>
    %568 = math.exp %567 : vector<2x64xf32>
    %cst_185 = arith.constant 1.000000e+00 : f32
    %569 = vector.broadcast %cst_185 : f32 to vector<2x64xf32>
    %570 = arith.addf %569, %568 : vector<2x64xf32>
    %571 = arith.divf %569, %570 : vector<2x64xf32>
    %572 = arith.mulf %563, %542 : vector<2x64xf32>
    %573 = arith.mulf %557, %565 : vector<2x64xf32>
    %574 = arith.addf %572, %573 : vector<2x64xf32>
    %575 = math.tanh %574 : vector<2x64xf32>
    %576 = arith.mulf %571, %575 : vector<2x64xf32>
    %c1_186 = arith.constant 1 : index
    %c0_187 = arith.constant 0 : index
    %c0_188 = arith.constant 0 : index
    %577 = vector.load %arg13[%c1_186, %c0_187, %c0_188] : memref<2x16x64xf32, #tpu.memory_space<vmem>>, vector<1x2x64xf32>
    %578 = vector.shape_cast %577 : vector<1x2x64xf32> to vector<2x64xf32>
    %579 = vector.shape_cast %576 : vector<2x64xf32> to vector<1x2x64xf32>
    tpu.vector_store %arg13[%c1_186, %c0_187, %c0_188], %579 {strides = array<i32>} : memref<2x16x64xf32, #tpu.memory_space<vmem>>, vector<1x2x64xf32>,
    %c0_189 = arith.constant 0 : index
    %c0_190 = arith.constant 0 : index
    %c0_191 = arith.constant 0 : index
    %580 = vector.load %arg13[%c0_189, %c0_190, %c0_191] : memref<2x16x64xf32, #tpu.memory_space<vmem>>, vector<2x16x64xf32>
    %581 = vector.extract_strided_slice %580 {offsets = [0, 0, 0], sizes = [1, 16, 64], strides = [1, 1, 1]} : vector<2x16x64xf32> to vector<1x16x64xf32>
    %582 = vector.shape_cast %581 : vector<1x16x64xf32> to vector<16x64xf32>
    %583 = vector.extract_strided_slice %580 {offsets = [1, 0, 0], sizes = [1, 16, 64], strides = [1, 1, 1]} : vector<2x16x64xf32> to vector<1x16x64xf32>
    %584 = vector.shape_cast %583 : vector<1x16x64xf32> to vector<16x64xf32>
    %585 = tpu.concatenate %582, %584 in 1 : vector<16x64xf32>, vector<16x64xf32> -> vector<16x128xf32>
    %586 = arith.truncf %585 : vector<16x128xf32> to vector<16x128xbf16>
    %c0_192 = arith.constant 0 : index
    %c0_193 = arith.constant 0 : index
    %587 = vector.load %arg9[%c0_192, %c0_193] : memref<128x11xbf16, #tpu.memory_space<vmem>>, vector<128x11xbf16>
    %cst_194 = arith.constant dense<0.000000e+00> : vector<16x11xf32>
    %588 = tpu.matmul %586, %587, %cst_194 {dimension_numbers = #tpu.dot_dimension_numbers<[1], [0], [0], [1], [0, 0, 1, 1], [], []>} : vector<16x128xbf16>, vector<128x11xbf16>, vector<16x11xf32> -> vector<16x11xf32>
    %c0_195 = arith.constant 0 : index
    %c0_196 = arith.constant 0 : index
    %589 = vector.load %arg10[%c0_195, %c0_196] : memref<1x11xf32, #tpu.memory_space<vmem>>, vector<1x11xf32>
    %590 = vector.broadcast %589 : vector<1x11xf32> to vector<16x11xf32>
    %591 = arith.addf %588, %590 : vector<16x11xf32>
    %cst_197 = arith.constant dense<0xFF800000> : vector<16xf32>
    %592 = vector.multi_reduction <maximumf>, %591, %cst_197 [1] : vector<16x11xf32> to vector<16xf32>
    %593 = vector.shape_cast %592 : vector<16xf32> to vector<16x1xf32>
    %594 = vector.broadcast %593 : vector<16x1xf32> to vector<16x11xf32>
    %595 = arith.subf %591, %594 : vector<16x11xf32>
    %596 = math.exp %595 : vector<16x11xf32>
    %597 = vector.broadcast %593 : vector<16x1xf32> to vector<16x11xf32>
    %598 = arith.subf %591, %597 : vector<16x11xf32>
    %cst_198 = arith.constant dense<0.000000e+00> : vector<16xf32>
    %599 = vector.multi_reduction <add>, %596, %cst_198 [1] : vector<16x11xf32> to vector<16xf32>
    %600 = vector.shape_cast %599 : vector<16xf32> to vector<16x1xf32>
    %601 = math.log %600 : vector<16x1xf32>
    %602 = vector.broadcast %601 : vector<16x1xf32> to vector<16x11xf32>
    %603 = arith.subf %598, %602 : vector<16x11xf32>
    %c0_199 = arith.constant 0 : index
    %c0_200 = arith.constant 0 : index
    %604 = vector.load %arg11[%c0_199, %c0_200] : memref<16x11xf32, #tpu.memory_space<vmem>>, vector<16x11xf32>
    tpu.vector_store %arg11[%c0_199, %c0_200], %603 {strides = array<i32>} : memref<16x11xf32, #tpu.memory_space<vmem>>, vector<16x11xf32>,
    return
  }
}

</mosaic_0001>

<llo_original>
// kernel: forward.2
$region0: #{forward.2}
  #allocation0 [shape = 'u32[]', space=smem, size = 0x4, offset = 0x4, fixed_abs, tag = 'smem constant byte address 0x4 - core index']
  #allocation1 [shape = 'u32[144,128]{1,0:T(1,128)}', space=vmem, size = 0x12000, scoped, tag = 'internal scratch']
  %s0 = inlined_call_operand.vmem [shape: bf16[1024,10], index: 0, kind: input, shape index: {}]
  %s1 = inlined_call_operand.vmem [shape: bf16[10,16], index: 1, kind: input, shape index: {}]
  %s2 = inlined_call_operand.vmem [shape: f32[1,16], index: 2, kind: input, shape index: {}]
  %s3 = inlined_call_operand.vmem [shape: f32[1,16], index: 3, kind: input, shape index: {}]
  %s4 = inlined_call_operand.vmem [shape: f32[256,16], index: 4, kind: output, shape index: {}]
  %s5 = sld [smem:[#allocation0]]
  $region26: #{forward.2} parent=0
    _
  %s7 = ssub.s32 1, %s5
  %s8 = scalar_select 0, %s7, %s5
  // Predicated region
  $region2: #{forward.2} parent=0 // pred_check
    _
  $region3: #{forward.2} parent=0 // pred_check_branch
    %10 = sbr.rel (0) target = $region5
  $region4: #{forward.2} parent=0 // pred_region
    _
  $region5: #{forward.2} parent=0 // pred_fallthru
    _
  // Predicated region
  $region6: #{forward.2} parent=0 // pred_check
    _
  $region7: #{forward.2} parent=0 // pred_check_branch
    %12 = sbr.rel (0) target = $region9
  $region8: #{forward.2} parent=0 // pred_region
    _
  $region9: #{forward.2} parent=0 // pred_fallthru
    _
  // Predicated region
  $region10: #{forward.2} parent=0 // pred_check
    _
  $region11: #{forward.2} parent=0 // pred_check_branch
    %14 = sbr.rel (0) target = $region13
  $region12: #{forward.2} parent=0 // pred_region
    _
  $region13: #{forward.2} parent=0 // pred_fallthru
    _
  // Predicated region
  $region14: #{forward.2} parent=0 // pred_check
    _
  $region15: #{forward.2} parent=0 // pred_check_branch
    %16 = sbr.rel (0) target = $region17
  $region16: #{forward.2} parent=0 // pred_region
    _
  $region17: #{forward.2} parent=0 // pred_fallthru
    _
  %v18 = vld [vmem:[%s0] sm:$0xf]
  %v19 = vld [vmem:[%s0 + $0x4] sm:$0xf]
  %v20 = vld [vmem:[%s0 + $0x8] sm:$0xf]
  %v21 = vld [vmem:[%s0 + $0xc] sm:$0xf]
  %v22 = vld [vmem:[%s0 + $0x10] sm:$0xf]
  %v23 = vld [vmem:[%s0 + $0x14] sm:$0xf]
  %v24 = vld [vmem:[%s0 + $0x18] sm:$0xf]
  %v25 = vld [vmem:[%s0 + $0x1c] sm:$0xf]
  %v26 = vld [vmem:[%s0 + $0x20] sm:$0xf]
  %v27 = vld [vmem:[%s0 + $0x24] sm:$0xf]
  %v28 = vld [vmem:[%s0 + $0x28] sm:$0xf]
  %v29 = vld [vmem:[%s0 + $0x2c] sm:$0xf]
  %v30 = vld [vmem:[%s0 + $0x30] sm:$0xf]
  %v31 = vld [vmem:[%s0 + $0x34] sm:$0xf]
  %v32 = vld [vmem:[%s0 + $0x38] sm:$0xf]
  %v33 = vld [vmem:[%s0 + $0x3c] sm:$0xf]
  %v34 = vld [vmem:[%s0 + $0x40] sm:$0xf]
  %v35 = vld [vmem:[%s0 + $0x44] sm:$0xf]
  %v36 = vld [vmem:[%s0 + $0x48] sm:$0xf]
  %v37 = vld [vmem:[%s0 + $0x4c] sm:$0xf]
  %v38 = vld [vmem:[%s0 + $0x50] sm:$0xf]
  %v39 = vld [vmem:[%s0 + $0x54] sm:$0xf]
  %v40 = vld [vmem:[%s0 + $0x58] sm:$0xf]
  %v41 = vld [vmem:[%s0 + $0x5c] sm:$0xf]
  %v42 = vld [vmem:[%s0 + $0x60] sm:$0xf]
  %v43 = vld [vmem:[%s0 + $0x64] sm:$0xf]
  %v44 = vld [vmem:[%s0 + $0x68] sm:$0xf]
  %v45 = vld [vmem:[%s0 + $0x6c] sm:$0xf]
  %v46 = vld [vmem:[%s0 + $0x70] sm:$0xf]
  %v47 = vld [vmem:[%s0 + $0x74] sm:$0xf]
  %v48 = vld [vmem:[%s0 + $0x78] sm:$0xf]
  %v49 = vld [vmem:[%s0 + $0x7c] sm:$0xf]
  %v50 = vld [vmem:[%s0 + $0x80] sm:$0xf]
  %v51 = vld [vmem:[%s0 + $0x84] sm:$0xf]
  %v52 = vld [vmem:[%s0 + $0x88] sm:$0xf]
  %v53 = vld [vmem:[%s0 + $0x8c] sm:$0xf]
  %v54 = vld [vmem:[%s0 + $0x90] sm:$0xf]
  %v55 = vld [vmem:[%s0 + $0x94] sm:$0xf]
  %v56 = vld [vmem:[%s0 + $0x98] sm:$0xf]
  %v57 = vld [vmem:[%s0 + $0x9c] sm:$0xf]
  %v58 = vld [vmem:[%s0 + $0xa0] sm:$0xf]
  %v59 = vld [vmem:[%s0 + $0xa4] sm:$0xf]
  %v60 = vld [vmem:[%s0 + $0xa8] sm:$0xf]
  %v61 = vld [vmem:[%s0 + $0xac] sm:$0xf]
  %v62 = vld [vmem:[%s0 + $0xb0] sm:$0xf]
  %v63 = vld [vmem:[%s0 + $0xb4] sm:$0xf]
  %v64 = vld [vmem:[%s0 + $0xb8] sm:$0xf]
  %v65 = vld [vmem:[%s0 + $0xbc] sm:$0xf]
  %v66 = vld [vmem:[%s0 + $0xc0] sm:$0xf]
  %v67 = vld [vmem:[%s0 + $0xc4] sm:$0xf]
  %v68 = vld [vmem:[%s0 + $0xc8] sm:$0xf]
  %v69 = vld [vmem:[%s0 + $0xcc] sm:$0xf]
  %v70 = vld [vmem:[%s0 + $0xd0] sm:$0xf]
  %v71 = vld [vmem:[%s0 + $0xd4] sm:$0xf]
  %v72 = vld [vmem:[%s0 + $0xd8] sm:$0xf]
  %v73 = vld [vmem:[%s0 + $0xdc] sm:$0xf]
  %v74 = vld [vmem:[%s0 + $0xe0] sm:$0xf]
  %v75 = vld [vmem:[%s0 + $0xe4] sm:$0xf]
  %v76 = vld [vmem:[%s0 + $0xe8] sm:$0xf]
  %v77 = vld [vmem:[%s0 + $0xec] sm:$0xf]
  %v78 = vld [vmem:[%s0 + $0xf0] sm:$0xf]
  %v79 = vld [vmem:[%s0 + $0xf4] sm:$0xf]
  %v80 = vld [vmem:[%s0 + $0xf8] sm:$0xf]
  %v81 = vld [vmem:[%s0 + $0xfc] sm:$0xf]
  %v82 = vld [vmem:[%s0 + $0x100] sm:$0xf]
  %v83 = vld [vmem:[%s0 + $0x104] sm:$0xf]
  %v84 = vld [vmem:[%s0 + $0x108] sm:$0xf]
  %v85 = vld [vmem:[%s0 + $0x10c] sm:$0xf]
  %v86 = vld [vmem:[%s0 + $0x110] sm:$0xf]
  %v87 = vld [vmem:[%s0 + $0x114] sm:$0xf]
  %v88 = vld [vmem:[%s0 + $0x118] sm:$0xf]
  %v89 = vld [vmem:[%s0 + $0x11c] sm:$0xf]
  %v90 = vld [vmem:[%s0 + $0x120] sm:$0xf]
  %v91 = vld [vmem:[%s0 + $0x124] sm:$0xf]
  %v92 = vld [vmem:[%s0 + $0x128] sm:$0xf]
  %v93 = vld [vmem:[%s0 + $0x12c] sm:$0xf]
  %v94 = vld [vmem:[%s0 + $0x130] sm:$0xf]
  %v95 = vld [vmem:[%s0 + $0x134] sm:$0xf]
  %v96 = vld [vmem:[%s0 + $0x138] sm:$0xf]
  %v97 = vld [vmem:[%s0 + $0x13c] sm:$0xf]
  %v98 = vld [vmem:[%s0 + $0x140] sm:$0xf]
  %v99 = vld [vmem:[%s0 + $0x144] sm:$0xf]
  %v100 = vld [vmem:[%s0 + $0x148] sm:$0xf]
  %v101 = vld [vmem:[%s0 + $0x14c] sm:$0xf]
  %v102 = vld [vmem:[%s0 + $0x150] sm:$0xf]
  %v103 = vld [vmem:[%s0 + $0x154] sm:$0xf]
  %v104 = vld [vmem:[%s0 + $0x158] sm:$0xf]
  %v105 = vld [vmem:[%s0 + $0x15c] sm:$0xf]
  %v106 = vld [vmem:[%s0 + $0x160] sm:$0xf]
  %v107 = vld [vmem:[%s0 + $0x164] sm:$0xf]
  %v108 = vld [vmem:[%s0 + $0x168] sm:$0xf]
  %v109 = vld [vmem:[%s0 + $0x16c] sm:$0xf]
  %v110 = vld [vmem:[%s0 + $0x170] sm:$0xf]
  %v111 = vld [vmem:[%s0 + $0x174] sm:$0xf]
  %v112 = vld [vmem:[%s0 + $0x178] sm:$0xf]
  %v113 = vld [vmem:[%s0 + $0x17c] sm:$0xf]
  %v114 = vld [vmem:[%s0 + $0x180] sm:$0xf]
  %v115 = vld [vmem:[%s0 + $0x184] sm:$0xf]
  %v116 = vld [vmem:[%s0 + $0x188] sm:$0xf]
  %v117 = vld [vmem:[%s0 + $0x18c] sm:$0xf]
  %v118 = vld [vmem:[%s0 + $0x190] sm:$0xf]
  %v119 = vld [vmem:[%s0 + $0x194] sm:$0xf]
  %v120 = vld [vmem:[%s0 + $0x198] sm:$0xf]
  %v121 = vld [vmem:[%s0 + $0x19c] sm:$0xf]
  %v122 = vld [vmem:[%s0 + $0x1a0] sm:$0xf]
  %v123 = vld [vmem:[%s0 + $0x1a4] sm:$0xf]
  %v124 = vld [vmem:[%s0 + $0x1a8] sm:$0xf]
  %v125 = vld [vmem:[%s0 + $0x1ac] sm:$0xf]
  %v126 = vld [vmem:[%s0 + $0x1b0] sm:$0xf]
  %v127 = vld [vmem:[%s0 + $0x1b4] sm:$0xf]
  %v128 = vld [vmem:[%s0 + $0x1b8] sm:$0xf]
  %v129 = vld [vmem:[%s0 + $0x1bc] sm:$0xf]
  %v130 = vld [vmem:[%s0 + $0x1c0] sm:$0xf]
  %v131 = vld [vmem:[%s0 + $0x1c4] sm:$0xf]
  %v132 = vld [vmem:[%s0 + $0x1c8] sm:$0xf]
  %v133 = vld [vmem:[%s0 + $0x1cc] sm:$0xf]
  %v134 = vld [vmem:[%s0 + $0x1d0] sm:$0xf]
  %v135 = vld [vmem:[%s0 + $0x1d4] sm:$0xf]
  %v136 = vld [vmem:[%s0 + $0x1d8] sm:$0xf]
  %v137 = vld [vmem:[%s0 + $0x1dc] sm:$0xf]
  %v138 = vld [vmem:[%s0 + $0x1e0] sm:$0xf]
  %v139 = vld [vmem:[%s0 + $0x1e4] sm:$0xf]
  %v140 = vld [vmem:[%s0 + $0x1e8] sm:$0xf]
  %v141 = vld [vmem:[%s0 + $0x1ec] sm:$0xf]
  %v142 = vld [vmem:[%s0 + $0x1f0] sm:$0xf]
  %v143 = vld [vmem:[%s0 + $0x1f4] sm:$0xf]
  %v144 = vld [vmem:[%s0 + $0x1f8] sm:$0xf]
  %v145 = vld [vmem:[%s0 + $0x1fc] sm:$0xf]
  %v146 = vld [vmem:[%s1] sm:$0xf]
  %v147 = vld [vmem:[%s1 + $0x4] sm:$0x1]
  %v276 = vunpack.c.l.b16 %v18
  %v277 = vunpack.c.l.b16 %v19
  %v278 = vunpack.c.l.b16 %v20
  %v279 = vunpack.c.l.b16 %v21
  %v280 = vunpack.c.l.b16 %v22
  %v281 = vunpack.c.l.b16 %v23
  %v282 = vunpack.c.l.b16 %v24
  %v283 = vunpack.c.l.b16 %v25
  %v284 = vunpack.c.l.b16 %v26
  %v285 = vunpack.c.l.b16 %v27
  %v286 = vunpack.c.l.b16 %v28
  %v287 = vunpack.c.l.b16 %v29
  %v288 = vunpack.c.l.b16 %v30
  %v289 = vunpack.c.l.b16 %v31
  %v290 = vunpack.c.l.b16 %v32
  %v291 = vunpack.c.l.b16 %v33
  %v292 = vunpack.c.l.b16 %v34
  %v293 = vunpack.c.l.b16 %v35
  %v294 = vunpack.c.l.b16 %v36
  %v295 = vunpack.c.l.b16 %v37
  %v296 = vunpack.c.l.b16 %v38
  %v297 = vunpack.c.l.b16 %v39
  %v298 = vunpack.c.l.b16 %v40
  %v299 = vunpack.c.l.b16 %v41
  %v300 = vunpack.c.l.b16 %v42
  %v301 = vunpack.c.l.b16 %v43
  %v302 = vunpack.c.l.b16 %v44
  %v303 = vunpack.c.l.b16 %v45
  %v304 = vunpack.c.l.b16 %v46
  %v305 = vunpack.c.l.b16 %v47
  %v306 = vunpack.c.l.b16 %v48
  %v307 = vunpack.c.l.b16 %v49
  %v308 = vunpack.c.l.b16 %v50
  %v309 = vunpack.c.l.b16 %v51
  %v310 = vunpack.c.l.b16 %v52
  %v311 = vunpack.c.l.b16 %v53
  %v312 = vunpack.c.l.b16 %v54
  %v313 = vunpack.c.l.b16 %v55
  %v314 = vunpack.c.l.b16 %v56
  %v315 = vunpack.c.l.b16 %v57
  %v316 = vunpack.c.l.b16 %v58
  %v317 = vunpack.c.l.b16 %v59
  %v318 = vunpack.c.l.b16 %v60
  %v319 = vunpack.c.l.b16 %v61
  %v320 = vunpack.c.l.b16 %v62
  %v321 = vunpack.c.l.b16 %v63
  %v322 = vunpack.c.l.b16 %v64
  %v323 = vunpack.c.l.b16 %v65
  %v324 = vunpack.c.l.b16 %v66
  %v325 = vunpack.c.l.b16 %v67
  %v326 = vunpack.c.l.b16 %v68
  %v327 = vunpack.c.l.b16 %v69
  %v328 = vunpack.c.l.b16 %v70
  %v329 = vunpack.c.l.b16 %v71
  %v330 = vunpack.c.l.b16 %v72
  %v331 = vunpack.c.l.b16 %v73
  %v332 = vunpack.c.l.b16 %v74
  %v333 = vunpack.c.l.b16 %v75
  %v334 = vunpack.c.l.b16 %v76
  %v335 = vunpack.c.l.b16 %v77
  %v336 = vunpack.c.l.b16 %v78
  %v337 = vunpack.c.l.b16 %v79
  %v338 = vunpack.c.l.b16 %v80
  %v339 = vunpack.c.l.b16 %v81
  %v340 = vunpack.c.l.b16 %v82
  %v341 = vunpack.c.l.b16 %v83
  %v342 = vunpack.c.l.b16 %v84
  %v343 = vunpack.c.l.b16 %v85
  %v344 = vunpack.c.l.b16 %v86
  %v345 = vunpack.c.l.b16 %v87
  %v346 = vunpack.c.l.b16 %v88
  %v347 = vunpack.c.l.b16 %v89
  %v348 = vunpack.c.l.b16 %v90
  %v349 = vunpack.c.l.b16 %v91
  %v350 = vunpack.c.l.b16 %v92
  %v351 = vunpack.c.l.b16 %v93
  %v352 = vunpack.c.l.b16 %v94
  %v353 = vunpack.c.l.b16 %v95
  %v354 = vunpack.c.l.b16 %v96
  %v355 = vunpack.c.l.b16 %v97
  %v356 = vunpack.c.l.b16 %v98
  %v357 = vunpack.c.l.b16 %v99
  %v358 = vunpack.c.l.b16 %v100
  %v359 = vunpack.c.l.b16 %v101
  %v360 = vunpack.c.l.b16 %v102
  %v361 = vunpack.c.l.b16 %v103
  %v362 = vunpack.c.l.b16 %v104
  %v363 = vunpack.c.l.b16 %v105
  %v364 = vunpack.c.l.b16 %v106
  %v365 = vunpack.c.l.b16 %v107
  %v366 = vunpack.c.l.b16 %v108
  %v367 = vunpack.c.l.b16 %v109
  %v368 = vunpack.c.l.b16 %v110
  %v369 = vunpack.c.l.b16 %v111
  %v370 = vunpack.c.l.b16 %v112
  %v371 = vunpack.c.l.b16 %v113
  %v372 = vunpack.c.l.b16 %v114
  %v373 = vunpack.c.l.b16 %v115
  %v374 = vunpack.c.l.b16 %v116
  %v375 = vunpack.c.l.b16 %v117
  %v376 = vunpack.c.l.b16 %v118
  %v377 = vunpack.c.l.b16 %v119
  %v378 = vunpack.c.l.b16 %v120
  %v379 = vunpack.c.l.b16 %v121
  %v380 = vunpack.c.l.b16 %v122
  %v381 = vunpack.c.l.b16 %v123
  %v382 = vunpack.c.l.b16 %v124
  %v383 = vunpack.c.l.b16 %v125
  %v384 = vunpack.c.l.b16 %v126
  %v385 = vunpack.c.l.b16 %v127
  %v386 = vunpack.c.l.b16 %v128
  %v387 = vunpack.c.l.b16 %v129
  %v388 = vunpack.c.l.b16 %v130
  %v389 = vunpack.c.l.b16 %v131
  %v390 = vunpack.c.l.b16 %v132
  %v391 = vunpack.c.l.b16 %v133
  %v392 = vunpack.c.l.b16 %v134
  %v393 = vunpack.c.l.b16 %v135
  %v394 = vunpack.c.l.b16 %v136
  %v395 = vunpack.c.l.b16 %v137
  %v396 = vunpack.c.l.b16 %v138
  %v397 = vunpack.c.l.b16 %v139
  %v398 = vunpack.c.l.b16 %v140
  %v399 = vunpack.c.l.b16 %v141
  %v400 = vunpack.c.l.b16 %v142
  %v401 = vunpack.c.l.b16 %v143
  %v402 = vunpack.c.l.b16 %v144
  %v403 = vunpack.c.l.b16 %v145
  %v404 = vpack.c.b16 %v277, %v276
  %v405 = vpack.c.b16 %v279, %v278
  %v406 = vpack.c.b16 %v281, %v280
  %v407 = vpack.c.b16 %v283, %v282
  %v408 = vpack.c.b16 %v285, %v284
  %v409 = vpack.c.b16 %v287, %v286
  %v410 = vpack.c.b16 %v289, %v288
  %v411 = vpack.c.b16 %v291, %v290
  %v412 = vpack.c.b16 %v293, %v292
  %v413 = vpack.c.b16 %v295, %v294
  %v414 = vpack.c.b16 %v297, %v296
  %v415 = vpack.c.b16 %v299, %v298
  %v416 = vpack.c.b16 %v301, %v300
  %v417 = vpack.c.b16 %v303, %v302
  %v418 = vpack.c.b16 %v305, %v304
  %v419 = vpack.c.b16 %v307, %v306
  %v420 = vpack.c.b16 %v309, %v308
  %v421 = vpack.c.b16 %v311, %v310
  %v422 = vpack.c.b16 %v313, %v312
  %v423 = vpack.c.b16 %v315, %v314
  %v424 = vpack.c.b16 %v317, %v316
  %v425 = vpack.c.b16 %v319, %v318
  %v426 = vpack.c.b16 %v321, %v320
  %v427 = vpack.c.b16 %v323, %v322
  %v428 = vpack.c.b16 %v325, %v324
  %v429 = vpack.c.b16 %v327, %v326
  %v430 = vpack.c.b16 %v329, %v328
  %v431 = vpack.c.b16 %v331, %v330
  %v432 = vpack.c.b16 %v333, %v332
  %v433 = vpack.c.b16 %v335, %v334
  %v434 = vpack.c.b16 %v337, %v336
  %v435 = vpack.c.b16 %v339, %v338
  %v436 = vpack.c.b16 %v341, %v340
  %v437 = vpack.c.b16 %v343, %v342
  %v438 = vpack.c.b16 %v345, %v344
  %v439 = vpack.c.b16 %v347, %v346
  %v440 = vpack.c.b16 %v349, %v348
  %v441 = vpack.c.b16 %v351, %v350
  %v442 = vpack.c.b16 %v353, %v352
  %v443 = vpack.c.b16 %v355, %v354
  %v444 = vpack.c.b16 %v357, %v356
  %v445 = vpack.c.b16 %v359, %v358
  %v446 = vpack.c.b16 %v361, %v360
  %v447 = vpack.c.b16 %v363, %v362
  %v448 = vpack.c.b16 %v365, %v364
  %v449 = vpack.c.b16 %v367, %v366
  %v450 = vpack.c.b16 %v369, %v368
  %v451 = vpack.c.b16 %v371, %v370
  %v452 = vpack.c.b16 %v373, %v372
  %v453 = vpack.c.b16 %v375, %v374
  %v454 = vpack.c.b16 %v377, %v376
  %v455 = vpack.c.b16 %v379, %v378
  %v456 = vpack.c.b16 %v381, %v380
  %v457 = vpack.c.b16 %v383, %v382
  %v458 = vpack.c.b16 %v385, %v384
  %v459 = vpack.c.b16 %v387, %v386
  %v460 = vpack.c.b16 %v389, %v388
  %v461 = vpack.c.b16 %v391, %v390
  %v462 = vpack.c.b16 %v393, %v392
  %v463 = vpack.c.b16 %v395, %v394
  %v464 = vpack.c.b16 %v397, %v396
  %v465 = vpack.c.b16 %v399, %v398
  %v466 = vpack.c.b16 %v401, %v400
  %v467 = vpack.c.b16 %v403, %v402
  %v470 = vunpack.c.l.b16 %v146
  %v471 = vunpack.c.l.b16 %v147
  %v472 = vpack.c.b16 %v471, %v470
  %vm473 = vcmask 80896
  %v475 = vsel %vm473, %v404, 0
  %v478 = vsel %vm473, %v405, 0
  %v481 = vsel %vm473, %v406, 0
  %v484 = vsel %vm473, %v407, 0
  %v487 = vsel %vm473, %v408, 0
  %v490 = vsel %vm473, %v409, 0
  %v493 = vsel %vm473, %v410, 0
  %v496 = vsel %vm473, %v411, 0
  %v499 = vsel %vm473, %v412, 0
  %v502 = vsel %vm473, %v413, 0
  %v505 = vsel %vm473, %v414, 0
  %v508 = vsel %vm473, %v415, 0
  %v511 = vsel %vm473, %v416, 0
  %v514 = vsel %vm473, %v417, 0
  %v517 = vsel %vm473, %v418, 0
  %v520 = vsel %vm473, %v419, 0
  %v523 = vsel %vm473, %v420, 0
  %v526 = vsel %vm473, %v421, 0
  %v529 = vsel %vm473, %v422, 0
  %v532 = vsel %vm473, %v423, 0
  %v535 = vsel %vm473, %v424, 0
  %v538 = vsel %vm473, %v425, 0
  %v541 = vsel %vm473, %v426, 0
  %v544 = vsel %vm473, %v427, 0
  %v547 = vsel %vm473, %v428, 0
  %v550 = vsel %vm473, %v429, 0
  %v553 = vsel %vm473, %v430, 0
  %v556 = vsel %vm473, %v431, 0
  %v559 = vsel %vm473, %v432, 0
  %v562 = vsel %vm473, %v433, 0
  %v565 = vsel %vm473, %v434, 0
  %v568 = vsel %vm473, %v435, 0
  %v571 = vsel %vm473, %v436, 0
  %v574 = vsel %vm473, %v437, 0
  %v577 = vsel %vm473, %v438, 0
  %v580 = vsel %vm473, %v439, 0
  %v583 = vsel %vm473, %v440, 0
  %v586 = vsel %vm473, %v441, 0
  %v589 = vsel %vm473, %v442, 0
  %v592 = vsel %vm473, %v443, 0
  %v595 = vsel %vm473, %v444, 0
  %v598 = vsel %vm473, %v445, 0
  %v601 = vsel %vm473, %v446, 0
  %v604 = vsel %vm473, %v447, 0
  %v607 = vsel %vm473, %v448, 0
  %v610 = vsel %vm473, %v449, 0
  %v613 = vsel %vm473, %v450, 0
  %v616 = vsel %vm473, %v451, 0
  %v619 = vsel %vm473, %v452, 0
  %v622 = vsel %vm473, %v453, 0
  %v625 = vsel %vm473, %v454, 0
  %v628 = vsel %vm473, %v455, 0
  %v631 = vsel %vm473, %v456, 0
  %v634 = vsel %vm473, %v457, 0
  %v637 = vsel %vm473, %v458, 0
  %v640 = vsel %vm473, %v459, 0
  %v643 = vsel %vm473, %v460, 0
  %v646 = vsel %vm473, %v461, 0
  %v649 = vsel %vm473, %v462, 0
  %v652 = vsel %vm473, %v463, 0
  %v655 = vsel %vm473, %v464, 0
  %v658 = vsel %vm473, %v465, 0
  %v661 = vsel %vm473, %v466, 0
  %v664 = vsel %vm473, %v467, 0
  %vm666 = vcmask 1044480
  %v668 = vsel %vm666, %v472, 0
  %670 = vmatprep.subr.bf16.mxu0 0
  %671 = vmatpush1.bf16.msra.mxu0 0
  %672 = vmatprep.subr.bf16.mxu0 0
  %673 = vmatpush1.bf16.msra.mxu0 0
  %674 = vmatprep.subr.bf16.mxu0 0
  %675 = vmatpush1.bf16.msra.mxu0 0
  %676 = vmatprep.subr.bf16.mxu0 0
  %677 = vmatpush1.bf16.msra.mxu0 0
  %678 = vmatprep.subr.bf16.mxu0 0
  %679 = vmatpush1.bf16.msra.mxu0 0
  %680 = vmatprep.subr.bf16.mxu0 0
  %681 = vmatpush1.bf16.msra.mxu0 0
  %682 = vmatprep.subr.bf16.mxu0 0
  %683 = vmatpush1.bf16.msra.mxu0 0
  %684 = vmatprep.subr.bf16.mxu0 0
  %685 = vmatpush1.bf16.msra.mxu0 %v668
  %686 = vmatprep.subr.bf16.mxu0 0
  %687 = vmatpush2.bf16.msra.mxu0 0
  %688 = vmatprep.subr.bf16.mxu0 0
  %689 = vmatpush2.bf16.msra.mxu0 0
  %690 = vmatprep.subr.bf16.mxu0 0
  %691 = vmatpush2.bf16.msra.mxu0 0
  %692 = vmatprep.subr.bf16.mxu0 0
  %693 = vmatpush2.bf16.msra.mxu0 0
  %694 = vmatprep.subr.bf16.mxu0 0
  %695 = vmatpush2.bf16.msra.mxu0 0
  %696 = vmatprep.subr.bf16.mxu0 0
  %697 = vmatpush2.bf16.msra.mxu0 0
  %698 = vmatprep.subr.bf16.mxu0 0
  %699 = vmatpush2.bf16.msra.mxu0 0
  %700 = vmatprep.subr.bf16.mxu0 0
  %701 = vmatpush2.bf16.msra.mxu0 0
  %702 = vmatprep.mubr.bf16.mxu0 0
  %703 = vmatmul.mubr.bf16.gmra.mxu0 %v475
  %v704 = vpop.f32.mrf.mxu0
  %v705 = vadd.f32 0.0, %v704
  %v706 = vpop.f32.mrf.mxu0
  %v707 = vpop.f32.mrf.mxu0
  %v708 = vadd.f32 0.0, %v707
  %v709 = vpop.f32.mrf.mxu0
  %710 = vmatprep.mubr.bf16.mxu0 0
  %711 = vmatmul.mubr.bf16.gmra.mxu0 %v478
  %v712 = vpop.f32.mrf.mxu0
  %v713 = vadd.f32 0.0, %v712
  %v714 = vpop.f32.mrf.mxu0
  %v715 = vpop.f32.mrf.mxu0
  %v716 = vadd.f32 0.0, %v715
  %v717 = vpop.f32.mrf.mxu0
  %718 = vmatprep.mubr.bf16.mxu0 0
  %719 = vmatmul.mubr.bf16.gmra.mxu0 %v481
  %v720 = vpop.f32.mrf.mxu0
  %v721 = vadd.f32 0.0, %v720
  %v722 = vpop.f32.mrf.mxu0
  %v723 = vpop.f32.mrf.mxu0
  %v724 = vadd.f32 0.0, %v723
  %v725 = vpop.f32.mrf.mxu0
  %726 = vmatprep.mubr.bf16.mxu0 0
  %727 = vmatmul.mubr.bf16.gmra.mxu0 %v484
  %v728 = vpop.f32.mrf.mxu0
  %v729 = vadd.f32 0.0, %v728
  %v730 = vpop.f32.mrf.mxu0
  %v731 = vpop.f32.mrf.mxu0
  %v732 = vadd.f32 0.0, %v731
  %v733 = vpop.f32.mrf.mxu0
  %734 = vmatprep.mubr.bf16.mxu0 0
  %735 = vmatmul.mubr.bf16.gmra.mxu0 %v487
  %v736 = vpop.f32.mrf.mxu0
  %v737 = vadd.f32 0.0, %v736
  %v738 = vpop.f32.mrf.mxu0
  %v739 = vpop.f32.mrf.mxu0
  %v740 = vadd.f32 0.0, %v739
  %v741 = vpop.f32.mrf.mxu0
  %742 = vmatprep.mubr.bf16.mxu0 0
  %743 = vmatmul.mubr.bf16.gmra.mxu0 %v490
  %v744 = vpop.f32.mrf.mxu0
  %v745 = vadd.f32 0.0, %v744
  %v746 = vpop.f32.mrf.mxu0
  %v747 = vpop.f32.mrf.mxu0
  %v748 = vadd.f32 0.0, %v747
  %v749 = vpop.f32.mrf.mxu0
  %750 = vmatprep.mubr.bf16.mxu0 0
  %751 = vmatmul.mubr.bf16.gmra.mxu0 %v493
  %v752 = vpop.f32.mrf.mxu0
  %v753 = vadd.f32 0.0, %v752
  %v754 = vpop.f32.mrf.mxu0
  %v755 = vpop.f32.mrf.mxu0
  %v756 = vadd.f32 0.0, %v755
  %v757 = vpop.f32.mrf.mxu0
  %758 = vmatprep.mubr.bf16.mxu0 0
  %759 = vmatmul.mubr.bf16.gmra.mxu0 %v496
  %v760 = vpop.f32.mrf.mxu0
  %v761 = vadd.f32 0.0, %v760
  %v762 = vpop.f32.mrf.mxu0
  %v763 = vpop.f32.mrf.mxu0
  %v764 = vadd.f32 0.0, %v763
  %v765 = vpop.f32.mrf.mxu0
  %766 = vmatprep.mubr.bf16.mxu0 0
  %767 = vmatmul.mubr.bf16.gmra.mxu0 %v499
  %v768 = vpop.f32.mrf.mxu0
  %v769 = vadd.f32 0.0, %v768
  %v770 = vpop.f32.mrf.mxu0
  %v771 = vpop.f32.mrf.mxu0
  %v772 = vadd.f32 0.0, %v771
  %v773 = vpop.f32.mrf.mxu0
  %774 = vmatprep.mubr.bf16.mxu0 0
  %775 = vmatmul.mubr.bf16.gmra.mxu0 %v502
  %v776 = vpop.f32.mrf.mxu0
  %v777 = vadd.f32 0.0, %v776
  %v778 = vpop.f32.mrf.mxu0
  %v779 = vpop.f32.mrf.mxu0
  %v780 = vadd.f32 0.0, %v779
  %v781 = vpop.f32.mrf.mxu0
  %782 = vmatprep.mubr.bf16.mxu0 0
  %783 = vmatmul.mubr.bf16.gmra.mxu0 %v505
  %v784 = vpop.f32.mrf.mxu0
  %v785 = vadd.f32 0.0, %v784
  %v786 = vpop.f32.mrf.mxu0
  %v787 = vpop.f32.mrf.mxu0
  %v788 = vadd.f32 0.0, %v787
  %v789 = vpop.f32.mrf.mxu0
  %790 = vmatprep.mubr.bf16.mxu0 0
  %791 = vmatmul.mubr.bf16.gmra.mxu0 %v508
  %v792 = vpop.f32.mrf.mxu0
  %v793 = vadd.f32 0.0, %v792
  %v794 = vpop.f32.mrf.mxu0
  %v795 = vpop.f32.mrf.mxu0
  %v796 = vadd.f32 0.0, %v795
  %v797 = vpop.f32.mrf.mxu0
  %798 = vmatprep.mubr.bf16.mxu0 0
  %799 = vmatmul.mubr.bf16.gmra.mxu0 %v511
  %v800 = vpop.f32.mrf.mxu0
  %v801 = vadd.f32 0.0, %v800
  %v802 = vpop.f32.mrf.mxu0
  %v803 = vpop.f32.mrf.mxu0
  %v804 = vadd.f32 0.0, %v803
  %v805 = vpop.f32.mrf.mxu0
  %806 = vmatprep.mubr.bf16.mxu0 0
  %807 = vmatmul.mubr.bf16.gmra.mxu0 %v514
  %v808 = vpop.f32.mrf.mxu0
  %v809 = vadd.f32 0.0, %v808
  %v810 = vpop.f32.mrf.mxu0
  %v811 = vpop.f32.mrf.mxu0
  %v812 = vadd.f32 0.0, %v811
  %v813 = vpop.f32.mrf.mxu0
  %814 = vmatprep.mubr.bf16.mxu0 0
  %815 = vmatmul.mubr.bf16.gmra.mxu0 %v517
  %v816 = vpop.f32.mrf.mxu0
  %v817 = vadd.f32 0.0, %v816
  %v818 = vpop.f32.mrf.mxu0
  %v819 = vpop.f32.mrf.mxu0
  %v820 = vadd.f32 0.0, %v819
  %v821 = vpop.f32.mrf.mxu0
  %822 = vmatprep.mubr.bf16.mxu0 0
  %823 = vmatmul.mubr.bf16.gmra.mxu0 %v520
  %v824 = vpop.f32.mrf.mxu0
  %v825 = vadd.f32 0.0, %v824
  %v826 = vpop.f32.mrf.mxu0
  %v827 = vpop.f32.mrf.mxu0
  %v828 = vadd.f32 0.0, %v827
  %v829 = vpop.f32.mrf.mxu0
  %830 = vmatprep.mubr.bf16.mxu0 0
  %831 = vmatmul.mubr.bf16.gmra.mxu0 %v523
  %v832 = vpop.f32.mrf.mxu0
  %v833 = vadd.f32 0.0, %v832
  %v834 = vpop.f32.mrf.mxu0
  %v835 = vpop.f32.mrf.mxu0
  %v836 = vadd.f32 0.0, %v835
  %v837 = vpop.f32.mrf.mxu0
  %838 = vmatprep.mubr.bf16.mxu0 0
  %839 = vmatmul.mubr.bf16.gmra.mxu0 %v526
  %v840 = vpop.f32.mrf.mxu0
  %v841 = vadd.f32 0.0, %v840
  %v842 = vpop.f32.mrf.mxu0
  %v843 = vpop.f32.mrf.mxu0
  %v844 = vadd.f32 0.0, %v843
  %v845 = vpop.f32.mrf.mxu0
  %846 = vmatprep.mubr.bf16.mxu0 0
  %847 = vmatmul.mubr.bf16.gmra.mxu0 %v529
  %v848 = vpop.f32.mrf.mxu0
  %v849 = vadd.f32 0.0, %v848
  %v850 = vpop.f32.mrf.mxu0
  %v851 = vpop.f32.mrf.mxu0
  %v852 = vadd.f32 0.0, %v851
  %v853 = vpop.f32.mrf.mxu0
  %854 = vmatprep.mubr.bf16.mxu0 0
  %855 = vmatmul.mubr.bf16.gmra.mxu0 %v532
  %v856 = vpop.f32.mrf.mxu0
  %v857 = vadd.f32 0.0, %v856
  %v858 = vpop.f32.mrf.mxu0
  %v859 = vpop.f32.mrf.mxu0
  %v860 = vadd.f32 0.0, %v859
  %v861 = vpop.f32.mrf.mxu0
  %862 = vmatprep.mubr.bf16.mxu0 0
  %863 = vmatmul.mubr.bf16.gmra.mxu0 %v535
  %v864 = vpop.f32.mrf.mxu0
  %v865 = vadd.f32 0.0, %v864
  %v866 = vpop.f32.mrf.mxu0
  %v867 = vpop.f32.mrf.mxu0
  %v868 = vadd.f32 0.0, %v867
  %v869 = vpop.f32.mrf.mxu0
  %870 = vmatprep.mubr.bf16.mxu0 0
  %871 = vmatmul.mubr.bf16.gmra.mxu0 %v538
  %v872 = vpop.f32.mrf.mxu0
  %v873 = vadd.f32 0.0, %v872
  %v874 = vpop.f32.mrf.mxu0
  %v875 = vpop.f32.mrf.mxu0
  %v876 = vadd.f32 0.0, %v875
  %v877 = vpop.f32.mrf.mxu0
  %878 = vmatprep.mubr.bf16.mxu0 0
  %879 = vmatmul.mubr.bf16.gmra.mxu0 %v541
  %v880 = vpop.f32.mrf.mxu0
  %v881 = vadd.f32 0.0, %v880
  %v882 = vpop.f32.mrf.mxu0
  %v883 = vpop.f32.mrf.mxu0
  %v884 = vadd.f32 0.0, %v883
  %v885 = vpop.f32.mrf.mxu0
  %886 = vmatprep.mubr.bf16.mxu0 0
  %887 = vmatmul.mubr.bf16.gmra.mxu0 %v544
  %v888 = vpop.f32.mrf.mxu0
  %v889 = vadd.f32 0.0, %v888
  %v890 = vpop.f32.mrf.mxu0
  %v891 = vpop.f32.mrf.mxu0
  %v892 = vadd.f32 0.0, %v891
  %v893 = vpop.f32.mrf.mxu0
  %894 = vmatprep.mubr.bf16.mxu0 0
  %895 = vmatmul.mubr.bf16.gmra.mxu0 %v547
  %v896 = vpop.f32.mrf.mxu0
  %v897 = vadd.f32 0.0, %v896
  %v898 = vpop.f32.mrf.mxu0
  %v899 = vpop.f32.mrf.mxu0
  %v900 = vadd.f32 0.0, %v899
  %v901 = vpop.f32.mrf.mxu0
  %902 = vmatprep.mubr.bf16.mxu0 0
  %903 = vmatmul.mubr.bf16.gmra.mxu0 %v550
  %v904 = vpop.f32.mrf.mxu0
  %v905 = vadd.f32 0.0, %v904
  %v906 = vpop.f32.mrf.mxu0
  %v907 = vpop.f32.mrf.mxu0
  %v908 = vadd.f32 0.0, %v907
  %v909 = vpop.f32.mrf.mxu0
  %910 = vmatprep.mubr.bf16.mxu0 0
  %911 = vmatmul.mubr.bf16.gmra.mxu0 %v553
  %v912 = vpop.f32.mrf.mxu0
  %v913 = vadd.f32 0.0, %v912
  %v914 = vpop.f32.mrf.mxu0
  %v915 = vpop.f32.mrf.mxu0
  %v916 = vadd.f32 0.0, %v915
  %v917 = vpop.f32.mrf.mxu0
  %918 = vmatprep.mubr.bf16.mxu0 0
  %919 = vmatmul.mubr.bf16.gmra.mxu0 %v556
  %v920 = vpop.f32.mrf.mxu0
  %v921 = vadd.f32 0.0, %v920
  %v922 = vpop.f32.mrf.mxu0
  %v923 = vpop.f32.mrf.mxu0
  %v924 = vadd.f32 0.0, %v923
  %v925 = vpop.f32.mrf.mxu0
  %926 = vmatprep.mubr.bf16.mxu0 0
  %927 = vmatmul.mubr.bf16.gmra.mxu0 %v559
  %v928 = vpop.f32.mrf.mxu0
  %v929 = vadd.f32 0.0, %v928
  %v930 = vpop.f32.mrf.mxu0
  %v931 = vpop.f32.mrf.mxu0
  %v932 = vadd.f32 0.0, %v931
  %v933 = vpop.f32.mrf.mxu0
  %934 = vmatprep.mubr.bf16.mxu0 0
  %935 = vmatmul.mubr.bf16.gmra.mxu0 %v562
  %v936 = vpop.f32.mrf.mxu0
  %v937 = vadd.f32 0.0, %v936
  %v938 = vpop.f32.mrf.mxu0
  %v939 = vpop.f32.mrf.mxu0
  %v940 = vadd.f32 0.0, %v939
  %v941 = vpop.f32.mrf.mxu0
  %942 = vmatprep.mubr.bf16.mxu0 0
  %943 = vmatmul.mubr.bf16.gmra.mxu0 %v565
  %v944 = vpop.f32.mrf.mxu0
  %v945 = vadd.f32 0.0, %v944
  %v946 = vpop.f32.mrf.mxu0
  %v947 = vpop.f32.mrf.mxu0
  %v948 = vadd.f32 0.0, %v947
  %v949 = vpop.f32.mrf.mxu0
  %950 = vmatprep.mubr.bf16.mxu0 0
  %951 = vmatmul.mubr.bf16.gmra.mxu0 %v568
  %v952 = vpop.f32.mrf.mxu0
  %v953 = vadd.f32 0.0, %v952
  %v954 = vpop.f32.mrf.mxu0
  %v955 = vpop.f32.mrf.mxu0
  %v956 = vadd.f32 0.0, %v955
  %v957 = vpop.f32.mrf.mxu0
  %958 = vmatprep.mubr.bf16.mxu0 0
  %959 = vmatmul.mubr.bf16.gmra.mxu0 %v571
  %v960 = vpop.f32.mrf.mxu0
  %v961 = vadd.f32 0.0, %v960
  %v962 = vpop.f32.mrf.mxu0
  %v963 = vpop.f32.mrf.mxu0
  %v964 = vadd.f32 0.0, %v963
  %v965 = vpop.f32.mrf.mxu0
  %966 = vmatprep.mubr.bf16.mxu0 0
  %967 = vmatmul.mubr.bf16.gmra.mxu0 %v574
  %v968 = vpop.f32.mrf.mxu0
  %v969 = vadd.f32 0.0, %v968
  %v970 = vpop.f32.mrf.mxu0
  %v971 = vpop.f32.mrf.mxu0
  %v972 = vadd.f32 0.0, %v971
  %v973 = vpop.f32.mrf.mxu0
  %974 = vmatprep.mubr.bf16.mxu0 0
  %975 = vmatmul.mubr.bf16.gmra.mxu0 %v577
  %v976 = vpop.f32.mrf.mxu0
  %v977 = vadd.f32 0.0, %v976
  %v978 = vpop.f32.mrf.mxu0
  %v979 = vpop.f32.mrf.mxu0
  %v980 = vadd.f32 0.0, %v979
  %v981 = vpop.f32.mrf.mxu0
  %982 = vmatprep.mubr.bf16.mxu0 0
  %983 = vmatmul.mubr.bf16.gmra.mxu0 %v580
  %v984 = vpop.f32.mrf.mxu0
  %v985 = vadd.f32 0.0, %v984
  %v986 = vpop.f32.mrf.mxu0
  %v987 = vpop.f32.mrf.mxu0
  %v988 = vadd.f32 0.0, %v987
  %v989 = vpop.f32.mrf.mxu0
  %990 = vmatprep.mubr.bf16.mxu0 0
  %991 = vmatmul.mubr.bf16.gmra.mxu0 %v583
  %v992 = vpop.f32.mrf.mxu0
  %v993 = vadd.f32 0.0, %v992
  %v994 = vpop.f32.mrf.mxu0
  %v995 = vpop.f32.mrf.mxu0
  %v996 = vadd.f32 0.0, %v995
  %v997 = vpop.f32.mrf.mxu0
  %998 = vmatprep.mubr.bf16.mxu0 0
  %999 = vmatmul.mubr.bf16.gmra.mxu0 %v586
  %v1000 = vpop.f32.mrf.mxu0
  %v1001 = vadd.f32 0.0, %v1000
  %v1002 = vpop.f32.mrf.mxu0
  %v1003 = vpop.f32.mrf.mxu0
  %v1004 = vadd.f32 0.0, %v1003
  %v1005 = vpop.f32.mrf.mxu0
  %1006 = vmatprep.mubr.bf16.mxu0 0
  %1007 = vmatmul.mubr.bf16.gmra.mxu0 %v589
  %v1008 = vpop.f32.mrf.mxu0
  %v1009 = vadd.f32 0.0, %v1008
  %v1010 = vpop.f32.mrf.mxu0
  %v1011 = vpop.f32.mrf.mxu0
  %v1012 = vadd.f32 0.0, %v1011
  %v1013 = vpop.f32.mrf.mxu0
  %1014 = vmatprep.mubr.bf16.mxu0 0
  %1015 = vmatmul.mubr.bf16.gmra.mxu0 %v592
  %v1016 = vpop.f32.mrf.mxu0
  %v1017 = vadd.f32 0.0, %v1016
  %v1018 = vpop.f32.mrf.mxu0
  %v1019 = vpop.f32.mrf.mxu0
  %v1020 = vadd.f32 0.0, %v1019
  %v1021 = vpop.f32.mrf.mxu0
  %1022 = vmatprep.mubr.bf16.mxu0 0
  %1023 = vmatmul.mubr.bf16.gmra.mxu0 %v595
  %v1024 = vpop.f32.mrf.mxu0
  %v1025 = vadd.f32 0.0, %v1024
  %v1026 = vpop.f32.mrf.mxu0
  %v1027 = vpop.f32.mrf.mxu0
  %v1028 = vadd.f32 0.0, %v1027
  %v1029 = vpop.f32.mrf.mxu0
  %1030 = vmatprep.mubr.bf16.mxu0 0
  %1031 = vmatmul.mubr.bf16.gmra.mxu0 %v598
  %v1032 = vpop.f32.mrf.mxu0
  %v1033 = vadd.f32 0.0, %v1032
  %v1034 = vpop.f32.mrf.mxu0
  %v1035 = vpop.f32.mrf.mxu0
  %v1036 = vadd.f32 0.0, %v1035
  %v1037 = vpop.f32.mrf.mxu0
  %1038 = vmatprep.mubr.bf16.mxu0 0
  %1039 = vmatmul.mubr.bf16.gmra.mxu0 %v601
  %v1040 = vpop.f32.mrf.mxu0
  %v1041 = vadd.f32 0.0, %v1040
  %v1042 = vpop.f32.mrf.mxu0
  %v1043 = vpop.f32.mrf.mxu0
  %v1044 = vadd.f32 0.0, %v1043
  %v1045 = vpop.f32.mrf.mxu0
  %1046 = vmatprep.mubr.bf16.mxu0 0
  %1047 = vmatmul.mubr.bf16.gmra.mxu0 %v604
  %v1048 = vpop.f32.mrf.mxu0
  %v1049 = vadd.f32 0.0, %v1048
  %v1050 = vpop.f32.mrf.mxu0
  %v1051 = vpop.f32.mrf.mxu0
  %v1052 = vadd.f32 0.0, %v1051
  %v1053 = vpop.f32.mrf.mxu0
  %1054 = vmatprep.mubr.bf16.mxu0 0
  %1055 = vmatmul.mubr.bf16.gmra.mxu0 %v607
  %v1056 = vpop.f32.mrf.mxu0
  %v1057 = vadd.f32 0.0, %v1056
  %v1058 = vpop.f32.mrf.mxu0
  %v1059 = vpop.f32.mrf.mxu0
  %v1060 = vadd.f32 0.0, %v1059
  %v1061 = vpop.f32.mrf.mxu0
  %1062 = vmatprep.mubr.bf16.mxu0 0
  %1063 = vmatmul.mubr.bf16.gmra.mxu0 %v610
  %v1064 = vpop.f32.mrf.mxu0
  %v1065 = vadd.f32 0.0, %v1064
  %v1066 = vpop.f32.mrf.mxu0
  %v1067 = vpop.f32.mrf.mxu0
  %v1068 = vadd.f32 0.0, %v1067
  %v1069 = vpop.f32.mrf.mxu0
  %1070 = vmatprep.mubr.bf16.mxu0 0
  %1071 = vmatmul.mubr.bf16.gmra.mxu0 %v613
  %v1072 = vpop.f32.mrf.mxu0
  %v1073 = vadd.f32 0.0, %v1072
  %v1074 = vpop.f32.mrf.mxu0
  %v1075 = vpop.f32.mrf.mxu0
  %v1076 = vadd.f32 0.0, %v1075
  %v1077 = vpop.f32.mrf.mxu0
  %1078 = vmatprep.mubr.bf16.mxu0 0
  %1079 = vmatmul.mubr.bf16.gmra.mxu0 %v616
  %v1080 = vpop.f32.mrf.mxu0
  %v1081 = vadd.f32 0.0, %v1080
  %v1082 = vpop.f32.mrf.mxu0
  %v1083 = vpop.f32.mrf.mxu0
  %v1084 = vadd.f32 0.0, %v1083
  %v1085 = vpop.f32.mrf.mxu0
  %1086 = vmatprep.mubr.bf16.mxu0 0
  %1087 = vmatmul.mubr.bf16.gmra.mxu0 %v619
  %v1088 = vpop.f32.mrf.mxu0
  %v1089 = vadd.f32 0.0, %v1088
  %v1090 = vpop.f32.mrf.mxu0
  %v1091 = vpop.f32.mrf.mxu0
  %v1092 = vadd.f32 0.0, %v1091
  %v1093 = vpop.f32.mrf.mxu0
  %1094 = vmatprep.mubr.bf16.mxu0 0
  %1095 = vmatmul.mubr.bf16.gmra.mxu0 %v622
  %v1096 = vpop.f32.mrf.mxu0
  %v1097 = vadd.f32 0.0, %v1096
  %v1098 = vpop.f32.mrf.mxu0
  %v1099 = vpop.f32.mrf.mxu0
  %v1100 = vadd.f32 0.0, %v1099
  %v1101 = vpop.f32.mrf.mxu0
  %1102 = vmatprep.mubr.bf16.mxu0 0
  %1103 = vmatmul.mubr.bf16.gmra.mxu0 %v625
  %v1104 = vpop.f32.mrf.mxu0
  %v1105 = vadd.f32 0.0, %v1104
  %v1106 = vpop.f32.mrf.mxu0
  %v1107 = vpop.f32.mrf.mxu0
  %v1108 = vadd.f32 0.0, %v1107
  %v1109 = vpop.f32.mrf.mxu0
  %1110 = vmatprep.mubr.bf16.mxu0 0
  %1111 = vmatmul.mubr.bf16.gmra.mxu0 %v628
  %v1112 = vpop.f32.mrf.mxu0
  %v1113 = vadd.f32 0.0, %v1112
  %v1114 = vpop.f32.mrf.mxu0
  %v1115 = vpop.f32.mrf.mxu0
  %v1116 = vadd.f32 0.0, %v1115
  %v1117 = vpop.f32.mrf.mxu0
  %1118 = vmatprep.mubr.bf16.mxu0 0
  %1119 = vmatmul.mubr.bf16.gmra.mxu0 %v631
  %v1120 = vpop.f32.mrf.mxu0
  %v1121 = vadd.f32 0.0, %v1120
  %v1122 = vpop.f32.mrf.mxu0
  %v1123 = vpop.f32.mrf.mxu0
  %v1124 = vadd.f32 0.0, %v1123
  %v1125 = vpop.f32.mrf.mxu0
  %1126 = vmatprep.mubr.bf16.mxu0 0
  %1127 = vmatmul.mubr.bf16.gmra.mxu0 %v634
  %v1128 = vpop.f32.mrf.mxu0
  %v1129 = vadd.f32 0.0, %v1128
  %v1130 = vpop.f32.mrf.mxu0
  %v1131 = vpop.f32.mrf.mxu0
  %v1132 = vadd.f32 0.0, %v1131
  %v1133 = vpop.f32.mrf.mxu0
  %1134 = vmatprep.mubr.bf16.mxu0 0
  %1135 = vmatmul.mubr.bf16.gmra.mxu0 %v637
  %v1136 = vpop.f32.mrf.mxu0
  %v1137 = vadd.f32 0.0, %v1136
  %v1138 = vpop.f32.mrf.mxu0
  %v1139 = vpop.f32.mrf.mxu0
  %v1140 = vadd.f32 0.0, %v1139
  %v1141 = vpop.f32.mrf.mxu0
  %1142 = vmatprep.mubr.bf16.mxu0 0
  %1143 = vmatmul.mubr.bf16.gmra.mxu0 %v640
  %v1144 = vpop.f32.mrf.mxu0
  %v1145 = vadd.f32 0.0, %v1144
  %v1146 = vpop.f32.mrf.mxu0
  %v1147 = vpop.f32.mrf.mxu0
  %v1148 = vadd.f32 0.0, %v1147
  %v1149 = vpop.f32.mrf.mxu0
  %1150 = vmatprep.mubr.bf16.mxu0 0
  %1151 = vmatmul.mubr.bf16.gmra.mxu0 %v643
  %v1152 = vpop.f32.mrf.mxu0
  %v1153 = vadd.f32 0.0, %v1152
  %v1154 = vpop.f32.mrf.mxu0
  %v1155 = vpop.f32.mrf.mxu0
  %v1156 = vadd.f32 0.0, %v1155
  %v1157 = vpop.f32.mrf.mxu0
  %1158 = vmatprep.mubr.bf16.mxu0 0
  %1159 = vmatmul.mubr.bf16.gmra.mxu0 %v646
  %v1160 = vpop.f32.mrf.mxu0
  %v1161 = vadd.f32 0.0, %v1160
  %v1162 = vpop.f32.mrf.mxu0
  %v1163 = vpop.f32.mrf.mxu0
  %v1164 = vadd.f32 0.0, %v1163
  %v1165 = vpop.f32.mrf.mxu0
  %1166 = vmatprep.mubr.bf16.mxu0 0
  %1167 = vmatmul.mubr.bf16.gmra.mxu0 %v649
  %v1168 = vpop.f32.mrf.mxu0
  %v1169 = vadd.f32 0.0, %v1168
  %v1170 = vpop.f32.mrf.mxu0
  %v1171 = vpop.f32.mrf.mxu0
  %v1172 = vadd.f32 0.0, %v1171
  %v1173 = vpop.f32.mrf.mxu0
  %1174 = vmatprep.mubr.bf16.mxu0 0
  %1175 = vmatmul.mubr.bf16.gmra.mxu0 %v652
  %v1176 = vpop.f32.mrf.mxu0
  %v1177 = vadd.f32 0.0, %v1176
  %v1178 = vpop.f32.mrf.mxu0
  %v1179 = vpop.f32.mrf.mxu0
  %v1180 = vadd.f32 0.0, %v1179
  %v1181 = vpop.f32.mrf.mxu0
  %1182 = vmatprep.mubr.bf16.mxu0 0
  %1183 = vmatmul.mubr.bf16.gmra.mxu0 %v655
  %v1184 = vpop.f32.mrf.mxu0
  %v1185 = vadd.f32 0.0, %v1184
  %v1186 = vpop.f32.mrf.mxu0
  %v1187 = vpop.f32.mrf.mxu0
  %v1188 = vadd.f32 0.0, %v1187
  %v1189 = vpop.f32.mrf.mxu0
  %1190 = vmatprep.mubr.bf16.mxu0 0
  %1191 = vmatmul.mubr.bf16.gmra.mxu0 %v658
  %v1192 = vpop.f32.mrf.mxu0
  %v1193 = vadd.f32 0.0, %v1192
  %v1194 = vpop.f32.mrf.mxu0
  %v1195 = vpop.f32.mrf.mxu0
  %v1196 = vadd.f32 0.0, %v1195
  %v1197 = vpop.f32.mrf.mxu0
  %1198 = vmatprep.mubr.bf16.mxu0 0
  %1199 = vmatmul.mubr.bf16.gmra.mxu0 %v661
  %v1200 = vpop.f32.mrf.mxu0
  %v1201 = vadd.f32 0.0, %v1200
  %v1202 = vpop.f32.mrf.mxu0
  %v1203 = vpop.f32.mrf.mxu0
  %v1204 = vadd.f32 0.0, %v1203
  %v1205 = vpop.f32.mrf.mxu0
  %1206 = vmatprep.mubr.bf16.mxu0 0
  %1207 = vmatmul.mubr.bf16.gmra.mxu0 %v664
  %v1208 = vpop.f32.mrf.mxu0
  %v1209 = vadd.f32 0.0, %v1208
  %v1210 = vpop.f32.mrf.mxu0
  %v1211 = vpop.f32.mrf.mxu0
  %v1212 = vadd.f32 0.0, %v1211
  %v1213 = vpop.f32.mrf.mxu0
  %1214 = vdwg.mxu0
  %v1215 = vmax.f32 %v705, 0.0
  %v1216 = vmax.f32 %v708, 0.0
  %v1217 = vmax.f32 %v713, 0.0
  %v1218 = vmax.f32 %v716, 0.0
  %v1219 = vmax.f32 %v721, 0.0
  %v1220 = vmax.f32 %v724, 0.0
  %v1221 = vmax.f32 %v729, 0.0
  %v1222 = vmax.f32 %v732, 0.0
  %v1223 = vmax.f32 %v737, 0.0
  %v1224 = vmax.f32 %v740, 0.0
  %v1225 = vmax.f32 %v745, 0.0
  %v1226 = vmax.f32 %v748, 0.0
  %v1227 = vmax.f32 %v753, 0.0
  %v1228 = vmax.f32 %v756, 0.0
  %v1229 = vmax.f32 %v761, 0.0
  %v1230 = vmax.f32 %v764, 0.0
  %v1231 = vmax.f32 %v769, 0.0
  %v1232 = vmax.f32 %v772, 0.0
  %v1233 = vmax.f32 %v777, 0.0
  %v1234 = vmax.f32 %v780, 0.0
  %v1235 = vmax.f32 %v785, 0.0
  %v1236 = vmax.f32 %v788, 0.0
  %v1237 = vmax.f32 %v793, 0.0
  %v1238 = vmax.f32 %v796, 0.0
  %v1239 = vmax.f32 %v801, 0.0
  %v1240 = vmax.f32 %v804, 0.0
  %v1241 = vmax.f32 %v809, 0.0
  %v1242 = vmax.f32 %v812, 0.0
  %v1243 = vmax.f32 %v817, 0.0
  %v1244 = vmax.f32 %v820, 0.0
  %v1245 = vmax.f32 %v825, 0.0
  %v1246 = vmax.f32 %v828, 0.0
  %v1247 = vmax.f32 %v833, 0.0
  %v1248 = vmax.f32 %v836, 0.0
  %v1249 = vmax.f32 %v841, 0.0
  %v1250 = vmax.f32 %v844, 0.0
  %v1251 = vmax.f32 %v849, 0.0
  %v1252 = vmax.f32 %v852, 0.0
  %v1253 = vmax.f32 %v857, 0.0
  %v1254 = vmax.f32 %v860, 0.0
  %v1255 = vmax.f32 %v865, 0.0
  %v1256 = vmax.f32 %v868, 0.0
  %v1257 = vmax.f32 %v873, 0.0
  %v1258 = vmax.f32 %v876, 0.0
  %v1259 = vmax.f32 %v881, 0.0
  %v1260 = vmax.f32 %v884, 0.0
  %v1261 = vmax.f32 %v889, 0.0
  %v1262 = vmax.f32 %v892, 0.0
  %v1263 = vmax.f32 %v897, 0.0
  %v1264 = vmax.f32 %v900, 0.0
  %v1265 = vmax.f32 %v905, 0.0
  %v1266 = vmax.f32 %v908, 0.0
  %v1267 = vmax.f32 %v913, 0.0
  %v1268 = vmax.f32 %v916, 0.0
  %v1269 = vmax.f32 %v921, 0.0
  %v1270 = vmax.f32 %v924, 0.0
  %v1271 = vmax.f32 %v929, 0.0
  %v1272 = vmax.f32 %v932, 0.0
  %v1273 = vmax.f32 %v937, 0.0
  %v1274 = vmax.f32 %v940, 0.0
  %v1275 = vmax.f32 %v945, 0.0
  %v1276 = vmax.f32 %v948, 0.0
  %v1277 = vmax.f32 %v953, 0.0
  %v1278 = vmax.f32 %v956, 0.0
  %v1279 = vmax.f32 %v961, 0.0
  %v1280 = vmax.f32 %v964, 0.0
  %v1281 = vmax.f32 %v969, 0.0
  %v1282 = vmax.f32 %v972, 0.0
  %v1283 = vmax.f32 %v977, 0.0
  %v1284 = vmax.f32 %v980, 0.0
  %v1285 = vmax.f32 %v985, 0.0
  %v1286 = vmax.f32 %v988, 0.0
  %v1287 = vmax.f32 %v993, 0.0
  %v1288 = vmax.f32 %v996, 0.0
  %v1289 = vmax.f32 %v1001, 0.0
  %v1290 = vmax.f32 %v1004, 0.0
  %v1291 = vmax.f32 %v1009, 0.0
  %v1292 = vmax.f32 %v1012, 0.0
  %v1293 = vmax.f32 %v1017, 0.0
  %v1294 = vmax.f32 %v1020, 0.0
  %v1295 = vmax.f32 %v1025, 0.0
  %v1296 = vmax.f32 %v1028, 0.0
  %v1297 = vmax.f32 %v1033, 0.0
  %v1298 = vmax.f32 %v1036, 0.0
  %v1299 = vmax.f32 %v1041, 0.0
  %v1300 = vmax.f32 %v1044, 0.0
  %v1301 = vmax.f32 %v1049, 0.0
  %v1302 = vmax.f32 %v1052, 0.0
  %v1303 = vmax.f32 %v1057, 0.0
  %v1304 = vmax.f32 %v1060, 0.0
  %v1305 = vmax.f32 %v1065, 0.0
  %v1306 = vmax.f32 %v1068, 0.0
  %v1307 = vmax.f32 %v1073, 0.0
  %v1308 = vmax.f32 %v1076, 0.0
  %v1309 = vmax.f32 %v1081, 0.0
  %v1310 = vmax.f32 %v1084, 0.0
  %v1311 = vmax.f32 %v1089, 0.0
  %v1312 = vmax.f32 %v1092, 0.0
  %v1313 = vmax.f32 %v1097, 0.0
  %v1314 = vmax.f32 %v1100, 0.0
  %v1315 = vmax.f32 %v1105, 0.0
  %v1316 = vmax.f32 %v1108, 0.0
  %v1317 = vmax.f32 %v1113, 0.0
  %v1318 = vmax.f32 %v1116, 0.0
  %v1319 = vmax.f32 %v1121, 0.0
  %v1320 = vmax.f32 %v1124, 0.0
  %v1321 = vmax.f32 %v1129, 0.0
  %v1322 = vmax.f32 %v1132, 0.0
  %v1323 = vmax.f32 %v1137, 0.0
  %v1324 = vmax.f32 %v1140, 0.0
  %v1325 = vmax.f32 %v1145, 0.0
  %v1326 = vmax.f32 %v1148, 0.0
  %v1327 = vmax.f32 %v1153, 0.0
  %v1328 = vmax.f32 %v1156, 0.0
  %v1329 = vmax.f32 %v1161, 0.0
  %v1330 = vmax.f32 %v1164, 0.0
  %v1331 = vmax.f32 %v1169, 0.0
  %v1332 = vmax.f32 %v1172, 0.0
  %v1333 = vmax.f32 %v1177, 0.0
  %v1334 = vmax.f32 %v1180, 0.0
  %v1335 = vmax.f32 %v1185, 0.0
  %v1336 = vmax.f32 %v1188, 0.0
  %v1337 = vmax.f32 %v1193, 0.0
  %v1338 = vmax.f32 %v1196, 0.0
  %v1339 = vmax.f32 %v1201, 0.0
  %v1340 = vmax.f32 %v1204, 0.0
  %v1341 = vmax.f32 %v1209, 0.0
  %v1342 = vmax.f32 %v1212, 0.0
  %v1343 = vld [vmem:[%s2] sm:$0x1]
  %v1345 = vlaneseq
  %v1346 = vshrl.u32 %v1345, 7
  %v1347 = vsub.s32 0, %v1346
  %v1348 = vrot.slane %v1343, %v1347
  %v1350 = vmul.f32 %v1215, %v1348
  %v1351 = vmul.f32 %v1216, %v1348
  %v1352 = vmul.f32 %v1217, %v1348
  %v1353 = vmul.f32 %v1218, %v1348
  %v1354 = vmul.f32 %v1219, %v1348
  %v1355 = vmul.f32 %v1220, %v1348
  %v1356 = vmul.f32 %v1221, %v1348
  %v1357 = vmul.f32 %v1222, %v1348
  %v1358 = vmul.f32 %v1223, %v1348
  %v1359 = vmul.f32 %v1224, %v1348
  %v1360 = vmul.f32 %v1225, %v1348
  %v1361 = vmul.f32 %v1226, %v1348
  %v1362 = vmul.f32 %v1227, %v1348
  %v1363 = vmul.f32 %v1228, %v1348
  %v1364 = vmul.f32 %v1229, %v1348
  %v1365 = vmul.f32 %v1230, %v1348
  %v1366 = vmul.f32 %v1231, %v1348
  %v1367 = vmul.f32 %v1232, %v1348
  %v1368 = vmul.f32 %v1233, %v1348
  %v1369 = vmul.f32 %v1234, %v1348
  %v1370 = vmul.f32 %v1235, %v1348
  %v1371 = vmul.f32 %v1236, %v1348
  %v1372 = vmul.f32 %v1237, %v1348
  %v1373 = vmul.f32 %v1238, %v1348
  %v1374 = vmul.f32 %v1239, %v1348
  %v1375 = vmul.f32 %v1240, %v1348
  %v1376 = vmul.f32 %v1241, %v1348
  %v1377 = vmul.f32 %v1242, %v1348
  %v1378 = vmul.f32 %v1243, %v1348
  %v1379 = vmul.f32 %v1244, %v1348
  %v1380 = vmul.f32 %v1245, %v1348
  %v1381 = vmul.f32 %v1246, %v1348
  %v1382 = vmul.f32 %v1247, %v1348
  %v1383 = vmul.f32 %v1248, %v1348
  %v1384 = vmul.f32 %v1249, %v1348
  %v1385 = vmul.f32 %v1250, %v1348
  %v1386 = vmul.f32 %v1251, %v1348
  %v1387 = vmul.f32 %v1252, %v1348
  %v1388 = vmul.f32 %v1253, %v1348
  %v1389 = vmul.f32 %v1254, %v1348
  %v1390 = vmul.f32 %v1255, %v1348
  %v1391 = vmul.f32 %v1256, %v1348
  %v1392 = vmul.f32 %v1257, %v1348
  %v1393 = vmul.f32 %v1258, %v1348
  %v1394 = vmul.f32 %v1259, %v1348
  %v1395 = vmul.f32 %v1260, %v1348
  %v1396 = vmul.f32 %v1261, %v1348
  %v1397 = vmul.f32 %v1262, %v1348
  %v1398 = vmul.f32 %v1263, %v1348
  %v1399 = vmul.f32 %v1264, %v1348
  %v1400 = vmul.f32 %v1265, %v1348
  %v1401 = vmul.f32 %v1266, %v1348
  %v1402 = vmul.f32 %v1267, %v1348
  %v1403 = vmul.f32 %v1268, %v1348
  %v1404 = vmul.f32 %v1269, %v1348
  %v1405 = vmul.f32 %v1270, %v1348
  %v1406 = vmul.f32 %v1271, %v1348
  %v1407 = vmul.f32 %v1272, %v1348
  %v1408 = vmul.f32 %v1273, %v1348
  %v1409 = vmul.f32 %v1274, %v1348
  %v1410 = vmul.f32 %v1275, %v1348
  %v1411 = vmul.f32 %v1276, %v1348
  %v1412 = vmul.f32 %v1277, %v1348
  %v1413 = vmul.f32 %v1278, %v1348
  %v1414 = vmul.f32 %v1279, %v1348
  %v1415 = vmul.f32 %v1280, %v1348
  %v1416 = vmul.f32 %v1281, %v1348
  %v1417 = vmul.f32 %v1282, %v1348
  %v1418 = vmul.f32 %v1283, %v1348
  %v1419 = vmul.f32 %v1284, %v1348
  %v1420 = vmul.f32 %v1285, %v1348
  %v1421 = vmul.f32 %v1286, %v1348
  %v1422 = vmul.f32 %v1287, %v1348
  %v1423 = vmul.f32 %v1288, %v1348
  %v1424 = vmul.f32 %v1289, %v1348
  %v1425 = vmul.f32 %v1290, %v1348
  %v1426 = vmul.f32 %v1291, %v1348
  %v1427 = vmul.f32 %v1292, %v1348
  %v1428 = vmul.f32 %v1293, %v1348
  %v1429 = vmul.f32 %v1294, %v1348
  %v1430 = vmul.f32 %v1295, %v1348
  %v1431 = vmul.f32 %v1296, %v1348
  %v1432 = vmul.f32 %v1297, %v1348
  %v1433 = vmul.f32 %v1298, %v1348
  %v1434 = vmul.f32 %v1299, %v1348
  %v1435 = vmul.f32 %v1300, %v1348
  %v1436 = vmul.f32 %v1301, %v1348
  %v1437 = vmul.f32 %v1302, %v1348
  %v1438 = vmul.f32 %v1303, %v1348
  %v1439 = vmul.f32 %v1304, %v1348
  %v1440 = vmul.f32 %v1305, %v1348
  %v1441 = vmul.f32 %v1306, %v1348
  %v1442 = vmul.f32 %v1307, %v1348
  %v1443 = vmul.f32 %v1308, %v1348
  %v1444 = vmul.f32 %v1309, %v1348
  %v1445 = vmul.f32 %v1310, %v1348
  %v1446 = vmul.f32 %v1311, %v1348
  %v1447 = vmul.f32 %v1312, %v1348
  %v1448 = vmul.f32 %v1313, %v1348
  %v1449 = vmul.f32 %v1314, %v1348
  %v1450 = vmul.f32 %v1315, %v1348
  %v1451 = vmul.f32 %v1316, %v1348
  %v1452 = vmul.f32 %v1317, %v1348
  %v1453 = vmul.f32 %v1318, %v1348
  %v1454 = vmul.f32 %v1319, %v1348
  %v1455 = vmul.f32 %v1320, %v1348
  %v1456 = vmul.f32 %v1321, %v1348
  %v1457 = vmul.f32 %v1322, %v1348
  %v1458 = vmul.f32 %v1323, %v1348
  %v1459 = vmul.f32 %v1324, %v1348
  %v1460 = vmul.f32 %v1325, %v1348
  %v1461 = vmul.f32 %v1326, %v1348
  %v1462 = vmul.f32 %v1327, %v1348
  %v1463 = vmul.f32 %v1328, %v1348
  %v1464 = vmul.f32 %v1329, %v1348
  %v1465 = vmul.f32 %v1330, %v1348
  %v1466 = vmul.f32 %v1331, %v1348
  %v1467 = vmul.f32 %v1332, %v1348
  %v1468 = vmul.f32 %v1333, %v1348
  %v1469 = vmul.f32 %v1334, %v1348
  %v1470 = vmul.f32 %v1335, %v1348
  %v1471 = vmul.f32 %v1336, %v1348
  %v1472 = vmul.f32 %v1337, %v1348
  %v1473 = vmul.f32 %v1338, %v1348
  %v1474 = vmul.f32 %v1339, %v1348
  %v1475 = vmul.f32 %v1340, %v1348
  %v1476 = vmul.f32 %v1341, %v1348
  %v1477 = vmul.f32 %v1342, %v1348
  %v1478 = vld [vmem:[%s3] sm:$0x1]
  %v1480 = vlaneseq
  %v1481 = vshrl.u32 %v1480, 7
  %v1482 = vsub.s32 0, %v1481
  %v1483 = vrot.slane %v1478, %v1482
  %v1485 = vadd.f32 %v1350, %v1483
  %v1486 = vadd.f32 %v1351, %v1483
  %v1487 = vadd.f32 %v1352, %v1483
  %v1488 = vadd.f32 %v1353, %v1483
  %v1489 = vadd.f32 %v1354, %v1483
  %v1490 = vadd.f32 %v1355, %v1483
  %v1491 = vadd.f32 %v1356, %v1483
  %v1492 = vadd.f32 %v1357, %v1483
  %v1493 = vadd.f32 %v1358, %v1483
  %v1494 = vadd.f32 %v1359, %v1483
  %v1495 = vadd.f32 %v1360, %v1483
  %v1496 = vadd.f32 %v1361, %v1483
  %v1497 = vadd.f32 %v1362, %v1483
  %v1498 = vadd.f32 %v1363, %v1483
  %v1499 = vadd.f32 %v1364, %v1483
  %v1500 = vadd.f32 %v1365, %v1483
  %v1501 = vadd.f32 %v1366, %v1483
  %v1502 = vadd.f32 %v1367, %v1483
  %v1503 = vadd.f32 %v1368, %v1483
  %v1504 = vadd.f32 %v1369, %v1483
  %v1505 = vadd.f32 %v1370, %v1483
  %v1506 = vadd.f32 %v1371, %v1483
  %v1507 = vadd.f32 %v1372, %v1483
  %v1508 = vadd.f32 %v1373, %v1483
  %v1509 = vadd.f32 %v1374, %v1483
  %v1510 = vadd.f32 %v1375, %v1483
  %v1511 = vadd.f32 %v1376, %v1483
  %v1512 = vadd.f32 %v1377, %v1483
  %v1513 = vadd.f32 %v1378, %v1483
  %v1514 = vadd.f32 %v1379, %v1483
  %v1515 = vadd.f32 %v1380, %v1483
  %v1516 = vadd.f32 %v1381, %v1483
  %v1517 = vadd.f32 %v1382, %v1483
  %v1518 = vadd.f32 %v1383, %v1483
  %v1519 = vadd.f32 %v1384, %v1483
  %v1520 = vadd.f32 %v1385, %v1483
  %v1521 = vadd.f32 %v1386, %v1483
  %v1522 = vadd.f32 %v1387, %v1483
  %v1523 = vadd.f32 %v1388, %v1483
  %v1524 = vadd.f32 %v1389, %v1483
  %v1525 = vadd.f32 %v1390, %v1483
  %v1526 = vadd.f32 %v1391, %v1483
  %v1527 = vadd.f32 %v1392, %v1483
  %v1528 = vadd.f32 %v1393, %v1483
  %v1529 = vadd.f32 %v1394, %v1483
  %v1530 = vadd.f32 %v1395, %v1483
  %v1531 = vadd.f32 %v1396, %v1483
  %v1532 = vadd.f32 %v1397, %v1483
  %v1533 = vadd.f32 %v1398, %v1483
  %v1534 = vadd.f32 %v1399, %v1483
  %v1535 = vadd.f32 %v1400, %v1483
  %v1536 = vadd.f32 %v1401, %v1483
  %v1537 = vadd.f32 %v1402, %v1483
  %v1538 = vadd.f32 %v1403, %v1483
  %v1539 = vadd.f32 %v1404, %v1483
  %v1540 = vadd.f32 %v1405, %v1483
  %v1541 = vadd.f32 %v1406, %v1483
  %v1542 = vadd.f32 %v1407, %v1483
  %v1543 = vadd.f32 %v1408, %v1483
  %v1544 = vadd.f32 %v1409, %v1483
  %v1545 = vadd.f32 %v1410, %v1483
  %v1546 = vadd.f32 %v1411, %v1483
  %v1547 = vadd.f32 %v1412, %v1483
  %v1548 = vadd.f32 %v1413, %v1483
  %v1549 = vadd.f32 %v1414, %v1483
  %v1550 = vadd.f32 %v1415, %v1483
  %v1551 = vadd.f32 %v1416, %v1483
  %v1552 = vadd.f32 %v1417, %v1483
  %v1553 = vadd.f32 %v1418, %v1483
  %v1554 = vadd.f32 %v1419, %v1483
  %v1555 = vadd.f32 %v1420, %v1483
  %v1556 = vadd.f32 %v1421, %v1483
  %v1557 = vadd.f32 %v1422, %v1483
  %v1558 = vadd.f32 %v1423, %v1483
  %v1559 = vadd.f32 %v1424, %v1483
  %v1560 = vadd.f32 %v1425, %v1483
  %v1561 = vadd.f32 %v1426, %v1483
  %v1562 = vadd.f32 %v1427, %v1483
  %v1563 = vadd.f32 %v1428, %v1483
  %v1564 = vadd.f32 %v1429, %v1483
  %v1565 = vadd.f32 %v1430, %v1483
  %v1566 = vadd.f32 %v1431, %v1483
  %v1567 = vadd.f32 %v1432, %v1483
  %v1568 = vadd.f32 %v1433, %v1483
  %v1569 = vadd.f32 %v1434, %v1483
  %v1570 = vadd.f32 %v1435, %v1483
  %v1571 = vadd.f32 %v1436, %v1483
  %v1572 = vadd.f32 %v1437, %v1483
  %v1573 = vadd.f32 %v1438, %v1483
  %v1574 = vadd.f32 %v1439, %v1483
  %v1575 = vadd.f32 %v1440, %v1483
  %v1576 = vadd.f32 %v1441, %v1483
  %v1577 = vadd.f32 %v1442, %v1483
  %v1578 = vadd.f32 %v1443, %v1483
  %v1579 = vadd.f32 %v1444, %v1483
  %v1580 = vadd.f32 %v1445, %v1483
  %v1581 = vadd.f32 %v1446, %v1483
  %v1582 = vadd.f32 %v1447, %v1483
  %v1583 = vadd.f32 %v1448, %v1483
  %v1584 = vadd.f32 %v1449, %v1483
  %v1585 = vadd.f32 %v1450, %v1483
  %v1586 = vadd.f32 %v1451, %v1483
  %v1587 = vadd.f32 %v1452, %v1483
  %v1588 = vadd.f32 %v1453, %v1483
  %v1589 = vadd.f32 %v1454, %v1483
  %v1590 = vadd.f32 %v1455, %v1483
  %v1591 = vadd.f32 %v1456, %v1483
  %v1592 = vadd.f32 %v1457, %v1483
  %v1593 = vadd.f32 %v1458, %v1483
  %v1594 = vadd.f32 %v1459, %v1483
  %v1595 = vadd.f32 %v1460, %v1483
  %v1596 = vadd.f32 %v1461, %v1483
  %v1597 = vadd.f32 %v1462, %v1483
  %v1598 = vadd.f32 %v1463, %v1483
  %v1599 = vadd.f32 %v1464, %v1483
  %v1600 = vadd.f32 %v1465, %v1483
  %v1601 = vadd.f32 %v1466, %v1483
  %v1602 = vadd.f32 %v1467, %v1483
  %v1603 = vadd.f32 %v1468, %v1483
  %v1604 = vadd.f32 %v1469, %v1483
  %v1605 = vadd.f32 %v1470, %v1483
  %v1606 = vadd.f32 %v1471, %v1483
  %v1607 = vadd.f32 %v1472, %v1483
  %v1608 = vadd.f32 %v1473, %v1483
  %v1609 = vadd.f32 %v1474, %v1483
  %v1610 = vadd.f32 %v1475, %v1483
  %v1611 = vadd.f32 %v1476, %v1483
  %v1612 = vadd.f32 %v1477, %v1483
  %v1613 = vmax.f32 %v1485, %v1549
  %v1614 = vmax.f32 %v1486, %v1550
  %v1615 = vmax.f32 %v1487, %v1551
  %v1616 = vmax.f32 %v1488, %v1552
  %v1617 = vmax.f32 %v1489, %v1553
  %v1618 = vmax.f32 %v1490, %v1554
  %v1619 = vmax.f32 %v1491, %v1555
  %v1620 = vmax.f32 %v1492, %v1556
  %v1621 = vmax.f32 %v1493, %v1557
  %v1622 = vmax.f32 %v1494, %v1558
  %v1623 = vmax.f32 %v1495, %v1559
  %v1624 = vmax.f32 %v1496, %v1560
  %v1625 = vmax.f32 %v1497, %v1561
  %v1626 = vmax.f32 %v1498, %v1562
  %v1627 = vmax.f32 %v1499, %v1563
  %v1628 = vmax.f32 %v1500, %v1564
  %v1629 = vmax.f32 %v1501, %v1565
  %v1630 = vmax.f32 %v1502, %v1566
  %v1631 = vmax.f32 %v1503, %v1567
  %v1632 = vmax.f32 %v1504, %v1568
  %v1633 = vmax.f32 %v1505, %v1569
  %v1634 = vmax.f32 %v1506, %v1570
  %v1635 = vmax.f32 %v1507, %v1571
  %v1636 = vmax.f32 %v1508, %v1572
  %v1637 = vmax.f32 %v1509, %v1573
  %v1638 = vmax.f32 %v1510, %v1574
  %v1639 = vmax.f32 %v1511, %v1575
  %v1640 = vmax.f32 %v1512, %v1576
  %v1641 = vmax.f32 %v1513, %v1577
  %v1642 = vmax.f32 %v1514, %v1578
  %v1643 = vmax.f32 %v1515, %v1579
  %v1644 = vmax.f32 %v1516, %v1580
  %v1645 = vmax.f32 %v1517, %v1581
  %v1646 = vmax.f32 %v1518, %v1582
  %v1647 = vmax.f32 %v1519, %v1583
  %v1648 = vmax.f32 %v1520, %v1584
  %v1649 = vmax.f32 %v1521, %v1585
  %v1650 = vmax.f32 %v1522, %v1586
  %v1651 = vmax.f32 %v1523, %v1587
  %v1652 = vmax.f32 %v1524, %v1588
  %v1653 = vmax.f32 %v1525, %v1589
  %v1654 = vmax.f32 %v1526, %v1590
  %v1655 = vmax.f32 %v1527, %v1591
  %v1656 = vmax.f32 %v1528, %v1592
  %v1657 = vmax.f32 %v1529, %v1593
  %v1658 = vmax.f32 %v1530, %v1594
  %v1659 = vmax.f32 %v1531, %v1595
  %v1660 = vmax.f32 %v1532, %v1596
  %v1661 = vmax.f32 %v1533, %v1597
  %v1662 = vmax.f32 %v1534, %v1598
  %v1663 = vmax.f32 %v1535, %v1599
  %v1664 = vmax.f32 %v1536, %v1600
  %v1665 = vmax.f32 %v1537, %v1601
  %v1666 = vmax.f32 %v1538, %v1602
  %v1667 = vmax.f32 %v1539, %v1603
  %v1668 = vmax.f32 %v1540, %v1604
  %v1669 = vmax.f32 %v1541, %v1605
  %v1670 = vmax.f32 %v1542, %v1606
  %v1671 = vmax.f32 %v1543, %v1607
  %v1672 = vmax.f32 %v1544, %v1608
  %v1673 = vmax.f32 %v1545, %v1609
  %v1674 = vmax.f32 %v1546, %v1610
  %v1675 = vmax.f32 %v1547, %v1611
  %v1676 = vmax.f32 %v1548, %v1612
  %v1677 = vmax.f32 %v1613, %v1645
  %v1678 = vmax.f32 %v1614, %v1646
  %v1679 = vmax.f32 %v1615, %v1647
  %v1680 = vmax.f32 %v1616, %v1648
  %v1681 = vmax.f32 %v1617, %v1649
  %v1682 = vmax.f32 %v1618, %v1650
  %v1683 = vmax.f32 %v1619, %v1651
  %v1684 = vmax.f32 %v1620, %v1652
  %v1685 = vmax.f32 %v1621, %v1653
  %v1686 = vmax.f32 %v1622, %v1654
  %v1687 = vmax.f32 %v1623, %v1655
  %v1688 = vmax.f32 %v1624, %v1656
  %v1689 = vmax.f32 %v1625, %v1657
  %v1690 = vmax.f32 %v1626, %v1658
  %v1691 = vmax.f32 %v1627, %v1659
  %v1692 = vmax.f32 %v1628, %v1660
  %v1693 = vmax.f32 %v1629, %v1661
  %v1694 = vmax.f32 %v1630, %v1662
  %v1695 = vmax.f32 %v1631, %v1663
  %v1696 = vmax.f32 %v1632, %v1664
  %v1697 = vmax.f32 %v1633, %v1665
  %v1698 = vmax.f32 %v1634, %v1666
  %v1699 = vmax.f32 %v1635, %v1667
  %v1700 = vmax.f32 %v1636, %v1668
  %v1701 = vmax.f32 %v1637, %v1669
  %v1702 = vmax.f32 %v1638, %v1670
  %v1703 = vmax.f32 %v1639, %v1671
  %v1704 = vmax.f32 %v1640, %v1672
  %v1705 = vmax.f32 %v1641, %v1673
  %v1706 = vmax.f32 %v1642, %v1674
  %v1707 = vmax.f32 %v1643, %v1675
  %v1708 = vmax.f32 %v1644, %v1676
  %vm1709 = vcmask 130048
  %1710 = vst.msk [vmem:[%s4] sm:$0xff] %vm1709, %v1677
  %1711 = vst.msk [vmem:[%s4 + $0x8] sm:$0xff] %vm1709, %v1678
  %1712 = vst.msk [vmem:[%s4 + $0x10] sm:$0xff] %vm1709, %v1679
  %1713 = vst.msk [vmem:[%s4 + $0x18] sm:$0xff] %vm1709, %v1680
  %1714 = vst.msk [vmem:[%s4 + $0x20] sm:$0xff] %vm1709, %v1681
  %1715 = vst.msk [vmem:[%s4 + $0x28] sm:$0xff] %vm1709, %v1682
  %1716 = vst.msk [vmem:[%s4 + $0x30] sm:$0xff] %vm1709, %v1683
  %1717 = vst.msk [vmem:[%s4 + $0x38] sm:$0xff] %vm1709, %v1684
  %1718 = vst.msk [vmem:[%s4 + $0x40] sm:$0xff] %vm1709, %v1685
  %1719 = vst.msk [vmem:[%s4 + $0x48] sm:$0xff] %vm1709, %v1686
  %1720 = vst.msk [vmem:[%s4 + $0x50] sm:$0xff] %vm1709, %v1687
  %1721 = vst.msk [vmem:[%s4 + $0x58] sm:$0xff] %vm1709, %v1688
  %1722 = vst.msk [vmem:[%s4 + $0x60] sm:$0xff] %vm1709, %v1689
  %1723 = vst.msk [vmem:[%s4 + $0x68] sm:$0xff] %vm1709, %v1690
  %1724 = vst.msk [vmem:[%s4 + $0x70] sm:$0xff] %vm1709, %v1691
  %1725 = vst.msk [vmem:[%s4 + $0x78] sm:$0xff] %vm1709, %v1692
  %1726 = vst.msk [vmem:[%s4 + $0x80] sm:$0xff] %vm1709, %v1693
  %1727 = vst.msk [vmem:[%s4 + $0x88] sm:$0xff] %vm1709, %v1694
  %1728 = vst.msk [vmem:[%s4 + $0x90] sm:$0xff] %vm1709, %v1695
  %1729 = vst.msk [vmem:[%s4 + $0x98] sm:$0xff] %vm1709, %v1696
  %1730 = vst.msk [vmem:[%s4 + $0xa0] sm:$0xff] %vm1709, %v1697
  %1731 = vst.msk [vmem:[%s4 + $0xa8] sm:$0xff] %vm1709, %v1698
  %1732 = vst.msk [vmem:[%s4 + $0xb0] sm:$0xff] %vm1709, %v1699
  %1733 = vst.msk [vmem:[%s4 + $0xb8] sm:$0xff] %vm1709, %v1700
  %1734 = vst.msk [vmem:[%s4 + $0xc0] sm:$0xff] %vm1709, %v1701
  %1735 = vst.msk [vmem:[%s4 + $0xc8] sm:$0xff] %vm1709, %v1702
  %1736 = vst.msk [vmem:[%s4 + $0xd0] sm:$0xff] %vm1709, %v1703
  %1737 = vst.msk [vmem:[%s4 + $0xd8] sm:$0xff] %vm1709, %v1704
  %1738 = vst.msk [vmem:[%s4 + $0xe0] sm:$0xff] %vm1709, %v1705
  %1739 = vst.msk [vmem:[%s4 + $0xe8] sm:$0xff] %vm1709, %v1706
  %1740 = vst.msk [vmem:[%s4 + $0xf0] sm:$0xff] %vm1709, %v1707
  %1741 = vst.msk [vmem:[%s4 + $0xf8] sm:$0xff] %vm1709, %v1708
  // Predicated region
  $region18: #{forward.2} parent=0 // pred_check
    _
  $region19: #{forward.2} parent=0 // pred_check_branch
    %1743 = sbr.rel (0) target = $region21
  $region20: #{forward.2} parent=0 // pred_region
    _
  $region21: #{forward.2} parent=0 // pred_fallthru
    _
  // Predicated region
  $region22: #{forward.2} parent=0 // pred_check
    _
  $region23: #{forward.2} parent=0 // pred_check_branch
    %1745 = sbr.rel (0) target = $region25
  $region24: #{forward.2} parent=0 // pred_region
    _
  $region25: #{forward.2} parent=0 // pred_fallthru
    _

// kernel: forward.3
$region0: #{forward.3}
  #allocation0 [shape = 'u32[]', space=smem, size = 0x4, offset = 0x4, fixed_abs, tag = 'smem constant byte address 0x4 - core index']
  #allocation1 [shape = 'u32[144,128]{1,0:T(1,128)}', space=vmem, size = 0x12000, scoped, tag = 'internal scratch']
  #allocation2 [shape = 'f32[16,256]{1,0:T(8,128)}', space=vmem, size = 0x4000, scoped, tag = 'scratch operand']
  #allocation3 [shape = 'f32[2,16,64]{2,1,0:T(8,128)}', space=vmem, size = 0x4000, scoped, tag = 'scratch operand']
  %s0 = inlined_call_operand.vmem [shape: bf16[256,145], index: 0, kind: input, shape index: {}]
  %s1 = inlined_call_operand.vmem [shape: bf16[145,32], index: 1, kind: input, shape index: {}]
  %s2 = inlined_call_operand.vmem [shape: f32[1,32], index: 2, kind: input, shape index: {}]
  %s3 = inlined_call_operand.vmem [shape: f32[1,32], index: 3, kind: input, shape index: {}]
  %s4 = inlined_call_operand.vmem [shape: bf16[4,32,48], index: 4, kind: input, shape index: {}]
  %s5 = inlined_call_operand.vmem [shape: f32[1,48], index: 5, kind: input, shape index: {}]
  %s6 = inlined_call_operand.vmem [shape: bf16[2,48,256], index: 6, kind: input, shape index: {}]
  %s7 = inlined_call_operand.vmem [shape: bf16[2,64,256], index: 7, kind: input, shape index: {}]
  %s8 = inlined_call_operand.vmem [shape: f32[2,1,256], index: 8, kind: input, shape index: {}]
  %s9 = inlined_call_operand.vmem [shape: bf16[128,11], index: 9, kind: input, shape index: {}]
  %s10 = inlined_call_operand.vmem [shape: f32[1,11], index: 10, kind: input, shape index: {}]
  %s11 = inlined_call_operand.vmem [shape: f32[16,11], index: 11, kind: output, shape index: {}]
  %s12 = sld [smem:[#allocation0]]
  $region54: #{forward.3} parent=0
    _
  %s14 = ssub.s32 1, %s12
  %s15 = scalar_select 0, %s14, %s12
  // Predicated region
  $region2: #{forward.3} parent=0 // pred_check
    _
  $region3: #{forward.3} parent=0 // pred_check_branch
    %17 = sbr.rel (0) target = $region5
  $region4: #{forward.3} parent=0 // pred_region
    _
  $region5: #{forward.3} parent=0 // pred_fallthru
    _
  // Predicated region
  $region6: #{forward.3} parent=0 // pred_check
    _
  $region7: #{forward.3} parent=0 // pred_check_branch
    %19 = sbr.rel (0) target = $region9
  $region8: #{forward.3} parent=0 // pred_region
    _
  $region9: #{forward.3} parent=0 // pred_fallthru
    _
  // Predicated region
  $region10: #{forward.3} parent=0 // pred_check
    _
  $region11: #{forward.3} parent=0 // pred_check_branch
    %21 = sbr.rel (0) target = $region13
  $region12: #{forward.3} parent=0 // pred_region
    _
  $region13: #{forward.3} parent=0 // pred_fallthru
    _
  // Predicated region
  $region14: #{forward.3} parent=0 // pred_check
    _
  $region15: #{forward.3} parent=0 // pred_check_branch
    %23 = sbr.rel (0) target = $region17
  $region16: #{forward.3} parent=0 // pred_region
    _
  $region17: #{forward.3} parent=0 // pred_fallthru
    _
  // Predicated region
  $region18: #{forward.3} parent=0 // pred_check
    _
  $region19: #{forward.3} parent=0 // pred_check_branch
    %25 = sbr.rel (0) target = $region21
  $region20: #{forward.3} parent=0 // pred_region
    _
  $region21: #{forward.3} parent=0 // pred_fallthru
    _
  // Predicated region
  $region22: #{forward.3} parent=0 // pred_check
    _
  $region23: #{forward.3} parent=0 // pred_check_branch
    %27 = sbr.rel (0) target = $region25
  $region24: #{forward.3} parent=0 // pred_region
    _
  $region25: #{forward.3} parent=0 // pred_fallthru
    _
  // Predicated region
  $region26: #{forward.3} parent=0 // pred_check
    _
  $region27: #{forward.3} parent=0 // pred_check_branch
    %29 = sbr.rel (0) target = $region29
  $region28: #{forward.3} parent=0 // pred_region
    _
  $region29: #{forward.3} parent=0 // pred_fallthru
    _
  // Predicated region
  $region30: #{forward.3} parent=0 // pred_check
    _
  $region31: #{forward.3} parent=0 // pred_check_branch
    %31 = sbr.rel (0) target = $region33
  $region32: #{forward.3} parent=0 // pred_region
    _
  $region33: #{forward.3} parent=0 // pred_fallthru
    _
  // Predicated region
  $region34: #{forward.3} parent=0 // pred_check
    _
  $region35: #{forward.3} parent=0 // pred_check_branch
    %33 = sbr.rel (0) target = $region37
  $region36: #{forward.3} parent=0 // pred_region
    _
  $region37: #{forward.3} parent=0 // pred_fallthru
    _
  // Predicated region
  $region38: #{forward.3} parent=0 // pred_check
    _
  $region39: #{forward.3} parent=0 // pred_check_branch
    %35 = sbr.rel (0) target = $region41
  $region40: #{forward.3} parent=0 // pred_region
    _
  $region41: #{forward.3} parent=0 // pred_fallthru
    _
  // Predicated region
  $region42: #{forward.3} parent=0 // pred_check
    _
  $region43: #{forward.3} parent=0 // pred_check_branch
    %37 = sbr.rel (0) target = $region45
  $region44: #{forward.3} parent=0 // pred_region
    _
  $region45: #{forward.3} parent=0 // pred_fallthru
    _
  %v39 = vld [vmem:[%s0] sm:$0xff]
  %v40 = vld [vmem:[%s0 + $0x8] sm:$0xff]
  %v41 = vld [vmem:[%s0 + $0x10] sm:$0xff]
  %v42 = vld [vmem:[%s0 + $0x18] sm:$0xff]
  %v43 = vld [vmem:[%s0 + $0x20] sm:$0xff]
  %v44 = vld [vmem:[%s0 + $0x28] sm:$0xff]
  %v45 = vld [vmem:[%s0 + $0x30] sm:$0xff]
  %v46 = vld [vmem:[%s0 + $0x38] sm:$0xff]
  %v47 = vld [vmem:[%s0 + $0x40] sm:$0xff]
  %v48 = vld [vmem:[%s0 + $0x48] sm:$0xff]
  %v49 = vld [vmem:[%s0 + $0x50] sm:$0xff]
  %v50 = vld [vmem:[%s0 + $0x58] sm:$0xff]
  %v51 = vld [vmem:[%s0 + $0x60] sm:$0xff]
  %v52 = vld [vmem:[%s0 + $0x68] sm:$0xff]
  %v53 = vld [vmem:[%s0 + $0x70] sm:$0xff]
  %v54 = vld [vmem:[%s0 + $0x78] sm:$0xff]
  %v55 = vld [vmem:[%s0 + $0x80] sm:$0xff]
  %v56 = vld [vmem:[%s0 + $0x88] sm:$0xff]
  %v57 = vld [vmem:[%s0 + $0x90] sm:$0xff]
  %v58 = vld [vmem:[%s0 + $0x98] sm:$0xff]
  %v59 = vld [vmem:[%s0 + $0xa0] sm:$0xff]
  %v60 = vld [vmem:[%s0 + $0xa8] sm:$0xff]
  %v61 = vld [vmem:[%s0 + $0xb0] sm:$0xff]
  %v62 = vld [vmem:[%s0 + $0xb8] sm:$0xff]
  %v63 = vld [vmem:[%s0 + $0xc0] sm:$0xff]
  %v64 = vld [vmem:[%s0 + $0xc8] sm:$0xff]
  %v65 = vld [vmem:[%s0 + $0xd0] sm:$0xff]
  %v66 = vld [vmem:[%s0 + $0xd8] sm:$0xff]
  %v67 = vld [vmem:[%s0 + $0xe0] sm:$0xff]
  %v68 = vld [vmem:[%s0 + $0xe8] sm:$0xff]
  %v69 = vld [vmem:[%s0 + $0xf0] sm:$0xff]
  %v70 = vld [vmem:[%s0 + $0xf8] sm:$0xff]
  %v71 = vld [vmem:[%s1] sm:$0xf]
  %v72 = vld [vmem:[%s1 + $0x4] sm:$0xf]
  %v73 = vld [vmem:[%s1 + $0x8] sm:$0xf]
  %v74 = vld [vmem:[%s1 + $0xc] sm:$0xf]
  %v75 = vld [vmem:[%s1 + $0x10] sm:$0xf]
  %v76 = vld [vmem:[%s1 + $0x14] sm:$0xf]
  %v77 = vld [vmem:[%s1 + $0x18] sm:$0xf]
  %v78 = vld [vmem:[%s1 + $0x1c] sm:$0xf]
  %v79 = vld [vmem:[%s1 + $0x20] sm:$0xf]
  %v80 = vld [vmem:[%s1 + $0x24] sm:$0xf]
  %v81 = vld [vmem:[%s1 + $0x28] sm:$0xf]
  %v82 = vld [vmem:[%s1 + $0x2c] sm:$0xf]
  %v83 = vld [vmem:[%s1 + $0x30] sm:$0xf]
  %v84 = vld [vmem:[%s1 + $0x34] sm:$0xf]
  %v85 = vld [vmem:[%s1 + $0x38] sm:$0xf]
  %v86 = vld [vmem:[%s1 + $0x3c] sm:$0xf]
  %v87 = vld [vmem:[%s1 + $0x40] sm:$0xf]
  %v88 = vld [vmem:[%s1 + $0x44] sm:$0xf]
  %v89 = vld [vmem:[%s1 + $0x48] sm:$0x1]
  %v122 = vunpack.c.l.b16 %v39
  %v123 = vunpack.c.h.b16 %v39
  %v124 = vunpack.c.l.b16 %v40
  %v125 = vunpack.c.h.b16 %v40
  %v126 = vunpack.c.l.b16 %v41
  %v127 = vunpack.c.h.b16 %v41
  %v128 = vunpack.c.l.b16 %v42
  %v129 = vunpack.c.h.b16 %v42
  %v130 = vunpack.c.l.b16 %v43
  %v131 = vunpack.c.h.b16 %v43
  %v132 = vunpack.c.l.b16 %v44
  %v133 = vunpack.c.h.b16 %v44
  %v134 = vunpack.c.l.b16 %v45
  %v135 = vunpack.c.h.b16 %v45
  %v136 = vunpack.c.l.b16 %v46
  %v137 = vunpack.c.h.b16 %v46
  %v138 = vunpack.c.l.b16 %v47
  %v139 = vunpack.c.h.b16 %v47
  %v140 = vunpack.c.l.b16 %v48
  %v141 = vunpack.c.h.b16 %v48
  %v142 = vunpack.c.l.b16 %v49
  %v143 = vunpack.c.h.b16 %v49
  %v144 = vunpack.c.l.b16 %v50
  %v145 = vunpack.c.h.b16 %v50
  %v146 = vunpack.c.l.b16 %v51
  %v147 = vunpack.c.h.b16 %v51
  %v148 = vunpack.c.l.b16 %v52
  %v149 = vunpack.c.h.b16 %v52
  %v150 = vunpack.c.l.b16 %v53
  %v151 = vunpack.c.h.b16 %v53
  %v152 = vunpack.c.l.b16 %v54
  %v153 = vunpack.c.h.b16 %v54
  %v154 = vunpack.c.l.b16 %v55
  %v155 = vunpack.c.h.b16 %v55
  %v156 = vunpack.c.l.b16 %v56
  %v157 = vunpack.c.h.b16 %v56
  %v158 = vunpack.c.l.b16 %v57
  %v159 = vunpack.c.h.b16 %v57
  %v160 = vunpack.c.l.b16 %v58
  %v161 = vunpack.c.h.b16 %v58
  %v162 = vunpack.c.l.b16 %v59
  %v163 = vunpack.c.h.b16 %v59
  %v164 = vunpack.c.l.b16 %v60
  %v165 = vunpack.c.h.b16 %v60
  %v166 = vunpack.c.l.b16 %v61
  %v167 = vunpack.c.h.b16 %v61
  %v168 = vunpack.c.l.b16 %v62
  %v169 = vunpack.c.h.b16 %v62
  %v170 = vunpack.c.l.b16 %v63
  %v171 = vunpack.c.h.b16 %v63
  %v172 = vunpack.c.l.b16 %v64
  %v173 = vunpack.c.h.b16 %v64
  %v174 = vunpack.c.l.b16 %v65
  %v175 = vunpack.c.h.b16 %v65
  %v176 = vunpack.c.l.b16 %v66
  %v177 = vunpack.c.h.b16 %v66
  %v178 = vunpack.c.l.b16 %v67
  %v179 = vunpack.c.h.b16 %v67
  %v180 = vunpack.c.l.b16 %v68
  %v181 = vunpack.c.h.b16 %v68
  %v182 = vunpack.c.l.b16 %v69
  %v183 = vunpack.c.h.b16 %v69
  %v184 = vunpack.c.l.b16 %v70
  %v185 = vunpack.c.h.b16 %v70
  %v186 = vpack.c.b16 %v124, %v122
  %v187 = vpack.c.b16 %v125, %v123
  %v188 = vpack.c.b16 %v128, %v126
  %v189 = vpack.c.b16 %v129, %v127
  %v190 = vpack.c.b16 %v132, %v130
  %v191 = vpack.c.b16 %v133, %v131
  %v192 = vpack.c.b16 %v136, %v134
  %v193 = vpack.c.b16 %v137, %v135
  %v194 = vpack.c.b16 %v140, %v138
  %v195 = vpack.c.b16 %v141, %v139
  %v196 = vpack.c.b16 %v144, %v142
  %v197 = vpack.c.b16 %v145, %v143
  %v198 = vpack.c.b16 %v148, %v146
  %v199 = vpack.c.b16 %v149, %v147
  %v200 = vpack.c.b16 %v152, %v150
  %v201 = vpack.c.b16 %v153, %v151
  %v202 = vpack.c.b16 %v156, %v154
  %v203 = vpack.c.b16 %v157, %v155
  %v204 = vpack.c.b16 %v160, %v158
  %v205 = vpack.c.b16 %v161, %v159
  %v206 = vpack.c.b16 %v164, %v162
  %v207 = vpack.c.b16 %v165, %v163
  %v208 = vpack.c.b16 %v168, %v166
  %v209 = vpack.c.b16 %v169, %v167
  %v210 = vpack.c.b16 %v172, %v170
  %v211 = vpack.c.b16 %v173, %v171
  %v212 = vpack.c.b16 %v176, %v174
  %v213 = vpack.c.b16 %v177, %v175
  %v214 = vpack.c.b16 %v180, %v178
  %v215 = vpack.c.b16 %v181, %v179
  %v216 = vpack.c.b16 %v184, %v182
  %v217 = vpack.c.b16 %v185, %v183
  %v253 = vunpack.c.l.b16 %v71
  %v254 = vunpack.c.l.b16 %v72
  %v255 = vunpack.c.l.b16 %v73
  %v256 = vunpack.c.l.b16 %v74
  %v257 = vunpack.c.l.b16 %v75
  %v258 = vunpack.c.l.b16 %v76
  %v259 = vunpack.c.l.b16 %v77
  %v260 = vunpack.c.l.b16 %v78
  %v261 = vunpack.c.l.b16 %v79
  %v262 = vunpack.c.l.b16 %v80
  %v263 = vunpack.c.l.b16 %v81
  %v264 = vunpack.c.l.b16 %v82
  %v265 = vunpack.c.l.b16 %v83
  %v266 = vunpack.c.l.b16 %v84
  %v267 = vunpack.c.l.b16 %v85
  %v268 = vunpack.c.l.b16 %v86
  %v269 = vunpack.c.l.b16 %v87
  %v270 = vunpack.c.l.b16 %v88
  %v271 = vunpack.c.l.b16 %v89
  %v272 = vpack.c.b16 %v254, %v253
  %v273 = vpack.c.b16 %v256, %v255
  %v274 = vpack.c.b16 %v258, %v257
  %v275 = vpack.c.b16 %v260, %v259
  %v276 = vpack.c.b16 %v262, %v261
  %v277 = vpack.c.b16 %v264, %v263
  %v278 = vpack.c.b16 %v266, %v265
  %v279 = vpack.c.b16 %v268, %v267
  %v280 = vpack.c.b16 %v270, %v269
  %v281 = vpack.c.b16 %v271, %v271
  %vm291 = vcmask 138240
  %v293 = vsel %vm291, %v187, 0
  %v296 = vsel %vm291, %v189, 0
  %v299 = vsel %vm291, %v191, 0
  %v302 = vsel %vm291, %v193, 0
  %v305 = vsel %vm291, %v195, 0
  %v308 = vsel %vm291, %v197, 0
  %v311 = vsel %vm291, %v199, 0
  %v314 = vsel %vm291, %v201, 0
  %v317 = vsel %vm291, %v203, 0
  %v320 = vsel %vm291, %v205, 0
  %v323 = vsel %vm291, %v207, 0
  %v326 = vsel %vm291, %v209, 0
  %v329 = vsel %vm291, %v211, 0
  %v332 = vsel %vm291, %v213, 0
  %v335 = vsel %vm291, %v215, 0
  %v338 = vsel %vm291, %v217, 0
  %vm340 = vcmask 1040384
  %v341 = vsel 0, 4294967295, 65535
  %v342 = vsel %vm340, %v341, 0
  %v344 = vand.u32 %v281, %v342
  %346 = vmatprep.subr.bf16.mxu0 0
  %347 = vmatpush1.bf16.msra.mxu0 %v279
  %348 = vmatprep.subr.bf16.mxu0 0
  %349 = vmatpush1.bf16.msra.mxu0 %v278
  %350 = vmatprep.subr.bf16.mxu0 0
  %351 = vmatpush1.bf16.msra.mxu0 %v277
  %352 = vmatprep.subr.bf16.mxu0 0
  %353 = vmatpush1.bf16.msra.mxu0 %v276
  %354 = vmatprep.subr.bf16.mxu0 0
  %355 = vmatpush1.bf16.msra.mxu0 %v275
  %356 = vmatprep.subr.bf16.mxu0 0
  %357 = vmatpush1.bf16.msra.mxu0 %v274
  %358 = vmatprep.subr.bf16.mxu0 0
  %359 = vmatpush1.bf16.msra.mxu0 %v273
  %360 = vmatprep.subr.bf16.mxu0 0
  %361 = vmatpush1.bf16.msra.mxu0 %v272
  %362 = vmatprep.subr.bf16.mxu0 0
  %363 = vmatpush2.bf16.msra.mxu0 0
  %364 = vmatprep.subr.bf16.mxu0 0
  %365 = vmatpush2.bf16.msra.mxu0 0
  %366 = vmatprep.subr.bf16.mxu0 0
  %367 = vmatpush2.bf16.msra.mxu0 0
  %368 = vmatprep.subr.bf16.mxu0 0
  %369 = vmatpush2.bf16.msra.mxu0 0
  %370 = vmatprep.subr.bf16.mxu0 0
  %371 = vmatpush2.bf16.msra.mxu0 0
  %372 = vmatprep.subr.bf16.mxu0 0
  %373 = vmatpush2.bf16.msra.mxu0 0
  %374 = vmatprep.subr.bf16.mxu0 0
  %375 = vmatpush2.bf16.msra.mxu0 %v344
  %376 = vmatprep.subr.bf16.mxu0 0
  %377 = vmatpush2.bf16.msra.mxu0 %v280
  %378 = vmatprep.mubr.bf16.mxu0 %v293
  %379 = vmatmul.mubr.bf16.gmra.mxu0 %v186
  %v380 = vpop.f32.mrf.mxu0
  %v381 = vadd.f32 0.0, %v380
  %v382 = vpop.f32.mrf.mxu0
  %v383 = vpop.f32.mrf.mxu0
  %v384 = vadd.f32 0.0, %v383
  %v385 = vpop.f32.mrf.mxu0
  %386 = vmatprep.mubr.bf16.mxu0 %v296
  %387 = vmatmul.mubr.bf16.gmra.mxu0 %v188
  %v388 = vpop.f32.mrf.mxu0
  %v389 = vadd.f32 0.0, %v388
  %v390 = vpop.f32.mrf.mxu0
  %v391 = vpop.f32.mrf.mxu0
  %v392 = vadd.f32 0.0, %v391
  %v393 = vpop.f32.mrf.mxu0
  %394 = vmatprep.mubr.bf16.mxu0 %v299
  %395 = vmatmul.mubr.bf16.gmra.mxu0 %v190
  %v396 = vpop.f32.mrf.mxu0
  %v397 = vadd.f32 0.0, %v396
  %v398 = vpop.f32.mrf.mxu0
  %v399 = vpop.f32.mrf.mxu0
  %v400 = vadd.f32 0.0, %v399
  %v401 = vpop.f32.mrf.mxu0
  %402 = vmatprep.mubr.bf16.mxu0 %v302
  %403 = vmatmul.mubr.bf16.gmra.mxu0 %v192
  %v404 = vpop.f32.mrf.mxu0
  %v405 = vadd.f32 0.0, %v404
  %v406 = vpop.f32.mrf.mxu0
  %v407 = vpop.f32.mrf.mxu0
  %v408 = vadd.f32 0.0, %v407
  %v409 = vpop.f32.mrf.mxu0
  %410 = vmatprep.mubr.bf16.mxu0 %v305
  %411 = vmatmul.mubr.bf16.gmra.mxu0 %v194
  %v412 = vpop.f32.mrf.mxu0
  %v413 = vadd.f32 0.0, %v412
  %v414 = vpop.f32.mrf.mxu0
  %v415 = vpop.f32.mrf.mxu0
  %v416 = vadd.f32 0.0, %v415
  %v417 = vpop.f32.mrf.mxu0
  %418 = vmatprep.mubr.bf16.mxu0 %v308
  %419 = vmatmul.mubr.bf16.gmra.mxu0 %v196
  %v420 = vpop.f32.mrf.mxu0
  %v421 = vadd.f32 0.0, %v420
  %v422 = vpop.f32.mrf.mxu0
  %v423 = vpop.f32.mrf.mxu0
  %v424 = vadd.f32 0.0, %v423
  %v425 = vpop.f32.mrf.mxu0
  %426 = vmatprep.mubr.bf16.mxu0 %v311
  %427 = vmatmul.mubr.bf16.gmra.mxu0 %v198
  %v428 = vpop.f32.mrf.mxu0
  %v429 = vadd.f32 0.0, %v428
  %v430 = vpop.f32.mrf.mxu0
  %v431 = vpop.f32.mrf.mxu0
  %v432 = vadd.f32 0.0, %v431
  %v433 = vpop.f32.mrf.mxu0
  %434 = vmatprep.mubr.bf16.mxu0 %v314
  %435 = vmatmul.mubr.bf16.gmra.mxu0 %v200
  %v436 = vpop.f32.mrf.mxu0
  %v437 = vadd.f32 0.0, %v436
  %v438 = vpop.f32.mrf.mxu0
  %v439 = vpop.f32.mrf.mxu0
  %v440 = vadd.f32 0.0, %v439
  %v441 = vpop.f32.mrf.mxu0
  %442 = vmatprep.mubr.bf16.mxu0 %v317
  %443 = vmatmul.mubr.bf16.gmra.mxu0 %v202
  %v444 = vpop.f32.mrf.mxu0
  %v445 = vadd.f32 0.0, %v444
  %v446 = vpop.f32.mrf.mxu0
  %v447 = vpop.f32.mrf.mxu0
  %v448 = vadd.f32 0.0, %v447
  %v449 = vpop.f32.mrf.mxu0
  %450 = vmatprep.mubr.bf16.mxu0 %v320
  %451 = vmatmul.mubr.bf16.gmra.mxu0 %v204
  %v452 = vpop.f32.mrf.mxu0
  %v453 = vadd.f32 0.0, %v452
  %v454 = vpop.f32.mrf.mxu0
  %v455 = vpop.f32.mrf.mxu0
  %v456 = vadd.f32 0.0, %v455
  %v457 = vpop.f32.mrf.mxu0
  %458 = vmatprep.mubr.bf16.mxu0 %v323
  %459 = vmatmul.mubr.bf16.gmra.mxu0 %v206
  %v460 = vpop.f32.mrf.mxu0
  %v461 = vadd.f32 0.0, %v460
  %v462 = vpop.f32.mrf.mxu0
  %v463 = vpop.f32.mrf.mxu0
  %v464 = vadd.f32 0.0, %v463
  %v465 = vpop.f32.mrf.mxu0
  %466 = vmatprep.mubr.bf16.mxu0 %v326
  %467 = vmatmul.mubr.bf16.gmra.mxu0 %v208
  %v468 = vpop.f32.mrf.mxu0
  %v469 = vadd.f32 0.0, %v468
  %v470 = vpop.f32.mrf.mxu0
  %v471 = vpop.f32.mrf.mxu0
  %v472 = vadd.f32 0.0, %v471
  %v473 = vpop.f32.mrf.mxu0
  %474 = vmatprep.mubr.bf16.mxu0 %v329
  %475 = vmatmul.mubr.bf16.gmra.mxu0 %v210
  %v476 = vpop.f32.mrf.mxu0
  %v477 = vadd.f32 0.0, %v476
  %v478 = vpop.f32.mrf.mxu0
  %v479 = vpop.f32.mrf.mxu0
  %v480 = vadd.f32 0.0, %v479
  %v481 = vpop.f32.mrf.mxu0
  %482 = vmatprep.mubr.bf16.mxu0 %v332
  %483 = vmatmul.mubr.bf16.gmra.mxu0 %v212
  %v484 = vpop.f32.mrf.mxu0
  %v485 = vadd.f32 0.0, %v484
  %v486 = vpop.f32.mrf.mxu0
  %v487 = vpop.f32.mrf.mxu0
  %v488 = vadd.f32 0.0, %v487
  %v489 = vpop.f32.mrf.mxu0
  %490 = vmatprep.mubr.bf16.mxu0 %v335
  %491 = vmatmul.mubr.bf16.gmra.mxu0 %v214
  %v492 = vpop.f32.mrf.mxu0
  %v493 = vadd.f32 0.0, %v492
  %v494 = vpop.f32.mrf.mxu0
  %v495 = vpop.f32.mrf.mxu0
  %v496 = vadd.f32 0.0, %v495
  %v497 = vpop.f32.mrf.mxu0
  %498 = vmatprep.mubr.bf16.mxu0 %v338
  %499 = vmatmul.mubr.bf16.gmra.mxu0 %v216
  %v500 = vpop.f32.mrf.mxu0
  %v501 = vadd.f32 0.0, %v500
  %v502 = vpop.f32.mrf.mxu0
  %v503 = vpop.f32.mrf.mxu0
  %v504 = vadd.f32 0.0, %v503
  %v505 = vpop.f32.mrf.mxu0
  %506 = vdwg.mxu0
  %v507 = vmax.f32 %v381, 0.0
  %v508 = vmax.f32 %v384, 0.0
  %v509 = vmax.f32 %v389, 0.0
  %v510 = vmax.f32 %v392, 0.0
  %v511 = vmax.f32 %v397, 0.0
  %v512 = vmax.f32 %v400, 0.0
  %v513 = vmax.f32 %v405, 0.0
  %v514 = vmax.f32 %v408, 0.0
  %v515 = vmax.f32 %v413, 0.0
  %v516 = vmax.f32 %v416, 0.0
  %v517 = vmax.f32 %v421, 0.0
  %v518 = vmax.f32 %v424, 0.0
  %v519 = vmax.f32 %v429, 0.0
  %v520 = vmax.f32 %v432, 0.0
  %v521 = vmax.f32 %v437, 0.0
  %v522 = vmax.f32 %v440, 0.0
  %v523 = vmax.f32 %v445, 0.0
  %v524 = vmax.f32 %v448, 0.0
  %v525 = vmax.f32 %v453, 0.0
  %v526 = vmax.f32 %v456, 0.0
  %v527 = vmax.f32 %v461, 0.0
  %v528 = vmax.f32 %v464, 0.0
  %v529 = vmax.f32 %v469, 0.0
  %v530 = vmax.f32 %v472, 0.0
  %v531 = vmax.f32 %v477, 0.0
  %v532 = vmax.f32 %v480, 0.0
  %v533 = vmax.f32 %v485, 0.0
  %v534 = vmax.f32 %v488, 0.0
  %v535 = vmax.f32 %v493, 0.0
  %v536 = vmax.f32 %v496, 0.0
  %v537 = vmax.f32 %v501, 0.0
  %v538 = vmax.f32 %v504, 0.0
  %v539 = vld [vmem:[%s2] sm:$0x1]
  %v541 = vlaneseq
  %v542 = vshrl.u32 %v541, 7
  %v543 = vsub.s32 0, %v542
  %v544 = vrot.slane %v539, %v543
  %v546 = vmul.f32 %v507, %v544
  %v547 = vmul.f32 %v508, %v544
  %v548 = vmul.f32 %v509, %v544
  %v549 = vmul.f32 %v510, %v544
  %v550 = vmul.f32 %v511, %v544
  %v551 = vmul.f32 %v512, %v544
  %v552 = vmul.f32 %v513, %v544
  %v553 = vmul.f32 %v514, %v544
  %v554 = vmul.f32 %v515, %v544
  %v555 = vmul.f32 %v516, %v544
  %v556 = vmul.f32 %v517, %v544
  %v557 = vmul.f32 %v518, %v544
  %v558 = vmul.f32 %v519, %v544
  %v559 = vmul.f32 %v520, %v544
  %v560 = vmul.f32 %v521, %v544
  %v561 = vmul.f32 %v522, %v544
  %v562 = vmul.f32 %v523, %v544
  %v563 = vmul.f32 %v524, %v544
  %v564 = vmul.f32 %v525, %v544
  %v565 = vmul.f32 %v526, %v544
  %v566 = vmul.f32 %v527, %v544
  %v567 = vmul.f32 %v528, %v544
  %v568 = vmul.f32 %v529, %v544
  %v569 = vmul.f32 %v530, %v544
  %v570 = vmul.f32 %v531, %v544
  %v571 = vmul.f32 %v532, %v544
  %v572 = vmul.f32 %v533, %v544
  %v573 = vmul.f32 %v534, %v544
  %v574 = vmul.f32 %v535, %v544
  %v575 = vmul.f32 %v536, %v544
  %v576 = vmul.f32 %v537, %v544
  %v577 = vmul.f32 %v538, %v544
  %v578 = vld [vmem:[%s3] sm:$0x1]
  %v580 = vlaneseq
  %v581 = vshrl.u32 %v580, 7
  %v582 = vsub.s32 0, %v581
  %v583 = vrot.slane %v578, %v582
  %v585 = vadd.f32 %v546, %v583
  %v586 = vadd.f32 %v547, %v583
  %v587 = vadd.f32 %v548, %v583
  %v588 = vadd.f32 %v549, %v583
  %v589 = vadd.f32 %v550, %v583
  %v590 = vadd.f32 %v551, %v583
  %v591 = vadd.f32 %v552, %v583
  %v592 = vadd.f32 %v553, %v583
  %v593 = vadd.f32 %v554, %v583
  %v594 = vadd.f32 %v555, %v583
  %v595 = vadd.f32 %v556, %v583
  %v596 = vadd.f32 %v557, %v583
  %v597 = vadd.f32 %v558, %v583
  %v598 = vadd.f32 %v559, %v583
  %v599 = vadd.f32 %v560, %v583
  %v600 = vadd.f32 %v561, %v583
  %v601 = vadd.f32 %v562, %v583
  %v602 = vadd.f32 %v563, %v583
  %v603 = vadd.f32 %v564, %v583
  %v604 = vadd.f32 %v565, %v583
  %v605 = vadd.f32 %v566, %v583
  %v606 = vadd.f32 %v567, %v583
  %v607 = vadd.f32 %v568, %v583
  %v608 = vadd.f32 %v569, %v583
  %v609 = vadd.f32 %v570, %v583
  %v610 = vadd.f32 %v571, %v583
  %v611 = vadd.f32 %v572, %v583
  %v612 = vadd.f32 %v573, %v583
  %v613 = vadd.f32 %v574, %v583
  %v614 = vadd.f32 %v575, %v583
  %v615 = vadd.f32 %v576, %v583
  %v616 = vadd.f32 %v577, %v583
  %v617 = vmax.f32 %v585, %v601
  %v618 = vmax.f32 %v586, %v602
  %v619 = vmax.f32 %v587, %v603
  %v620 = vmax.f32 %v588, %v604
  %v621 = vmax.f32 %v589, %v605
  %v622 = vmax.f32 %v590, %v606
  %v623 = vmax.f32 %v591, %v607
  %v624 = vmax.f32 %v592, %v608
  %v625 = vmax.f32 %v593, %v609
  %v626 = vmax.f32 %v594, %v610
  %v627 = vmax.f32 %v595, %v611
  %v628 = vmax.f32 %v596, %v612
  %v629 = vmax.f32 %v597, %v613
  %v630 = vmax.f32 %v598, %v614
  %v631 = vmax.f32 %v599, %v615
  %v632 = vmax.f32 %v600, %v616
  %v633 = vmax.f32 %v617, %v625
  %v634 = vmax.f32 %v618, %v626
  %v635 = vmax.f32 %v619, %v627
  %v636 = vmax.f32 %v620, %v628
  %v637 = vmax.f32 %v621, %v629
  %v638 = vmax.f32 %v622, %v630
  %v639 = vmax.f32 %v623, %v631
  %v640 = vmax.f32 %v624, %v632
  %v641 = vpack.c.bf16 %v634, %v633
  %v642 = vld [vmem:[%s4] sm:$0xf]
  %v643 = vld [vmem:[%s4 + $0x4] sm:$0xf]
  %v644 = vld [vmem:[%s4 + $0x8] sm:$0xf]
  %v645 = vld [vmem:[%s4 + $0xc] sm:$0xf]
  %v646 = vpack.c.bf16 %v636, %v635
  %s647 = scalar_lea.vmem %s4, 16
  %v648 = vld [vmem:[%s647] sm:$0xf]
  %v649 = vld [vmem:[%s647 + $0x4] sm:$0xf]
  %v650 = vld [vmem:[%s647 + $0x8] sm:$0xf]
  %v651 = vld [vmem:[%s647 + $0xc] sm:$0xf]
  %v656 = vunpack.c.l.b16 %v648
  %v657 = vunpack.c.l.b16 %v649
  %v658 = vunpack.c.l.b16 %v650
  %v659 = vunpack.c.l.b16 %v651
  %v660 = vpack.c.b16 %v657, %v656
  %v661 = vpack.c.b16 %v659, %v658
  %vm664 = vcmask 261120
  %v666 = vsel %vm664, %v646, 0
  %668 = vmatprep.subr.bf16.mxu0 0
  %669 = vmatpush1.bf16.msra.mxu0 0
  %670 = vmatprep.subr.bf16.mxu0 0
  %671 = vmatpush1.bf16.msra.mxu0 0
  %672 = vmatprep.subr.bf16.mxu0 0
  %673 = vmatpush1.bf16.msra.mxu0 0
  %674 = vmatprep.subr.bf16.mxu0 0
  %675 = vmatpush1.bf16.msra.mxu0 0
  %676 = vmatprep.subr.bf16.mxu0 0
  %677 = vmatpush1.bf16.msra.mxu0 0
  %678 = vmatprep.subr.bf16.mxu0 0
  %679 = vmatpush1.bf16.msra.mxu0 0
  %680 = vmatprep.subr.bf16.mxu0 0
  %681 = vmatpush1.bf16.msra.mxu0 %v661
  %682 = vmatprep.subr.bf16.mxu0 0
  %683 = vmatpush1.bf16.msra.mxu0 %v660
  %684 = vmatprep.subr.bf16.mxu0 0
  %685 = vmatpush2.bf16.msra.mxu0 0
  %686 = vmatprep.subr.bf16.mxu0 0
  %687 = vmatpush2.bf16.msra.mxu0 0
  %688 = vmatprep.subr.bf16.mxu0 0
  %689 = vmatpush2.bf16.msra.mxu0 0
  %690 = vmatprep.subr.bf16.mxu0 0
  %691 = vmatpush2.bf16.msra.mxu0 0
  %692 = vmatprep.subr.bf16.mxu0 0
  %693 = vmatpush2.bf16.msra.mxu0 0
  %694 = vmatprep.subr.bf16.mxu0 0
  %695 = vmatpush2.bf16.msra.mxu0 0
  %696 = vmatprep.subr.bf16.mxu0 0
  %697 = vmatpush2.bf16.msra.mxu0 0
  %698 = vmatprep.subr.bf16.mxu0 0
  %699 = vmatpush2.bf16.msra.mxu0 0
  %700 = vmatprep.mubr.bf16.mxu0 0
  %701 = vmatmul.mubr.bf16.gmra.mxu0 %v666
  %v702 = vpop.f32.mrf.mxu0
  %v703 = vadd.f32 0.0, %v702
  %v704 = vpop.f32.mrf.mxu0
  %v705 = vpop.f32.mrf.mxu0
  %v706 = vadd.f32 0.0, %v705
  %v707 = vpop.f32.mrf.mxu0
  %708 = vdwg.mxu0
  %v713 = vunpack.c.l.b16 %v642
  %v714 = vunpack.c.l.b16 %v643
  %v715 = vunpack.c.l.b16 %v644
  %v716 = vunpack.c.l.b16 %v645
  %v717 = vpack.c.b16 %v714, %v713
  %v718 = vpack.c.b16 %v716, %v715
  %v722 = vsel %vm664, %v641, 0
  %724 = vmatprep.subr.bf16.mxu0 0
  %725 = vmatpush1.bf16.msra.mxu0 0
  %726 = vmatprep.subr.bf16.mxu0 0
  %727 = vmatpush1.bf16.msra.mxu0 0
  %728 = vmatprep.subr.bf16.mxu0 0
  %729 = vmatpush1.bf16.msra.mxu0 0
  %730 = vmatprep.subr.bf16.mxu0 0
  %731 = vmatpush1.bf16.msra.mxu0 0
  %732 = vmatprep.subr.bf16.mxu0 0
  %733 = vmatpush1.bf16.msra.mxu0 0
  %734 = vmatprep.subr.bf16.mxu0 0
  %735 = vmatpush1.bf16.msra.mxu0 0
  %736 = vmatprep.subr.bf16.mxu0 0
  %737 = vmatpush1.bf16.msra.mxu0 %v718
  %738 = vmatprep.subr.bf16.mxu0 0
  %739 = vmatpush1.bf16.msra.mxu0 %v717
  %740 = vmatprep.subr.bf16.mxu0 0
  %741 = vmatpush2.bf16.msra.mxu0 0
  %742 = vmatprep.subr.bf16.mxu0 0
  %743 = vmatpush2.bf16.msra.mxu0 0
  %744 = vmatprep.subr.bf16.mxu0 0
  %745 = vmatpush2.bf16.msra.mxu0 0
  %746 = vmatprep.subr.bf16.mxu0 0
  %747 = vmatpush2.bf16.msra.mxu0 0
  %748 = vmatprep.subr.bf16.mxu0 0
  %749 = vmatpush2.bf16.msra.mxu0 0
  %750 = vmatprep.subr.bf16.mxu0 0
  %751 = vmatpush2.bf16.msra.mxu0 0
  %752 = vmatprep.subr.bf16.mxu0 0
  %753 = vmatpush2.bf16.msra.mxu0 0
  %754 = vmatprep.subr.bf16.mxu0 0
  %755 = vmatpush2.bf16.msra.mxu0 0
  %756 = vmatprep.mubr.bf16.mxu0 0
  %757 = vmatmul.mubr.bf16.gmra.mxu0 %v722
  %v758 = vpop.f32.mrf.mxu0
  %v759 = vadd.f32 %v703, %v758
  %v760 = vpop.f32.mrf.mxu0
  %v761 = vpop.f32.mrf.mxu0
  %v762 = vadd.f32 %v706, %v761
  %v763 = vpop.f32.mrf.mxu0
  %764 = vdwg.mxu0
  %v765 = vpack.c.bf16 %v638, %v637
  %s766 = scalar_lea.vmem %s4, 32
  %v767 = vld [vmem:[%s766] sm:$0xf]
  %v768 = vld [vmem:[%s766 + $0x4] sm:$0xf]
  %v769 = vld [vmem:[%s766 + $0x8] sm:$0xf]
  %v770 = vld [vmem:[%s766 + $0xc] sm:$0xf]
  %v775 = vunpack.c.l.b16 %v767
  %v776 = vunpack.c.l.b16 %v768
  %v777 = vunpack.c.l.b16 %v769
  %v778 = vunpack.c.l.b16 %v770
  %v779 = vpack.c.b16 %v776, %v775
  %v780 = vpack.c.b16 %v778, %v777
  %v784 = vsel %vm664, %v765, 0
  %786 = vmatprep.subr.bf16.mxu0 0
  %787 = vmatpush1.bf16.msra.mxu0 0
  %788 = vmatprep.subr.bf16.mxu0 0
  %789 = vmatpush1.bf16.msra.mxu0 0
  %790 = vmatprep.subr.bf16.mxu0 0
  %791 = vmatpush1.bf16.msra.mxu0 0
  %792 = vmatprep.subr.bf16.mxu0 0
  %793 = vmatpush1.bf16.msra.mxu0 0
  %794 = vmatprep.subr.bf16.mxu0 0
  %795 = vmatpush1.bf16.msra.mxu0 0
  %796 = vmatprep.subr.bf16.mxu0 0
  %797 = vmatpush1.bf16.msra.mxu0 0
  %798 = vmatprep.subr.bf16.mxu0 0
  %799 = vmatpush1.bf16.msra.mxu0 %v780
  %800 = vmatprep.subr.bf16.mxu0 0
  %801 = vmatpush1.bf16.msra.mxu0 %v779
  %802 = vmatprep.subr.bf16.mxu0 0
  %803 = vmatpush2.bf16.msra.mxu0 0
  %804 = vmatprep.subr.bf16.mxu0 0
  %805 = vmatpush2.bf16.msra.mxu0 0
  %806 = vmatprep.subr.bf16.mxu0 0
  %807 = vmatpush2.bf16.msra.mxu0 0
  %808 = vmatprep.subr.bf16.mxu0 0
  %809 = vmatpush2.bf16.msra.mxu0 0
  %810 = vmatprep.subr.bf16.mxu0 0
  %811 = vmatpush2.bf16.msra.mxu0 0
  %812 = vmatprep.subr.bf16.mxu0 0
  %813 = vmatpush2.bf16.msra.mxu0 0
  %814 = vmatprep.subr.bf16.mxu0 0
  %815 = vmatpush2.bf16.msra.mxu0 0
  %816 = vmatprep.subr.bf16.mxu0 0
  %817 = vmatpush2.bf16.msra.mxu0 0
  %818 = vmatprep.mubr.bf16.mxu0 0
  %819 = vmatmul.mubr.bf16.gmra.mxu0 %v784
  %v820 = vpop.f32.mrf.mxu0
  %v821 = vadd.f32 0.0, %v820
  %v822 = vpop.f32.mrf.mxu0
  %v823 = vpop.f32.mrf.mxu0
  %v824 = vadd.f32 0.0, %v823
  %v825 = vpop.f32.mrf.mxu0
  %826 = vdwg.mxu0
  %v827 = vadd.f32 %v759, %v821
  %v828 = vadd.f32 %v762, %v824
  %v829 = vpack.c.bf16 %v640, %v639
  %s830 = scalar_lea.vmem %s4, 48
  %v831 = vld [vmem:[%s830] sm:$0xf]
  %v832 = vld [vmem:[%s830 + $0x4] sm:$0xf]
  %v833 = vld [vmem:[%s830 + $0x8] sm:$0xf]
  %v834 = vld [vmem:[%s830 + $0xc] sm:$0xf]
  %v839 = vunpack.c.l.b16 %v831
  %v840 = vunpack.c.l.b16 %v832
  %v841 = vunpack.c.l.b16 %v833
  %v842 = vunpack.c.l.b16 %v834
  %v843 = vpack.c.b16 %v840, %v839
  %v844 = vpack.c.b16 %v842, %v841
  %v848 = vsel %vm664, %v829, 0
  %850 = vmatprep.subr.bf16.mxu0 0
  %851 = vmatpush1.bf16.msra.mxu0 0
  %852 = vmatprep.subr.bf16.mxu0 0
  %853 = vmatpush1.bf16.msra.mxu0 0
  %854 = vmatprep.subr.bf16.mxu0 0
  %855 = vmatpush1.bf16.msra.mxu0 0
  %856 = vmatprep.subr.bf16.mxu0 0
  %857 = vmatpush1.bf16.msra.mxu0 0
  %858 = vmatprep.subr.bf16.mxu0 0
  %859 = vmatpush1.bf16.msra.mxu0 0
  %860 = vmatprep.subr.bf16.mxu0 0
  %861 = vmatpush1.bf16.msra.mxu0 0
  %862 = vmatprep.subr.bf16.mxu0 0
  %863 = vmatpush1.bf16.msra.mxu0 %v844
  %864 = vmatprep.subr.bf16.mxu0 0
  %865 = vmatpush1.bf16.msra.mxu0 %v843
  %866 = vmatprep.subr.bf16.mxu0 0
  %867 = vmatpush2.bf16.msra.mxu0 0
  %868 = vmatprep.subr.bf16.mxu0 0
  %869 = vmatpush2.bf16.msra.mxu0 0
  %870 = vmatprep.subr.bf16.mxu0 0
  %871 = vmatpush2.bf16.msra.mxu0 0
  %872 = vmatprep.subr.bf16.mxu0 0
  %873 = vmatpush2.bf16.msra.mxu0 0
  %874 = vmatprep.subr.bf16.mxu0 0
  %875 = vmatpush2.bf16.msra.mxu0 0
  %876 = vmatprep.subr.bf16.mxu0 0
  %877 = vmatpush2.bf16.msra.mxu0 0
  %878 = vmatprep.subr.bf16.mxu0 0
  %879 = vmatpush2.bf16.msra.mxu0 0
  %880 = vmatprep.subr.bf16.mxu0 0
  %881 = vmatpush2.bf16.msra.mxu0 0
  %882 = vmatprep.mubr.bf16.mxu0 0
  %883 = vmatmul.mubr.bf16.gmra.mxu0 %v848
  %v884 = vpop.f32.mrf.mxu0
  %v885 = vadd.f32 0.0, %v884
  %v886 = vpop.f32.mrf.mxu0
  %v887 = vpop.f32.mrf.mxu0
  %v888 = vadd.f32 0.0, %v887
  %v889 = vpop.f32.mrf.mxu0
  %890 = vdwg.mxu0
  %v891 = vadd.f32 %v827, %v885
  %v892 = vadd.f32 %v828, %v888
  %v893 = vld [vmem:[%s5] sm:$0x1]
  %v895 = vlaneseq
  %v896 = vshrl.u32 %v895, 7
  %v897 = vsub.s32 0, %v896
  %v898 = vrot.slane %v893, %v897
  %v900 = vadd.f32 %v891, %v898
  %v901 = vadd.f32 %v892, %v898
  %v902 = vpack.c.bf16 %v901, %v900
  %v903 = vld [vmem:[%s6] sm:$0xff]
  %v904 = vld [vmem:[%s6 + $0x8] sm:$0xff]
  %v905 = vld [vmem:[%s6 + $0x10] sm:$0xff]
  %v906 = vld [vmem:[%s6 + $0x18] sm:$0xff]
  %v907 = vld [vmem:[%s6 + $0x20] sm:$0xff]
  %v908 = vld [vmem:[%s6 + $0x28] sm:$0xff]
  %v909 = vld [vmem:[%s8] sm:$0x3]
  %v911 = vlaneseq
  %v912 = vshrl.u32 %v911, 7
  %v913 = vsub.s32 0, %v912
  %v914 = vrot.slane %v909, %v913
  %v915 = vlaneseq
  %v916 = vshrl.u32 %v915, 7
  %v917 = vsub.s32 1, %v916
  %v918 = vrot.slane %v909, %v917
  %v927 = vunpack.c.l.b16 %v903
  %v928 = vunpack.c.h.b16 %v903
  %v929 = vunpack.c.l.b16 %v904
  %v930 = vunpack.c.h.b16 %v904
  %v931 = vunpack.c.l.b16 %v905
  %v932 = vunpack.c.h.b16 %v905
  %v933 = vunpack.c.l.b16 %v906
  %v934 = vunpack.c.h.b16 %v906
  %v935 = vunpack.c.l.b16 %v907
  %v936 = vunpack.c.h.b16 %v907
  %v937 = vunpack.c.l.b16 %v908
  %v938 = vunpack.c.h.b16 %v908
  %v939 = vpack.c.b16 %v929, %v927
  %v940 = vpack.c.b16 %v930, %v928
  %v941 = vpack.c.b16 %v933, %v931
  %v942 = vpack.c.b16 %v934, %v932
  %v943 = vpack.c.b16 %v937, %v935
  %v944 = vpack.c.b16 %v938, %v936
  %vm951 = vcmask 392192
  %v953 = vsel %vm951, %v902, 0
  %955 = vmatprep.subr.bf16.mxu0 0
  %956 = vmatpush1.bf16.msra.mxu0 0
  %957 = vmatprep.subr.bf16.mxu0 0
  %958 = vmatpush1.bf16.msra.mxu0 0
  %959 = vmatprep.subr.bf16.mxu0 0
  %960 = vmatpush1.bf16.msra.mxu0 0
  %961 = vmatprep.subr.bf16.mxu0 0
  %962 = vmatpush1.bf16.msra.mxu0 0
  %963 = vmatprep.subr.bf16.mxu0 0
  %964 = vmatpush1.bf16.msra.mxu0 0
  %965 = vmatprep.subr.bf16.mxu0 %v944
  %966 = vmatpush1.bf16.msra.mxu0 %v943
  %967 = vmatprep.subr.bf16.mxu0 %v942
  %968 = vmatpush1.bf16.msra.mxu0 %v941
  %969 = vmatprep.subr.bf16.mxu0 %v940
  %970 = vmatpush1.bf16.msra.mxu0 %v939
  %971 = vmatprep.subr.bf16.mxu0 0
  %972 = vmatpush2.bf16.msra.mxu0 0
  %973 = vmatprep.subr.bf16.mxu0 0
  %974 = vmatpush2.bf16.msra.mxu0 0
  %975 = vmatprep.subr.bf16.mxu0 0
  %976 = vmatpush2.bf16.msra.mxu0 0
  %977 = vmatprep.subr.bf16.mxu0 0
  %978 = vmatpush2.bf16.msra.mxu0 0
  %979 = vmatprep.subr.bf16.mxu0 0
  %980 = vmatpush2.bf16.msra.mxu0 0
  %981 = vmatprep.subr.bf16.mxu0 0
  %982 = vmatpush2.bf16.msra.mxu0 0
  %983 = vmatprep.subr.bf16.mxu0 0
  %984 = vmatpush2.bf16.msra.mxu0 0
  %985 = vmatprep.subr.bf16.mxu0 0
  %986 = vmatpush2.bf16.msra.mxu0 0
  %987 = vmatprep.mubr.bf16.mxu0 0
  %988 = vmatmul.mubr.bf16.gmra.mxu0 %v953
  %v989 = vpop.f32.mrf.mxu0
  %v990 = vadd.f32 %v914, %v989
  %v991 = vpop.f32.mrf.mxu0
  %v992 = vadd.f32 %v918, %v991
  %v993 = vpop.f32.mrf.mxu0
  %v994 = vadd.f32 %v914, %v993
  %v995 = vpop.f32.mrf.mxu0
  %v996 = vadd.f32 %v918, %v995
  %997 = vdwg.mxu0
  %998 = vst [vmem:[#allocation2] sm:$0xff] %v990
  %999 = vst [vmem:[#allocation2 + $0x8] sm:$0xff] %v992
  %1000 = vst [vmem:[#allocation2 + $0x10] sm:$0xff] %v994
  %1001 = vst [vmem:[#allocation2 + $0x18] sm:$0xff] %v996
  %v1002 = vld [vmem:[%s7] sm:$0xff]
  %v1003 = vld [vmem:[%s7 + $0x8] sm:$0xff]
  %v1004 = vld [vmem:[%s7 + $0x10] sm:$0xff]
  %v1005 = vld [vmem:[%s7 + $0x18] sm:$0xff]
  %v1006 = vld [vmem:[%s7 + $0x20] sm:$0xff]
  %v1007 = vld [vmem:[%s7 + $0x28] sm:$0xff]
  %v1008 = vld [vmem:[%s7 + $0x30] sm:$0xff]
  %v1009 = vld [vmem:[%s7 + $0x38] sm:$0xff]
  %v1010 = vld [vmem:[#allocation2] sm:$0x3]
  %v1011 = vld [vmem:[#allocation2 + $0x8] sm:$0x3]
  %v1020 = vunpack.c.l.b16 %v1002
  %v1021 = vunpack.c.h.b16 %v1002
  %v1022 = vunpack.c.l.b16 %v1003
  %v1023 = vunpack.c.h.b16 %v1003
  %v1024 = vunpack.c.l.b16 %v1004
  %v1025 = vunpack.c.h.b16 %v1004
  %v1026 = vunpack.c.l.b16 %v1005
  %v1027 = vunpack.c.h.b16 %v1005
  %v1028 = vunpack.c.l.b16 %v1006
  %v1029 = vunpack.c.h.b16 %v1006
  %v1030 = vunpack.c.l.b16 %v1007
  %v1031 = vunpack.c.h.b16 %v1007
  %v1032 = vunpack.c.l.b16 %v1008
  %v1033 = vunpack.c.h.b16 %v1008
  %v1034 = vunpack.c.l.b16 %v1009
  %v1035 = vunpack.c.h.b16 %v1009
  %v1036 = vpack.c.b16 %v1022, %v1020
  %v1037 = vpack.c.b16 %v1023, %v1021
  %v1038 = vpack.c.b16 %v1026, %v1024
  %v1039 = vpack.c.b16 %v1027, %v1025
  %v1040 = vpack.c.b16 %v1030, %v1028
  %v1041 = vpack.c.b16 %v1031, %v1029
  %v1042 = vpack.c.b16 %v1034, %v1032
  %v1043 = vpack.c.b16 %v1035, %v1033
  %vm1052 = vcmask 523264
  %v1054 = vsel %vm1052, 0, 0
  %1056 = vmatprep.subr.bf16.mxu0 0
  %1057 = vmatpush1.bf16.msra.mxu0 0
  %1058 = vmatprep.subr.bf16.mxu0 0
  %1059 = vmatpush1.bf16.msra.mxu0 0
  %1060 = vmatprep.subr.bf16.mxu0 0
  %1061 = vmatpush1.bf16.msra.mxu0 0
  %1062 = vmatprep.subr.bf16.mxu0 0
  %1063 = vmatpush1.bf16.msra.mxu0 0
  %1064 = vmatprep.subr.bf16.mxu0 %v1043
  %1065 = vmatpush1.bf16.msra.mxu0 %v1042
  %1066 = vmatprep.subr.bf16.mxu0 %v1041
  %1067 = vmatpush1.bf16.msra.mxu0 %v1040
  %1068 = vmatprep.subr.bf16.mxu0 %v1039
  %1069 = vmatpush1.bf16.msra.mxu0 %v1038
  %1070 = vmatprep.subr.bf16.mxu0 %v1037
  %1071 = vmatpush1.bf16.msra.mxu0 %v1036
  %1072 = vmatprep.subr.bf16.mxu0 0
  %1073 = vmatpush2.bf16.msra.mxu0 0
  %1074 = vmatprep.subr.bf16.mxu0 0
  %1075 = vmatpush2.bf16.msra.mxu0 0
  %1076 = vmatprep.subr.bf16.mxu0 0
  %1077 = vmatpush2.bf16.msra.mxu0 0
  %1078 = vmatprep.subr.bf16.mxu0 0
  %1079 = vmatpush2.bf16.msra.mxu0 0
  %1080 = vmatprep.subr.bf16.mxu0 0
  %1081 = vmatpush2.bf16.msra.mxu0 0
  %1082 = vmatprep.subr.bf16.mxu0 0
  %1083 = vmatpush2.bf16.msra.mxu0 0
  %1084 = vmatprep.subr.bf16.mxu0 0
  %1085 = vmatpush2.bf16.msra.mxu0 0
  %1086 = vmatprep.subr.bf16.mxu0 0
  %1087 = vmatpush2.bf16.msra.mxu0 0
  %1088 = vmatprep.mubr.bf16.mxu0 0
  %1089 = vmatmul.mubr.bf16.gmra.mxu0 %v1054
  %v1090 = vpop.f32.mrf.mxu0
  %v1091 = vadd.f32 0.0, %v1090
  %v1092 = vpop.f32.mrf.mxu0
  %v1093 = vadd.f32 0.0, %v1092
  %v1094 = vpop.f32.mrf.mxu0
  %v1095 = vpop.f32.mrf.mxu0
  %1096 = vdwg.mxu0
  %v1097 = vadd.f32 %v1010, %v1091
  %v1098 = vadd.f32 %v1011, %v1093
  %v1099 = vxor.u32 %v1097, 2147483648
  %v1100 = vmul.f32 %v1099, 1.442695
  %v1101 = vpow.pop %v1100
  %v1102 = vadd.f32 %v1101, 1.0
  %v1103 = vrcp.pop %v1102
  %v1104 = vmul.f32 1.0, %v1103
  %v1105 = vtanh.pop %v1098
  %v1106 = vxor.u32 %v1098, 2147483648
  %v1107 = vmul.f32 %v1106, 1.442695
  %v1108 = vpow.pop %v1107
  %v1109 = vadd.f32 %v1108, 1.0
  %v1110 = vrcp.pop %v1109
  %v1111 = vmul.f32 1.0, %v1110
  %v1112 = vmul.f32 %v1104, 0.0
  %v1113 = vmul.f32 %v1104, %v1105
  %1115 = vrot.lane.b32.xlu0 %v1113, 64
  %v1116 = vpop.permute.xlu0 %1115
  %v1118 = vadd.f32 %v1112, %v1116
  %v1119 = vtanh.pop %v1118
  %v1120 = vmul.f32 %v1111, %v1119
  %1122 = vrot.lane.b32.xlu0 %v1120, 64
  %v1123 = vpop.permute.xlu0 %1122
  %vm1125 = vcmask 517120
  %1126 = vst.msk [vmem:[#allocation3] sm:$0x3] %vm1125, %v1123
  %v1127 = vld [vmem:[#allocation2] sm:$0xc]
  %v1128 = vld [vmem:[#allocation2 + $0x8] sm:$0xc]
  %v1129 = vpack.c.bf16 %v1120, %v1120
  %1131 = vrot.lane.b32.xlu0 %v1129, 64
  %v1132 = vpop.permute.xlu0 %1131
  %v1134 = vsel %vm1052, %v1132, 0
  %1136 = vmatprep.subr.bf16.mxu0 0
  %1137 = vmatpush1.bf16.msra.mxu0 0
  %1138 = vmatprep.subr.bf16.mxu0 0
  %1139 = vmatpush1.bf16.msra.mxu0 0
  %1140 = vmatprep.subr.bf16.mxu0 0
  %1141 = vmatpush1.bf16.msra.mxu0 0
  %1142 = vmatprep.subr.bf16.mxu0 0
  %1143 = vmatpush1.bf16.msra.mxu0 0
  %1144 = vmatprep.subr.bf16.mxu0 %v1043
  %1145 = vmatpush1.bf16.msra.mxu0 %v1042
  %1146 = vmatprep.subr.bf16.mxu0 %v1041
  %1147 = vmatpush1.bf16.msra.mxu0 %v1040
  %1148 = vmatprep.subr.bf16.mxu0 %v1039
  %1149 = vmatpush1.bf16.msra.mxu0 %v1038
  %1150 = vmatprep.subr.bf16.mxu0 %v1037
  %1151 = vmatpush1.bf16.msra.mxu0 %v1036
  %1152 = vmatprep.subr.bf16.mxu0 0
  %1153 = vmatpush2.bf16.msra.mxu0 0
  %1154 = vmatprep.subr.bf16.mxu0 0
  %1155 = vmatpush2.bf16.msra.mxu0 0
  %1156 = vmatprep.subr.bf16.mxu0 0
  %1157 = vmatpush2.bf16.msra.mxu0 0
  %1158 = vmatprep.subr.bf16.mxu0 0
  %1159 = vmatpush2.bf16.msra.mxu0 0
  %1160 = vmatprep.subr.bf16.mxu0 0
  %1161 = vmatpush2.bf16.msra.mxu0 0
  %1162 = vmatprep.subr.bf16.mxu0 0
  %1163 = vmatpush2.bf16.msra.mxu0 0
  %1164 = vmatprep.subr.bf16.mxu0 0
  %1165 = vmatpush2.bf16.msra.mxu0 0
  %1166 = vmatprep.subr.bf16.mxu0 0
  %1167 = vmatpush2.bf16.msra.mxu0 0
  %1168 = vmatprep.mubr.bf16.mxu0 0
  %1169 = vmatmul.mubr.bf16.gmra.mxu0 %v1134
  %v1170 = vpop.f32.mrf.mxu0
  %v1171 = vadd.f32 0.0, %v1170
  %v1172 = vpop.f32.mrf.mxu0
  %v1173 = vadd.f32 0.0, %v1172
  %v1174 = vpop.f32.mrf.mxu0
  %v1175 = vpop.f32.mrf.mxu0
  %1176 = vdwg.mxu0
  %v1179 = vrot.slane %v1171, 6
  %v1180 = vrot.slane %v1173, 6
  %v1183 = vadd.f32 %v1127, %v1179
  %v1184 = vadd.f32 %v1128, %v1180
  %v1185 = vxor.u32 %v1183, 2147483648
  %v1186 = vmul.f32 %v1185, 1.442695
  %v1187 = vpow.pop %v1186
  %v1188 = vadd.f32 %v1187, 1.0
  %v1189 = vrcp.pop %v1188
  %v1190 = vmul.f32 1.0, %v1189
  %v1191 = vtanh.pop %v1184
  %v1192 = vxor.u32 %v1184, 2147483648
  %v1193 = vmul.f32 %v1192, 1.442695
  %v1194 = vpow.pop %v1193
  %v1195 = vadd.f32 %v1194, 1.0
  %v1196 = vrcp.pop %v1195
  %v1197 = vmul.f32 1.0, %v1196
  %v1199 = vrot.slane %v1118, 6
  %v1201 = vmul.f32 %v1190, %v1199
  %v1202 = vmul.f32 %v1190, %v1191
  %1204 = vrot.lane.b32.xlu0 %v1202, 64
  %v1205 = vpop.permute.xlu0 %1204
  %v1207 = vadd.f32 %v1201, %v1205
  %v1208 = vtanh.pop %v1207
  %v1209 = vmul.f32 %v1197, %v1208
  %1211 = vrot.lane.b32.xlu0 %v1209, 64
  %v1212 = vpop.permute.xlu0 %1211
  %vm1214 = vcmask 519170
  %1215 = vst.msk [vmem:[#allocation3] sm:$0xc] %vm1214, %v1212
  %v1216 = vld [vmem:[#allocation2] sm:$0x30]
  %v1217 = vld [vmem:[#allocation2 + $0x8] sm:$0x30]
  %v1218 = vpack.c.bf16 %v1209, %v1209
  %v1220 = vrot.slane %v1218, 1
  %1221 = vrot.lane.b32.xlu0 %v1220, 64
  %v1222 = vpop.permute.xlu0 %1221
  %v1224 = vsel %vm1052, %v1222, 0
  %1226 = vmatprep.subr.bf16.mxu0 0
  %1227 = vmatpush1.bf16.msra.mxu0 0
  %1228 = vmatprep.subr.bf16.mxu0 0
  %1229 = vmatpush1.bf16.msra.mxu0 0
  %1230 = vmatprep.subr.bf16.mxu0 0
  %1231 = vmatpush1.bf16.msra.mxu0 0
  %1232 = vmatprep.subr.bf16.mxu0 0
  %1233 = vmatpush1.bf16.msra.mxu0 0
  %1234 = vmatprep.subr.bf16.mxu0 %v1043
  %1235 = vmatpush1.bf16.msra.mxu0 %v1042
  %1236 = vmatprep.subr.bf16.mxu0 %v1041
  %1237 = vmatpush1.bf16.msra.mxu0 %v1040
  %1238 = vmatprep.subr.bf16.mxu0 %v1039
  %1239 = vmatpush1.bf16.msra.mxu0 %v1038
  %1240 = vmatprep.subr.bf16.mxu0 %v1037
  %1241 = vmatpush1.bf16.msra.mxu0 %v1036
  %1242 = vmatprep.subr.bf16.mxu0 0
  %1243 = vmatpush2.bf16.msra.mxu0 0
  %1244 = vmatprep.subr.bf16.mxu0 0
  %1245 = vmatpush2.bf16.msra.mxu0 0
  %1246 = vmatprep.subr.bf16.mxu0 0
  %1247 = vmatpush2.bf16.msra.mxu0 0
  %1248 = vmatprep.subr.bf16.mxu0 0
  %1249 = vmatpush2.bf16.msra.mxu0 0
  %1250 = vmatprep.subr.bf16.mxu0 0
  %1251 = vmatpush2.bf16.msra.mxu0 0
  %1252 = vmatprep.subr.bf16.mxu0 0
  %1253 = vmatpush2.bf16.msra.mxu0 0
  %1254 = vmatprep.subr.bf16.mxu0 0
  %1255 = vmatpush2.bf16.msra.mxu0 0
  %1256 = vmatprep.subr.bf16.mxu0 0
  %1257 = vmatpush2.bf16.msra.mxu0 0
  %1258 = vmatprep.mubr.bf16.mxu0 0
  %1259 = vmatmul.mubr.bf16.gmra.mxu0 %v1224
  %v1260 = vpop.f32.mrf.mxu0
  %v1261 = vadd.f32 0.0, %v1260
  %v1262 = vpop.f32.mrf.mxu0
  %v1263 = vadd.f32 0.0, %v1262
  %v1264 = vpop.f32.mrf.mxu0
  %v1265 = vpop.f32.mrf.mxu0
  %1266 = vdwg.mxu0
  %v1269 = vrot.slane %v1261, 4
  %v1270 = vrot.slane %v1263, 4
  %v1273 = vadd.f32 %v1216, %v1269
  %v1274 = vadd.f32 %v1217, %v1270
  %v1275 = vxor.u32 %v1273, 2147483648
  %v1276 = vmul.f32 %v1275, 1.442695
  %v1277 = vpow.pop %v1276
  %v1278 = vadd.f32 %v1277, 1.0
  %v1279 = vrcp.pop %v1278
  %v1280 = vmul.f32 1.0, %v1279
  %v1281 = vtanh.pop %v1274
  %v1282 = vxor.u32 %v1274, 2147483648
  %v1283 = vmul.f32 %v1282, 1.442695
  %v1284 = vpow.pop %v1283
  %v1285 = vadd.f32 %v1284, 1.0
  %v1286 = vrcp.pop %v1285
  %v1287 = vmul.f32 1.0, %v1286
  %v1289 = vrot.slane %v1207, 6
  %v1291 = vmul.f32 %v1280, %v1289
  %v1292 = vmul.f32 %v1280, %v1281
  %1294 = vrot.lane.b32.xlu0 %v1292, 64
  %v1295 = vpop.permute.xlu0 %1294
  %v1297 = vadd.f32 %v1291, %v1295
  %v1298 = vtanh.pop %v1297
  %v1299 = vmul.f32 %v1287, %v1298
  %1301 = vrot.lane.b32.xlu0 %v1299, 64
  %v1302 = vpop.permute.xlu0 %1301
  %vm1304 = vcmask 521220
  %1305 = vst.msk [vmem:[#allocation3] sm:$0x30] %vm1304, %v1302
  %v1306 = vld [vmem:[#allocation2] sm:$0xc0]
  %v1307 = vld [vmem:[#allocation2 + $0x8] sm:$0xc0]
  %v1308 = vpack.c.bf16 %v1299, %v1299
  %v1310 = vrot.slane %v1308, 2
  %1311 = vrot.lane.b32.xlu0 %v1310, 64
  %v1312 = vpop.permute.xlu0 %1311
  %v1314 = vsel %vm1052, %v1312, 0
  %1316 = vmatprep.subr.bf16.mxu0 0
  %1317 = vmatpush1.bf16.msra.mxu0 0
  %1318 = vmatprep.subr.bf16.mxu0 0
  %1319 = vmatpush1.bf16.msra.mxu0 0
  %1320 = vmatprep.subr.bf16.mxu0 0
  %1321 = vmatpush1.bf16.msra.mxu0 0
  %1322 = vmatprep.subr.bf16.mxu0 0
  %1323 = vmatpush1.bf16.msra.mxu0 0
  %1324 = vmatprep.subr.bf16.mxu0 %v1043
  %1325 = vmatpush1.bf16.msra.mxu0 %v1042
  %1326 = vmatprep.subr.bf16.mxu0 %v1041
  %1327 = vmatpush1.bf16.msra.mxu0 %v1040
  %1328 = vmatprep.subr.bf16.mxu0 %v1039
  %1329 = vmatpush1.bf16.msra.mxu0 %v1038
  %1330 = vmatprep.subr.bf16.mxu0 %v1037
  %1331 = vmatpush1.bf16.msra.mxu0 %v1036
  %1332 = vmatprep.subr.bf16.mxu0 0
  %1333 = vmatpush2.bf16.msra.mxu0 0
  %1334 = vmatprep.subr.bf16.mxu0 0
  %1335 = vmatpush2.bf16.msra.mxu0 0
  %1336 = vmatprep.subr.bf16.mxu0 0
  %1337 = vmatpush2.bf16.msra.mxu0 0
  %1338 = vmatprep.subr.bf16.mxu0 0
  %1339 = vmatpush2.bf16.msra.mxu0 0
  %1340 = vmatprep.subr.bf16.mxu0 0
  %1341 = vmatpush2.bf16.msra.mxu0 0
  %1342 = vmatprep.subr.bf16.mxu0 0
  %1343 = vmatpush2.bf16.msra.mxu0 0
  %1344 = vmatprep.subr.bf16.mxu0 0
  %1345 = vmatpush2.bf16.msra.mxu0 0
  %1346 = vmatprep.subr.bf16.mxu0 0
  %1347 = vmatpush2.bf16.msra.mxu0 0
  %1348 = vmatprep.mubr.bf16.mxu0 0
  %1349 = vmatmul.mubr.bf16.gmra.mxu0 %v1314
  %v1350 = vpop.f32.mrf.mxu0
  %v1351 = vadd.f32 0.0, %v1350
  %v1352 = vpop.f32.mrf.mxu0
  %v1353 = vadd.f32 0.0, %v1352
  %v1354 = vpop.f32.mrf.mxu0
  %v1355 = vpop.f32.mrf.mxu0
  %1356 = vdwg.mxu0
  %v1359 = vrot.slane %v1351, 2
  %v1360 = vrot.slane %v1353, 2
  %v1363 = vadd.f32 %v1306, %v1359
  %v1364 = vadd.f32 %v1307, %v1360
  %v1365 = vxor.u32 %v1363, 2147483648
  %v1366 = vmul.f32 %v1365, 1.442695
  %v1367 = vpow.pop %v1366
  %v1368 = vadd.f32 %v1367, 1.0
  %v1369 = vrcp.pop %v1368
  %v1370 = vmul.f32 1.0, %v1369
  %v1371 = vtanh.pop %v1364
  %v1372 = vxor.u32 %v1364, 2147483648
  %v1373 = vmul.f32 %v1372, 1.442695
  %v1374 = vpow.pop %v1373
  %v1375 = vadd.f32 %v1374, 1.0
  %v1376 = vrcp.pop %v1375
  %v1377 = vmul.f32 1.0, %v1376
  %v1379 = vrot.slane %v1297, 6
  %v1381 = vmul.f32 %v1370, %v1379
  %v1382 = vmul.f32 %v1370, %v1371
  %1384 = vrot.lane.b32.xlu0 %v1382, 64
  %v1385 = vpop.permute.xlu0 %1384
  %v1387 = vadd.f32 %v1381, %v1385
  %v1388 = vtanh.pop %v1387
  %v1389 = vmul.f32 %v1377, %v1388
  %1391 = vrot.lane.b32.xlu0 %v1389, 64
  %v1392 = vpop.permute.xlu0 %1391
  %vm1394 = vcmask 523270
  %1395 = vst.msk [vmem:[#allocation3] sm:$0xc0] %vm1394, %v1392
  %v1396 = vld [vmem:[#allocation2 + $0x10] sm:$0x3]
  %v1397 = vld [vmem:[#allocation2 + $0x18] sm:$0x3]
  %v1398 = vpack.c.bf16 %v1389, %v1389
  %v1400 = vrot.slane %v1398, 3
  %1401 = vrot.lane.b32.xlu0 %v1400, 64
  %v1402 = vpop.permute.xlu0 %1401
  %v1404 = vsel %vm1052, %v1402, 0
  %1406 = vmatprep.subr.bf16.mxu0 0
  %1407 = vmatpush1.bf16.msra.mxu0 0
  %1408 = vmatprep.subr.bf16.mxu0 0
  %1409 = vmatpush1.bf16.msra.mxu0 0
  %1410 = vmatprep.subr.bf16.mxu0 0
  %1411 = vmatpush1.bf16.msra.mxu0 0
  %1412 = vmatprep.subr.bf16.mxu0 0
  %1413 = vmatpush1.bf16.msra.mxu0 0
  %1414 = vmatprep.subr.bf16.mxu0 %v1043
  %1415 = vmatpush1.bf16.msra.mxu0 %v1042
  %1416 = vmatprep.subr.bf16.mxu0 %v1041
  %1417 = vmatpush1.bf16.msra.mxu0 %v1040
  %1418 = vmatprep.subr.bf16.mxu0 %v1039
  %1419 = vmatpush1.bf16.msra.mxu0 %v1038
  %1420 = vmatprep.subr.bf16.mxu0 %v1037
  %1421 = vmatpush1.bf16.msra.mxu0 %v1036
  %1422 = vmatprep.subr.bf16.mxu0 0
  %1423 = vmatpush2.bf16.msra.mxu0 0
  %1424 = vmatprep.subr.bf16.mxu0 0
  %1425 = vmatpush2.bf16.msra.mxu0 0
  %1426 = vmatprep.subr.bf16.mxu0 0
  %1427 = vmatpush2.bf16.msra.mxu0 0
  %1428 = vmatprep.subr.bf16.mxu0 0
  %1429 = vmatpush2.bf16.msra.mxu0 0
  %1430 = vmatprep.subr.bf16.mxu0 0
  %1431 = vmatpush2.bf16.msra.mxu0 0
  %1432 = vmatprep.subr.bf16.mxu0 0
  %1433 = vmatpush2.bf16.msra.mxu0 0
  %1434 = vmatprep.subr.bf16.mxu0 0
  %1435 = vmatpush2.bf16.msra.mxu0 0
  %1436 = vmatprep.subr.bf16.mxu0 0
  %1437 = vmatpush2.bf16.msra.mxu0 0
  %1438 = vmatprep.mubr.bf16.mxu0 0
  %1439 = vmatmul.mubr.bf16.gmra.mxu0 %v1404
  %v1440 = vpop.f32.mrf.mxu0
  %v1441 = vadd.f32 0.0, %v1440
  %v1442 = vpop.f32.mrf.mxu0
  %v1443 = vadd.f32 0.0, %v1442
  %v1444 = vpop.f32.mrf.mxu0
  %v1445 = vpop.f32.mrf.mxu0
  %1446 = vdwg.mxu0
  %v1447 = vadd.f32 %v1396, %v1441
  %v1448 = vadd.f32 %v1397, %v1443
  %v1449 = vxor.u32 %v1447, 2147483648
  %v1450 = vmul.f32 %v1449, 1.442695
  %v1451 = vpow.pop %v1450
  %v1452 = vadd.f32 %v1451, 1.0
  %v1453 = vrcp.pop %v1452
  %v1454 = vmul.f32 1.0, %v1453
  %v1455 = vtanh.pop %v1448
  %v1456 = vxor.u32 %v1448, 2147483648
  %v1457 = vmul.f32 %v1456, 1.442695
  %v1458 = vpow.pop %v1457
  %v1459 = vadd.f32 %v1458, 1.0
  %v1460 = vrcp.pop %v1459
  %v1461 = vmul.f32 1.0, %v1460
  %v1463 = vrot.slane %v1387, 6
  %v1465 = vmul.f32 %v1454, %v1463
  %v1466 = vmul.f32 %v1454, %v1455
  %1468 = vrot.lane.b32.xlu0 %v1466, 64
  %v1469 = vpop.permute.xlu0 %1468
  %v1471 = vadd.f32 %v1465, %v1469
  %v1472 = vtanh.pop %v1471
  %v1473 = vmul.f32 %v1461, %v1472
  %1475 = vrot.lane.b32.xlu0 %v1473, 64
  %v1476 = vpop.permute.xlu0 %1475
  %1478 = vst.msk [vmem:[#allocation3 + $0x8] sm:$0x3] %vm1125, %v1476
  %v1479 = vld [vmem:[#allocation2 + $0x10] sm:$0xc]
  %v1480 = vld [vmem:[#allocation2 + $0x18] sm:$0xc]
  %v1481 = vpack.c.bf16 %v1473, %v1473
  %1483 = vrot.lane.b32.xlu0 %v1481, 64
  %v1484 = vpop.permute.xlu0 %1483
  %v1486 = vsel %vm1052, %v1484, 0
  %1488 = vmatprep.subr.bf16.mxu0 0
  %1489 = vmatpush1.bf16.msra.mxu0 0
  %1490 = vmatprep.subr.bf16.mxu0 0
  %1491 = vmatpush1.bf16.msra.mxu0 0
  %1492 = vmatprep.subr.bf16.mxu0 0
  %1493 = vmatpush1.bf16.msra.mxu0 0
  %1494 = vmatprep.subr.bf16.mxu0 0
  %1495 = vmatpush1.bf16.msra.mxu0 0
  %1496 = vmatprep.subr.bf16.mxu0 %v1043
  %1497 = vmatpush1.bf16.msra.mxu0 %v1042
  %1498 = vmatprep.subr.bf16.mxu0 %v1041
  %1499 = vmatpush1.bf16.msra.mxu0 %v1040
  %1500 = vmatprep.subr.bf16.mxu0 %v1039
  %1501 = vmatpush1.bf16.msra.mxu0 %v1038
  %1502 = vmatprep.subr.bf16.mxu0 %v1037
  %1503 = vmatpush1.bf16.msra.mxu0 %v1036
  %1504 = vmatprep.subr.bf16.mxu0 0
  %1505 = vmatpush2.bf16.msra.mxu0 0
  %1506 = vmatprep.subr.bf16.mxu0 0
  %1507 = vmatpush2.bf16.msra.mxu0 0
  %1508 = vmatprep.subr.bf16.mxu0 0
  %1509 = vmatpush2.bf16.msra.mxu0 0
  %1510 = vmatprep.subr.bf16.mxu0 0
  %1511 = vmatpush2.bf16.msra.mxu0 0
  %1512 = vmatprep.subr.bf16.mxu0 0
  %1513 = vmatpush2.bf16.msra.mxu0 0
  %1514 = vmatprep.subr.bf16.mxu0 0
  %1515 = vmatpush2.bf16.msra.mxu0 0
  %1516 = vmatprep.subr.bf16.mxu0 0
  %1517 = vmatpush2.bf16.msra.mxu0 0
  %1518 = vmatprep.subr.bf16.mxu0 0
  %1519 = vmatpush2.bf16.msra.mxu0 0
  %1520 = vmatprep.mubr.bf16.mxu0 0
  %1521 = vmatmul.mubr.bf16.gmra.mxu0 %v1486
  %v1522 = vpop.f32.mrf.mxu0
  %v1523 = vadd.f32 0.0, %v1522
  %v1524 = vpop.f32.mrf.mxu0
  %v1525 = vadd.f32 0.0, %v1524
  %v1526 = vpop.f32.mrf.mxu0
  %v1527 = vpop.f32.mrf.mxu0
  %1528 = vdwg.mxu0
  %v1531 = vrot.slane %v1523, 6
  %v1532 = vrot.slane %v1525, 6
  %v1535 = vadd.f32 %v1479, %v1531
  %v1536 = vadd.f32 %v1480, %v1532
  %v1537 = vxor.u32 %v1535, 2147483648
  %v1538 = vmul.f32 %v1537, 1.442695
  %v1539 = vpow.pop %v1538
  %v1540 = vadd.f32 %v1539, 1.0
  %v1541 = vrcp.pop %v1540
  %v1542 = vmul.f32 1.0, %v1541
  %v1543 = vtanh.pop %v1536
  %v1544 = vxor.u32 %v1536, 2147483648
  %v1545 = vmul.f32 %v1544, 1.442695
  %v1546 = vpow.pop %v1545
  %v1547 = vadd.f32 %v1546, 1.0
  %v1548 = vrcp.pop %v1547
  %v1549 = vmul.f32 1.0, %v1548
  %v1551 = vrot.slane %v1471, 6
  %v1553 = vmul.f32 %v1542, %v1551
  %v1554 = vmul.f32 %v1542, %v1543
  %1556 = vrot.lane.b32.xlu0 %v1554, 64
  %v1557 = vpop.permute.xlu0 %1556
  %v1559 = vadd.f32 %v1553, %v1557
  %v1560 = vtanh.pop %v1559
  %v1561 = vmul.f32 %v1549, %v1560
  %1563 = vrot.lane.b32.xlu0 %v1561, 64
  %v1564 = vpop.permute.xlu0 %1563
  %1566 = vst.msk [vmem:[#allocation3 + $0x8] sm:$0xc] %vm1214, %v1564
  %v1567 = vld [vmem:[#allocation2 + $0x10] sm:$0x30]
  %v1568 = vld [vmem:[#allocation2 + $0x18] sm:$0x30]
  %v1569 = vpack.c.bf16 %v1561, %v1561
  %v1571 = vrot.slane %v1569, 1
  %1572 = vrot.lane.b32.xlu0 %v1571, 64
  %v1573 = vpop.permute.xlu0 %1572
  %v1575 = vsel %vm1052, %v1573, 0
  %1577 = vmatprep.subr.bf16.mxu0 0
  %1578 = vmatpush1.bf16.msra.mxu0 0
  %1579 = vmatprep.subr.bf16.mxu0 0
  %1580 = vmatpush1.bf16.msra.mxu0 0
  %1581 = vmatprep.subr.bf16.mxu0 0
  %1582 = vmatpush1.bf16.msra.mxu0 0
  %1583 = vmatprep.subr.bf16.mxu0 0
  %1584 = vmatpush1.bf16.msra.mxu0 0
  %1585 = vmatprep.subr.bf16.mxu0 %v1043
  %1586 = vmatpush1.bf16.msra.mxu0 %v1042
  %1587 = vmatprep.subr.bf16.mxu0 %v1041
  %1588 = vmatpush1.bf16.msra.mxu0 %v1040
  %1589 = vmatprep.subr.bf16.mxu0 %v1039
  %1590 = vmatpush1.bf16.msra.mxu0 %v1038
  %1591 = vmatprep.subr.bf16.mxu0 %v1037
  %1592 = vmatpush1.bf16.msra.mxu0 %v1036
  %1593 = vmatprep.subr.bf16.mxu0 0
  %1594 = vmatpush2.bf16.msra.mxu0 0
  %1595 = vmatprep.subr.bf16.mxu0 0
  %1596 = vmatpush2.bf16.msra.mxu0 0
  %1597 = vmatprep.subr.bf16.mxu0 0
  %1598 = vmatpush2.bf16.msra.mxu0 0
  %1599 = vmatprep.subr.bf16.mxu0 0
  %1600 = vmatpush2.bf16.msra.mxu0 0
  %1601 = vmatprep.subr.bf16.mxu0 0
  %1602 = vmatpush2.bf16.msra.mxu0 0
  %1603 = vmatprep.subr.bf16.mxu0 0
  %1604 = vmatpush2.bf16.msra.mxu0 0
  %1605 = vmatprep.subr.bf16.mxu0 0
  %1606 = vmatpush2.bf16.msra.mxu0 0
  %1607 = vmatprep.subr.bf16.mxu0 0
  %1608 = vmatpush2.bf16.msra.mxu0 0
  %1609 = vmatprep.mubr.bf16.mxu0 0
  %1610 = vmatmul.mubr.bf16.gmra.mxu0 %v1575
  %v1611 = vpop.f32.mrf.mxu0
  %v1612 = vadd.f32 0.0, %v1611
  %v1613 = vpop.f32.mrf.mxu0
  %v1614 = vadd.f32 0.0, %v1613
  %v1615 = vpop.f32.mrf.mxu0
  %v1616 = vpop.f32.mrf.mxu0
  %1617 = vdwg.mxu0
  %v1620 = vrot.slane %v1612, 4
  %v1621 = vrot.slane %v1614, 4
  %v1624 = vadd.f32 %v1567, %v1620
  %v1625 = vadd.f32 %v1568, %v1621
  %v1626 = vxor.u32 %v1624, 2147483648
  %v1627 = vmul.f32 %v1626, 1.442695
  %v1628 = vpow.pop %v1627
  %v1629 = vadd.f32 %v1628, 1.0
  %v1630 = vrcp.pop %v1629
  %v1631 = vmul.f32 1.0, %v1630
  %v1632 = vtanh.pop %v1625
  %v1633 = vxor.u32 %v1625, 2147483648
  %v1634 = vmul.f32 %v1633, 1.442695
  %v1635 = vpow.pop %v1634
  %v1636 = vadd.f32 %v1635, 1.0
  %v1637 = vrcp.pop %v1636
  %v1638 = vmul.f32 1.0, %v1637
  %v1640 = vrot.slane %v1559, 6
  %v1642 = vmul.f32 %v1631, %v1640
  %v1643 = vmul.f32 %v1631, %v1632
  %1645 = vrot.lane.b32.xlu0 %v1643, 64
  %v1646 = vpop.permute.xlu0 %1645
  %v1648 = vadd.f32 %v1642, %v1646
  %v1649 = vtanh.pop %v1648
  %v1650 = vmul.f32 %v1638, %v1649
  %1652 = vrot.lane.b32.xlu0 %v1650, 64
  %v1653 = vpop.permute.xlu0 %1652
  %1655 = vst.msk [vmem:[#allocation3 + $0x8] sm:$0x30] %vm1304, %v1653
  %v1656 = vld [vmem:[#allocation2 + $0x10] sm:$0xc0]
  %v1657 = vld [vmem:[#allocation2 + $0x18] sm:$0xc0]
  %v1658 = vpack.c.bf16 %v1650, %v1650
  %v1660 = vrot.slane %v1658, 2
  %1661 = vrot.lane.b32.xlu0 %v1660, 64
  %v1662 = vpop.permute.xlu0 %1661
  %v1664 = vsel %vm1052, %v1662, 0
  %1666 = vmatprep.subr.bf16.mxu0 0
  %1667 = vmatpush1.bf16.msra.mxu0 0
  %1668 = vmatprep.subr.bf16.mxu0 0
  %1669 = vmatpush1.bf16.msra.mxu0 0
  %1670 = vmatprep.subr.bf16.mxu0 0
  %1671 = vmatpush1.bf16.msra.mxu0 0
  %1672 = vmatprep.subr.bf16.mxu0 0
  %1673 = vmatpush1.bf16.msra.mxu0 0
  %1674 = vmatprep.subr.bf16.mxu0 %v1043
  %1675 = vmatpush1.bf16.msra.mxu0 %v1042
  %1676 = vmatprep.subr.bf16.mxu0 %v1041
  %1677 = vmatpush1.bf16.msra.mxu0 %v1040
  %1678 = vmatprep.subr.bf16.mxu0 %v1039
  %1679 = vmatpush1.bf16.msra.mxu0 %v1038
  %1680 = vmatprep.subr.bf16.mxu0 %v1037
  %1681 = vmatpush1.bf16.msra.mxu0 %v1036
  %1682 = vmatprep.subr.bf16.mxu0 0
  %1683 = vmatpush2.bf16.msra.mxu0 0
  %1684 = vmatprep.subr.bf16.mxu0 0
  %1685 = vmatpush2.bf16.msra.mxu0 0
  %1686 = vmatprep.subr.bf16.mxu0 0
  %1687 = vmatpush2.bf16.msra.mxu0 0
  %1688 = vmatprep.subr.bf16.mxu0 0
  %1689 = vmatpush2.bf16.msra.mxu0 0
  %1690 = vmatprep.subr.bf16.mxu0 0
  %1691 = vmatpush2.bf16.msra.mxu0 0
  %1692 = vmatprep.subr.bf16.mxu0 0
  %1693 = vmatpush2.bf16.msra.mxu0 0
  %1694 = vmatprep.subr.bf16.mxu0 0
  %1695 = vmatpush2.bf16.msra.mxu0 0
  %1696 = vmatprep.subr.bf16.mxu0 0
  %1697 = vmatpush2.bf16.msra.mxu0 0
  %1698 = vmatprep.mubr.bf16.mxu0 0
  %1699 = vmatmul.mubr.bf16.gmra.mxu0 %v1664
  %v1700 = vpop.f32.mrf.mxu0
  %v1701 = vadd.f32 0.0, %v1700
  %v1702 = vpop.f32.mrf.mxu0
  %v1703 = vadd.f32 0.0, %v1702
  %v1704 = vpop.f32.mrf.mxu0
  %v1705 = vpop.f32.mrf.mxu0
  %1706 = vdwg.mxu0
  %v1709 = vrot.slane %v1701, 2
  %v1710 = vrot.slane %v1703, 2
  %v1713 = vadd.f32 %v1656, %v1709
  %v1714 = vadd.f32 %v1657, %v1710
  %v1715 = vxor.u32 %v1713, 2147483648
  %v1716 = vmul.f32 %v1715, 1.442695
  %v1717 = vpow.pop %v1716
  %v1718 = vadd.f32 %v1717, 1.0
  %v1719 = vrcp.pop %v1718
  %v1720 = vmul.f32 1.0, %v1719
  %v1721 = vtanh.pop %v1714
  %v1722 = vxor.u32 %v1714, 2147483648
  %v1723 = vmul.f32 %v1722, 1.442695
  %v1724 = vpow.pop %v1723
  %v1725 = vadd.f32 %v1724, 1.0
  %v1726 = vrcp.pop %v1725
  %v1727 = vmul.f32 1.0, %v1726
  %v1729 = vrot.slane %v1648, 6
  %v1731 = vmul.f32 %v1720, %v1729
  %v1732 = vmul.f32 %v1720, %v1721
  %1734 = vrot.lane.b32.xlu0 %v1732, 64
  %v1735 = vpop.permute.xlu0 %1734
  %v1737 = vadd.f32 %v1731, %v1735
  %v1738 = vtanh.pop %v1737
  %v1739 = vmul.f32 %v1727, %v1738
  %1741 = vrot.lane.b32.xlu0 %v1739, 64
  %v1742 = vpop.permute.xlu0 %1741
  %1744 = vst.msk [vmem:[#allocation3 + $0x8] sm:$0xc0] %vm1394, %v1742
  %s1745 = scalar_lea.vmem %s6, 48
  %v1746 = vld [vmem:[%s1745] sm:$0xff]
  %v1747 = vld [vmem:[%s1745 + $0x8] sm:$0xff]
  %v1748 = vld [vmem:[%s1745 + $0x10] sm:$0xff]
  %v1749 = vld [vmem:[%s1745 + $0x18] sm:$0xff]
  %v1750 = vld [vmem:[%s1745 + $0x20] sm:$0xff]
  %v1751 = vld [vmem:[%s1745 + $0x28] sm:$0xff]
  %s1752 = scalar_lea.vmem %s8, 2
  %v1753 = vld [vmem:[%s1752] sm:$0x3]
  %v1755 = vlaneseq
  %v1756 = vshrl.u32 %v1755, 7
  %v1757 = vsub.s32 0, %v1756
  %v1758 = vrot.slane %v1753, %v1757
  %v1759 = vlaneseq
  %v1760 = vshrl.u32 %v1759, 7
  %v1761 = vsub.s32 1, %v1760
  %v1762 = vrot.slane %v1753, %v1761
  %v1771 = vunpack.c.l.b16 %v1746
  %v1772 = vunpack.c.h.b16 %v1746
  %v1773 = vunpack.c.l.b16 %v1747
  %v1774 = vunpack.c.h.b16 %v1747
  %v1775 = vunpack.c.l.b16 %v1748
  %v1776 = vunpack.c.h.b16 %v1748
  %v1777 = vunpack.c.l.b16 %v1749
  %v1778 = vunpack.c.h.b16 %v1749
  %v1779 = vunpack.c.l.b16 %v1750
  %v1780 = vunpack.c.h.b16 %v1750
  %v1781 = vunpack.c.l.b16 %v1751
  %v1782 = vunpack.c.h.b16 %v1751
  %v1783 = vpack.c.b16 %v1773, %v1771
  %v1784 = vpack.c.b16 %v1774, %v1772
  %v1785 = vpack.c.b16 %v1777, %v1775
  %v1786 = vpack.c.b16 %v1778, %v1776
  %v1787 = vpack.c.b16 %v1781, %v1779
  %v1788 = vpack.c.b16 %v1782, %v1780
  %1795 = vmatprep.subr.bf16.mxu0 0
  %1796 = vmatpush1.bf16.msra.mxu0 0
  %1797 = vmatprep.subr.bf16.mxu0 0
  %1798 = vmatpush1.bf16.msra.mxu0 0
  %1799 = vmatprep.subr.bf16.mxu0 0
  %1800 = vmatpush1.bf16.msra.mxu0 0
  %1801 = vmatprep.subr.bf16.mxu0 0
  %1802 = vmatpush1.bf16.msra.mxu0 0
  %1803 = vmatprep.subr.bf16.mxu0 0
  %1804 = vmatpush1.bf16.msra.mxu0 0
  %1805 = vmatprep.subr.bf16.mxu0 %v1788
  %1806 = vmatpush1.bf16.msra.mxu0 %v1787
  %1807 = vmatprep.subr.bf16.mxu0 %v1786
  %1808 = vmatpush1.bf16.msra.mxu0 %v1785
  %1809 = vmatprep.subr.bf16.mxu0 %v1784
  %1810 = vmatpush1.bf16.msra.mxu0 %v1783
  %1811 = vmatprep.subr.bf16.mxu0 0
  %1812 = vmatpush2.bf16.msra.mxu0 0
  %1813 = vmatprep.subr.bf16.mxu0 0
  %1814 = vmatpush2.bf16.msra.mxu0 0
  %1815 = vmatprep.subr.bf16.mxu0 0
  %1816 = vmatpush2.bf16.msra.mxu0 0
  %1817 = vmatprep.subr.bf16.mxu0 0
  %1818 = vmatpush2.bf16.msra.mxu0 0
  %1819 = vmatprep.subr.bf16.mxu0 0
  %1820 = vmatpush2.bf16.msra.mxu0 0
  %1821 = vmatprep.subr.bf16.mxu0 0
  %1822 = vmatpush2.bf16.msra.mxu0 0
  %1823 = vmatprep.subr.bf16.mxu0 0
  %1824 = vmatpush2.bf16.msra.mxu0 0
  %1825 = vmatprep.subr.bf16.mxu0 0
  %1826 = vmatpush2.bf16.msra.mxu0 0
  %1827 = vmatprep.mubr.bf16.mxu0 0
  %1828 = vmatmul.mubr.bf16.gmra.mxu0 %v953
  %v1829 = vpop.f32.mrf.mxu0
  %v1830 = vadd.f32 %v1758, %v1829
  %v1831 = vpop.f32.mrf.mxu0
  %v1832 = vadd.f32 %v1762, %v1831
  %v1833 = vpop.f32.mrf.mxu0
  %v1834 = vadd.f32 %v1758, %v1833
  %v1835 = vpop.f32.mrf.mxu0
  %v1836 = vadd.f32 %v1762, %v1835
  %1837 = vdwg.mxu0
  %1838 = vst [vmem:[#allocation2] sm:$0xff] %v1830
  %1839 = vst [vmem:[#allocation2 + $0x8] sm:$0xff] %v1832
  %1840 = vst [vmem:[#allocation2 + $0x10] sm:$0xff] %v1834
  %1841 = vst [vmem:[#allocation2 + $0x18] sm:$0xff] %v1836
  %s1842 = scalar_lea.vmem %s7, 64
  %v1843 = vld [vmem:[%s1842] sm:$0xff]
  %v1844 = vld [vmem:[%s1842 + $0x8] sm:$0xff]
  %v1845 = vld [vmem:[%s1842 + $0x10] sm:$0xff]
  %v1846 = vld [vmem:[%s1842 + $0x18] sm:$0xff]
  %v1847 = vld [vmem:[%s1842 + $0x20] sm:$0xff]
  %v1848 = vld [vmem:[%s1842 + $0x28] sm:$0xff]
  %v1849 = vld [vmem:[%s1842 + $0x30] sm:$0xff]
  %v1850 = vld [vmem:[%s1842 + $0x38] sm:$0xff]
  %v1851 = vld [vmem:[#allocation2 + $0x10] sm:$0xc0]
  %v1852 = vld [vmem:[#allocation2 + $0x18] sm:$0xc0]
  %v1861 = vunpack.c.l.b16 %v1843
  %v1862 = vunpack.c.h.b16 %v1843
  %v1863 = vunpack.c.l.b16 %v1844
  %v1864 = vunpack.c.h.b16 %v1844
  %v1865 = vunpack.c.l.b16 %v1845
  %v1866 = vunpack.c.h.b16 %v1845
  %v1867 = vunpack.c.l.b16 %v1846
  %v1868 = vunpack.c.h.b16 %v1846
  %v1869 = vunpack.c.l.b16 %v1847
  %v1870 = vunpack.c.h.b16 %v1847
  %v1871 = vunpack.c.l.b16 %v1848
  %v1872 = vunpack.c.h.b16 %v1848
  %v1873 = vunpack.c.l.b16 %v1849
  %v1874 = vunpack.c.h.b16 %v1849
  %v1875 = vunpack.c.l.b16 %v1850
  %v1876 = vunpack.c.h.b16 %v1850
  %v1877 = vpack.c.b16 %v1863, %v1861
  %v1878 = vpack.c.b16 %v1864, %v1862
  %v1879 = vpack.c.b16 %v1867, %v1865
  %v1880 = vpack.c.b16 %v1868, %v1866
  %v1881 = vpack.c.b16 %v1871, %v1869
  %v1882 = vpack.c.b16 %v1872, %v1870
  %v1883 = vpack.c.b16 %v1875, %v1873
  %v1884 = vpack.c.b16 %v1876, %v1874
  %1893 = vmatprep.subr.bf16.mxu0 0
  %1894 = vmatpush1.bf16.msra.mxu0 0
  %1895 = vmatprep.subr.bf16.mxu0 0
  %1896 = vmatpush1.bf16.msra.mxu0 0
  %1897 = vmatprep.subr.bf16.mxu0 0
  %1898 = vmatpush1.bf16.msra.mxu0 0
  %1899 = vmatprep.subr.bf16.mxu0 0
  %1900 = vmatpush1.bf16.msra.mxu0 0
  %1901 = vmatprep.subr.bf16.mxu0 %v1884
  %1902 = vmatpush1.bf16.msra.mxu0 %v1883
  %1903 = vmatprep.subr.bf16.mxu0 %v1882
  %1904 = vmatpush1.bf16.msra.mxu0 %v1881
  %1905 = vmatprep.subr.bf16.mxu0 %v1880
  %1906 = vmatpush1.bf16.msra.mxu0 %v1879
  %1907 = vmatprep.subr.bf16.mxu0 %v1878
  %1908 = vmatpush1.bf16.msra.mxu0 %v1877
  %1909 = vmatprep.subr.bf16.mxu0 0
  %1910 = vmatpush2.bf16.msra.mxu0 0
  %1911 = vmatprep.subr.bf16.mxu0 0
  %1912 = vmatpush2.bf16.msra.mxu0 0
  %1913 = vmatprep.subr.bf16.mxu0 0
  %1914 = vmatpush2.bf16.msra.mxu0 0
  %1915 = vmatprep.subr.bf16.mxu0 0
  %1916 = vmatpush2.bf16.msra.mxu0 0
  %1917 = vmatprep.subr.bf16.mxu0 0
  %1918 = vmatpush2.bf16.msra.mxu0 0
  %1919 = vmatprep.subr.bf16.mxu0 0
  %1920 = vmatpush2.bf16.msra.mxu0 0
  %1921 = vmatprep.subr.bf16.mxu0 0
  %1922 = vmatpush2.bf16.msra.mxu0 0
  %1923 = vmatprep.subr.bf16.mxu0 0
  %1924 = vmatpush2.bf16.msra.mxu0 0
  %1925 = vmatprep.mubr.bf16.mxu0 0
  %1926 = vmatmul.mubr.bf16.gmra.mxu0 %v1054
  %v1927 = vpop.f32.mrf.mxu0
  %v1928 = vadd.f32 0.0, %v1927
  %v1929 = vpop.f32.mrf.mxu0
  %v1930 = vadd.f32 0.0, %v1929
  %v1931 = vpop.f32.mrf.mxu0
  %v1932 = vpop.f32.mrf.mxu0
  %1933 = vdwg.mxu0
  %v1936 = vrot.slane %v1928, 2
  %v1937 = vrot.slane %v1930, 2
  %v1940 = vadd.f32 %v1851, %v1936
  %v1941 = vadd.f32 %v1852, %v1937
  %v1942 = vxor.u32 %v1940, 2147483648
  %v1943 = vmul.f32 %v1942, 1.442695
  %v1944 = vpow.pop %v1943
  %v1945 = vadd.f32 %v1944, 1.0
  %v1946 = vrcp.pop %v1945
  %v1947 = vmul.f32 1.0, %v1946
  %v1948 = vtanh.pop %v1941
  %v1949 = vxor.u32 %v1941, 2147483648
  %v1950 = vmul.f32 %v1949, 1.442695
  %v1951 = vpow.pop %v1950
  %v1952 = vadd.f32 %v1951, 1.0
  %v1953 = vrcp.pop %v1952
  %v1954 = vmul.f32 1.0, %v1953
  %v1955 = vmul.f32 %v1947, 0.0
  %v1956 = vmul.f32 %v1947, %v1948
  %1958 = vrot.lane.b32.xlu0 %v1956, 64
  %v1959 = vpop.permute.xlu0 %1958
  %v1961 = vadd.f32 %v1955, %v1959
  %v1962 = vtanh.pop %v1961
  %v1963 = vmul.f32 %v1954, %v1962
  %1965 = vrot.lane.b32.xlu0 %v1963, 64
  %v1966 = vpop.permute.xlu0 %1965
  %s1968 = scalar_lea.vmem [#allocation3], 16
  %1969 = vst.msk [vmem:[%s1968 + $0x8] sm:$0xc0] %vm1394, %v1966
  %v1970 = vld [vmem:[#allocation2 + $0x10] sm:$0x30]
  %v1971 = vld [vmem:[#allocation2 + $0x18] sm:$0x30]
  %v1972 = vpack.c.bf16 %v1963, %v1963
  %v1974 = vrot.slane %v1972, 3
  %1975 = vrot.lane.b32.xlu0 %v1974, 64
  %v1976 = vpop.permute.xlu0 %1975
  %v1978 = vsel %vm1052, %v1976, 0
  %1980 = vmatprep.subr.bf16.mxu0 0
  %1981 = vmatpush1.bf16.msra.mxu0 0
  %1982 = vmatprep.subr.bf16.mxu0 0
  %1983 = vmatpush1.bf16.msra.mxu0 0
  %1984 = vmatprep.subr.bf16.mxu0 0
  %1985 = vmatpush1.bf16.msra.mxu0 0
  %1986 = vmatprep.subr.bf16.mxu0 0
  %1987 = vmatpush1.bf16.msra.mxu0 0
  %1988 = vmatprep.subr.bf16.mxu0 %v1884
  %1989 = vmatpush1.bf16.msra.mxu0 %v1883
  %1990 = vmatprep.subr.bf16.mxu0 %v1882
  %1991 = vmatpush1.bf16.msra.mxu0 %v1881
  %1992 = vmatprep.subr.bf16.mxu0 %v1880
  %1993 = vmatpush1.bf16.msra.mxu0 %v1879
  %1994 = vmatprep.subr.bf16.mxu0 %v1878
  %1995 = vmatpush1.bf16.msra.mxu0 %v1877
  %1996 = vmatprep.subr.bf16.mxu0 0
  %1997 = vmatpush2.bf16.msra.mxu0 0
  %1998 = vmatprep.subr.bf16.mxu0 0
  %1999 = vmatpush2.bf16.msra.mxu0 0
  %2000 = vmatprep.subr.bf16.mxu0 0
  %2001 = vmatpush2.bf16.msra.mxu0 0
  %2002 = vmatprep.subr.bf16.mxu0 0
  %2003 = vmatpush2.bf16.msra.mxu0 0
  %2004 = vmatprep.subr.bf16.mxu0 0
  %2005 = vmatpush2.bf16.msra.mxu0 0
  %2006 = vmatprep.subr.bf16.mxu0 0
  %2007 = vmatpush2.bf16.msra.mxu0 0
  %2008 = vmatprep.subr.bf16.mxu0 0
  %2009 = vmatpush2.bf16.msra.mxu0 0
  %2010 = vmatprep.subr.bf16.mxu0 0
  %2011 = vmatpush2.bf16.msra.mxu0 0
  %2012 = vmatprep.mubr.bf16.mxu0 0
  %2013 = vmatmul.mubr.bf16.gmra.mxu0 %v1978
  %v2014 = vpop.f32.mrf.mxu0
  %v2015 = vadd.f32 0.0, %v2014
  %v2016 = vpop.f32.mrf.mxu0
  %v2017 = vadd.f32 0.0, %v2016
  %v2018 = vpop.f32.mrf.mxu0
  %v2019 = vpop.f32.mrf.mxu0
  %2020 = vdwg.mxu0
  %v2023 = vrot.slane %v2015, 4
  %v2024 = vrot.slane %v2017, 4
  %v2027 = vadd.f32 %v1970, %v2023
  %v2028 = vadd.f32 %v1971, %v2024
  %v2029 = vxor.u32 %v2027, 2147483648
  %v2030 = vmul.f32 %v2029, 1.442695
  %v2031 = vpow.pop %v2030
  %v2032 = vadd.f32 %v2031, 1.0
  %v2033 = vrcp.pop %v2032
  %v2034 = vmul.f32 1.0, %v2033
  %v2035 = vtanh.pop %v2028
  %v2036 = vxor.u32 %v2028, 2147483648
  %v2037 = vmul.f32 %v2036, 1.442695
  %v2038 = vpow.pop %v2037
  %v2039 = vadd.f32 %v2038, 1.0
  %v2040 = vrcp.pop %v2039
  %v2041 = vmul.f32 1.0, %v2040
  %v2043 = vrot.slane %v1961, 2
  %v2045 = vmul.f32 %v2034, %v2043
  %v2046 = vmul.f32 %v2034, %v2035
  %2048 = vrot.lane.b32.xlu0 %v2046, 64
  %v2049 = vpop.permute.xlu0 %2048
  %v2051 = vadd.f32 %v2045, %v2049
  %v2052 = vtanh.pop %v2051
  %v2053 = vmul.f32 %v2041, %v2052
  %2055 = vrot.lane.b32.xlu0 %v2053, 64
  %v2056 = vpop.permute.xlu0 %2055
  %2058 = vst.msk [vmem:[%s1968 + $0x8] sm:$0x30] %vm1304, %v2056
  %v2059 = vld [vmem:[#allocation2 + $0x10] sm:$0xc]
  %v2060 = vld [vmem:[#allocation2 + $0x18] sm:$0xc]
  %v2061 = vpack.c.bf16 %v2053, %v2053
  %v2063 = vrot.slane %v2061, 2
  %2064 = vrot.lane.b32.xlu0 %v2063, 64
  %v2065 = vpop.permute.xlu0 %2064
  %v2067 = vsel %vm1052, %v2065, 0
  %2069 = vmatprep.subr.bf16.mxu0 0
  %2070 = vmatpush1.bf16.msra.mxu0 0
  %2071 = vmatprep.subr.bf16.mxu0 0
  %2072 = vmatpush1.bf16.msra.mxu0 0
  %2073 = vmatprep.subr.bf16.mxu0 0
  %2074 = vmatpush1.bf16.msra.mxu0 0
  %2075 = vmatprep.subr.bf16.mxu0 0
  %2076 = vmatpush1.bf16.msra.mxu0 0
  %2077 = vmatprep.subr.bf16.mxu0 %v1884
  %2078 = vmatpush1.bf16.msra.mxu0 %v1883
  %2079 = vmatprep.subr.bf16.mxu0 %v1882
  %2080 = vmatpush1.bf16.msra.mxu0 %v1881
  %2081 = vmatprep.subr.bf16.mxu0 %v1880
  %2082 = vmatpush1.bf16.msra.mxu0 %v1879
  %2083 = vmatprep.subr.bf16.mxu0 %v1878
  %2084 = vmatpush1.bf16.msra.mxu0 %v1877
  %2085 = vmatprep.subr.bf16.mxu0 0
  %2086 = vmatpush2.bf16.msra.mxu0 0
  %2087 = vmatprep.subr.bf16.mxu0 0
  %2088 = vmatpush2.bf16.msra.mxu0 0
  %2089 = vmatprep.subr.bf16.mxu0 0
  %2090 = vmatpush2.bf16.msra.mxu0 0
  %2091 = vmatprep.subr.bf16.mxu0 0
  %2092 = vmatpush2.bf16.msra.mxu0 0
  %2093 = vmatprep.subr.bf16.mxu0 0
  %2094 = vmatpush2.bf16.msra.mxu0 0
  %2095 = vmatprep.subr.bf16.mxu0 0
  %2096 = vmatpush2.bf16.msra.mxu0 0
  %2097 = vmatprep.subr.bf16.mxu0 0
  %2098 = vmatpush2.bf16.msra.mxu0 0
  %2099 = vmatprep.subr.bf16.mxu0 0
  %2100 = vmatpush2.bf16.msra.mxu0 0
  %2101 = vmatprep.mubr.bf16.mxu0 0
  %2102 = vmatmul.mubr.bf16.gmra.mxu0 %v2067
  %v2103 = vpop.f32.mrf.mxu0
  %v2104 = vadd.f32 0.0, %v2103
  %v2105 = vpop.f32.mrf.mxu0
  %v2106 = vadd.f32 0.0, %v2105
  %v2107 = vpop.f32.mrf.mxu0
  %v2108 = vpop.f32.mrf.mxu0
  %2109 = vdwg.mxu0
  %v2112 = vrot.slane %v2104, 6
  %v2113 = vrot.slane %v2106, 6
  %v2116 = vadd.f32 %v2059, %v2112
  %v2117 = vadd.f32 %v2060, %v2113
  %v2118 = vxor.u32 %v2116, 2147483648
  %v2119 = vmul.f32 %v2118, 1.442695
  %v2120 = vpow.pop %v2119
  %v2121 = vadd.f32 %v2120, 1.0
  %v2122 = vrcp.pop %v2121
  %v2123 = vmul.f32 1.0, %v2122
  %v2124 = vtanh.pop %v2117
  %v2125 = vxor.u32 %v2117, 2147483648
  %v2126 = vmul.f32 %v2125, 1.442695
  %v2127 = vpow.pop %v2126
  %v2128 = vadd.f32 %v2127, 1.0
  %v2129 = vrcp.pop %v2128
  %v2130 = vmul.f32 1.0, %v2129
  %v2132 = vrot.slane %v2051, 2
  %v2134 = vmul.f32 %v2123, %v2132
  %v2135 = vmul.f32 %v2123, %v2124
  %2137 = vrot.lane.b32.xlu0 %v2135, 64
  %v2138 = vpop.permute.xlu0 %2137
  %v2140 = vadd.f32 %v2134, %v2138
  %v2141 = vtanh.pop %v2140
  %v2142 = vmul.f32 %v2130, %v2141
  %2144 = vrot.lane.b32.xlu0 %v2142, 64
  %v2145 = vpop.permute.xlu0 %2144
  %2147 = vst.msk [vmem:[%s1968 + $0x8] sm:$0xc] %vm1214, %v2145
  %v2148 = vld [vmem:[#allocation2 + $0x10] sm:$0x3]
  %v2149 = vld [vmem:[#allocation2 + $0x18] sm:$0x3]
  %v2150 = vpack.c.bf16 %v2142, %v2142
  %v2152 = vrot.slane %v2150, 1
  %2153 = vrot.lane.b32.xlu0 %v2152, 64
  %v2154 = vpop.permute.xlu0 %2153
  %v2156 = vsel %vm1052, %v2154, 0
  %2158 = vmatprep.subr.bf16.mxu0 0
  %2159 = vmatpush1.bf16.msra.mxu0 0
  %2160 = vmatprep.subr.bf16.mxu0 0
  %2161 = vmatpush1.bf16.msra.mxu0 0
  %2162 = vmatprep.subr.bf16.mxu0 0
  %2163 = vmatpush1.bf16.msra.mxu0 0
  %2164 = vmatprep.subr.bf16.mxu0 0
  %2165 = vmatpush1.bf16.msra.mxu0 0
  %2166 = vmatprep.subr.bf16.mxu0 %v1884
  %2167 = vmatpush1.bf16.msra.mxu0 %v1883
  %2168 = vmatprep.subr.bf16.mxu0 %v1882
  %2169 = vmatpush1.bf16.msra.mxu0 %v1881
  %2170 = vmatprep.subr.bf16.mxu0 %v1880
  %2171 = vmatpush1.bf16.msra.mxu0 %v1879
  %2172 = vmatprep.subr.bf16.mxu0 %v1878
  %2173 = vmatpush1.bf16.msra.mxu0 %v1877
  %2174 = vmatprep.subr.bf16.mxu0 0
  %2175 = vmatpush2.bf16.msra.mxu0 0
  %2176 = vmatprep.subr.bf16.mxu0 0
  %2177 = vmatpush2.bf16.msra.mxu0 0
  %2178 = vmatprep.subr.bf16.mxu0 0
  %2179 = vmatpush2.bf16.msra.mxu0 0
  %2180 = vmatprep.subr.bf16.mxu0 0
  %2181 = vmatpush2.bf16.msra.mxu0 0
  %2182 = vmatprep.subr.bf16.mxu0 0
  %2183 = vmatpush2.bf16.msra.mxu0 0
  %2184 = vmatprep.subr.bf16.mxu0 0
  %2185 = vmatpush2.bf16.msra.mxu0 0
  %2186 = vmatprep.subr.bf16.mxu0 0
  %2187 = vmatpush2.bf16.msra.mxu0 0
  %2188 = vmatprep.subr.bf16.mxu0 0
  %2189 = vmatpush2.bf16.msra.mxu0 0
  %2190 = vmatprep.mubr.bf16.mxu0 0
  %2191 = vmatmul.mubr.bf16.gmra.mxu0 %v2156
  %v2192 = vpop.f32.mrf.mxu0
  %v2193 = vadd.f32 0.0, %v2192
  %v2194 = vpop.f32.mrf.mxu0
  %v2195 = vadd.f32 0.0, %v2194
  %v2196 = vpop.f32.mrf.mxu0
  %v2197 = vpop.f32.mrf.mxu0
  %2198 = vdwg.mxu0
  %v2199 = vadd.f32 %v2148, %v2193
  %v2200 = vadd.f32 %v2149, %v2195
  %v2201 = vxor.u32 %v2199, 2147483648
  %v2202 = vmul.f32 %v2201, 1.442695
  %v2203 = vpow.pop %v2202
  %v2204 = vadd.f32 %v2203, 1.0
  %v2205 = vrcp.pop %v2204
  %v2206 = vmul.f32 1.0, %v2205
  %v2207 = vtanh.pop %v2200
  %v2208 = vxor.u32 %v2200, 2147483648
  %v2209 = vmul.f32 %v2208, 1.442695
  %v2210 = vpow.pop %v2209
  %v2211 = vadd.f32 %v2210, 1.0
  %v2212 = vrcp.pop %v2211
  %v2213 = vmul.f32 1.0, %v2212
  %v2215 = vrot.slane %v2140, 2
  %v2217 = vmul.f32 %v2206, %v2215
  %v2218 = vmul.f32 %v2206, %v2207
  %2220 = vrot.lane.b32.xlu0 %v2218, 64
  %v2221 = vpop.permute.xlu0 %2220
  %v2223 = vadd.f32 %v2217, %v2221
  %v2224 = vtanh.pop %v2223
  %v2225 = vmul.f32 %v2213, %v2224
  %2227 = vrot.lane.b32.xlu0 %v2225, 64
  %v2228 = vpop.permute.xlu0 %2227
  %2230 = vst.msk [vmem:[%s1968 + $0x8] sm:$0x3] %vm1125, %v2228
  %v2231 = vld [vmem:[#allocation2] sm:$0xc0]
  %v2232 = vld [vmem:[#allocation2 + $0x8] sm:$0xc0]
  %v2233 = vpack.c.bf16 %v2225, %v2225
  %2235 = vrot.lane.b32.xlu0 %v2233, 64
  %v2236 = vpop.permute.xlu0 %2235
  %v2238 = vsel %vm1052, %v2236, 0
  %2240 = vmatprep.subr.bf16.mxu0 0
  %2241 = vmatpush1.bf16.msra.mxu0 0
  %2242 = vmatprep.subr.bf16.mxu0 0
  %2243 = vmatpush1.bf16.msra.mxu0 0
  %2244 = vmatprep.subr.bf16.mxu0 0
  %2245 = vmatpush1.bf16.msra.mxu0 0
  %2246 = vmatprep.subr.bf16.mxu0 0
  %2247 = vmatpush1.bf16.msra.mxu0 0
  %2248 = vmatprep.subr.bf16.mxu0 %v1884
  %2249 = vmatpush1.bf16.msra.mxu0 %v1883
  %2250 = vmatprep.subr.bf16.mxu0 %v1882
  %2251 = vmatpush1.bf16.msra.mxu0 %v1881
  %2252 = vmatprep.subr.bf16.mxu0 %v1880
  %2253 = vmatpush1.bf16.msra.mxu0 %v1879
  %2254 = vmatprep.subr.bf16.mxu0 %v1878
  %2255 = vmatpush1.bf16.msra.mxu0 %v1877
  %2256 = vmatprep.subr.bf16.mxu0 0
  %2257 = vmatpush2.bf16.msra.mxu0 0
  %2258 = vmatprep.subr.bf16.mxu0 0
  %2259 = vmatpush2.bf16.msra.mxu0 0
  %2260 = vmatprep.subr.bf16.mxu0 0
  %2261 = vmatpush2.bf16.msra.mxu0 0
  %2262 = vmatprep.subr.bf16.mxu0 0
  %2263 = vmatpush2.bf16.msra.mxu0 0
  %2264 = vmatprep.subr.bf16.mxu0 0
  %2265 = vmatpush2.bf16.msra.mxu0 0
  %2266 = vmatprep.subr.bf16.mxu0 0
  %2267 = vmatpush2.bf16.msra.mxu0 0
  %2268 = vmatprep.subr.bf16.mxu0 0
  %2269 = vmatpush2.bf16.msra.mxu0 0
  %2270 = vmatprep.subr.bf16.mxu0 0
  %2271 = vmatpush2.bf16.msra.mxu0 0
  %2272 = vmatprep.mubr.bf16.mxu0 0
  %2273 = vmatmul.mubr.bf16.gmra.mxu0 %v2238
  %v2274 = vpop.f32.mrf.mxu0
  %v2275 = vadd.f32 0.0, %v2274
  %v2276 = vpop.f32.mrf.mxu0
  %v2277 = vadd.f32 0.0, %v2276
  %v2278 = vpop.f32.mrf.mxu0
  %v2279 = vpop.f32.mrf.mxu0
  %2280 = vdwg.mxu0
  %v2283 = vrot.slane %v2275, 2
  %v2284 = vrot.slane %v2277, 2
  %v2287 = vadd.f32 %v2231, %v2283
  %v2288 = vadd.f32 %v2232, %v2284
  %v2289 = vxor.u32 %v2287, 2147483648
  %v2290 = vmul.f32 %v2289, 1.442695
  %v2291 = vpow.pop %v2290
  %v2292 = vadd.f32 %v2291, 1.0
  %v2293 = vrcp.pop %v2292
  %v2294 = vmul.f32 1.0, %v2293
  %v2295 = vtanh.pop %v2288
  %v2296 = vxor.u32 %v2288, 2147483648
  %v2297 = vmul.f32 %v2296, 1.442695
  %v2298 = vpow.pop %v2297
  %v2299 = vadd.f32 %v2298, 1.0
  %v2300 = vrcp.pop %v2299
  %v2301 = vmul.f32 1.0, %v2300
  %v2303 = vrot.slane %v2223, 2
  %v2305 = vmul.f32 %v2294, %v2303
  %v2306 = vmul.f32 %v2294, %v2295
  %2308 = vrot.lane.b32.xlu0 %v2306, 64
  %v2309 = vpop.permute.xlu0 %2308
  %v2311 = vadd.f32 %v2305, %v2309
  %v2312 = vtanh.pop %v2311
  %v2313 = vmul.f32 %v2301, %v2312
  %2315 = vrot.lane.b32.xlu0 %v2313, 64
  %v2316 = vpop.permute.xlu0 %2315
  %2318 = vst.msk [vmem:[%s1968] sm:$0xc0] %vm1394, %v2316
  %v2319 = vld [vmem:[#allocation2] sm:$0x30]
  %v2320 = vld [vmem:[#allocation2 + $0x8] sm:$0x30]
  %v2321 = vpack.c.bf16 %v2313, %v2313
  %v2323 = vrot.slane %v2321, 3
  %2324 = vrot.lane.b32.xlu0 %v2323, 64
  %v2325 = vpop.permute.xlu0 %2324
  %v2327 = vsel %vm1052, %v2325, 0
  %2329 = vmatprep.subr.bf16.mxu0 0
  %2330 = vmatpush1.bf16.msra.mxu0 0
  %2331 = vmatprep.subr.bf16.mxu0 0
  %2332 = vmatpush1.bf16.msra.mxu0 0
  %2333 = vmatprep.subr.bf16.mxu0 0
  %2334 = vmatpush1.bf16.msra.mxu0 0
  %2335 = vmatprep.subr.bf16.mxu0 0
  %2336 = vmatpush1.bf16.msra.mxu0 0
  %2337 = vmatprep.subr.bf16.mxu0 %v1884
  %2338 = vmatpush1.bf16.msra.mxu0 %v1883
  %2339 = vmatprep.subr.bf16.mxu0 %v1882
  %2340 = vmatpush1.bf16.msra.mxu0 %v1881
  %2341 = vmatprep.subr.bf16.mxu0 %v1880
  %2342 = vmatpush1.bf16.msra.mxu0 %v1879
  %2343 = vmatprep.subr.bf16.mxu0 %v1878
  %2344 = vmatpush1.bf16.msra.mxu0 %v1877
  %2345 = vmatprep.subr.bf16.mxu0 0
  %2346 = vmatpush2.bf16.msra.mxu0 0
  %2347 = vmatprep.subr.bf16.mxu0 0
  %2348 = vmatpush2.bf16.msra.mxu0 0
  %2349 = vmatprep.subr.bf16.mxu0 0
  %2350 = vmatpush2.bf16.msra.mxu0 0
  %2351 = vmatprep.subr.bf16.mxu0 0
  %2352 = vmatpush2.bf16.msra.mxu0 0
  %2353 = vmatprep.subr.bf16.mxu0 0
  %2354 = vmatpush2.bf16.msra.mxu0 0
  %2355 = vmatprep.subr.bf16.mxu0 0
  %2356 = vmatpush2.bf16.msra.mxu0 0
  %2357 = vmatprep.subr.bf16.mxu0 0
  %2358 = vmatpush2.bf16.msra.mxu0 0
  %2359 = vmatprep.subr.bf16.mxu0 0
  %2360 = vmatpush2.bf16.msra.mxu0 0
  %2361 = vmatprep.mubr.bf16.mxu0 0
  %2362 = vmatmul.mubr.bf16.gmra.mxu0 %v2327
  %v2363 = vpop.f32.mrf.mxu0
  %v2364 = vadd.f32 0.0, %v2363
  %v2365 = vpop.f32.mrf.mxu0
  %v2366 = vadd.f32 0.0, %v2365
  %v2367 = vpop.f32.mrf.mxu0
  %v2368 = vpop.f32.mrf.mxu0
  %2369 = vdwg.mxu0
  %v2372 = vrot.slane %v2364, 4
  %v2373 = vrot.slane %v2366, 4
  %v2376 = vadd.f32 %v2319, %v2372
  %v2377 = vadd.f32 %v2320, %v2373
  %v2378 = vxor.u32 %v2376, 2147483648
  %v2379 = vmul.f32 %v2378, 1.442695
  %v2380 = vpow.pop %v2379
  %v2381 = vadd.f32 %v2380, 1.0
  %v2382 = vrcp.pop %v2381
  %v2383 = vmul.f32 1.0, %v2382
  %v2384 = vtanh.pop %v2377
  %v2385 = vxor.u32 %v2377, 2147483648
  %v2386 = vmul.f32 %v2385, 1.442695
  %v2387 = vpow.pop %v2386
  %v2388 = vadd.f32 %v2387, 1.0
  %v2389 = vrcp.pop %v2388
  %v2390 = vmul.f32 1.0, %v2389
  %v2392 = vrot.slane %v2311, 2
  %v2394 = vmul.f32 %v2383, %v2392
  %v2395 = vmul.f32 %v2383, %v2384
  %2397 = vrot.lane.b32.xlu0 %v2395, 64
  %v2398 = vpop.permute.xlu0 %2397
  %v2400 = vadd.f32 %v2394, %v2398
  %v2401 = vtanh.pop %v2400
  %v2402 = vmul.f32 %v2390, %v2401
  %2404 = vrot.lane.b32.xlu0 %v2402, 64
  %v2405 = vpop.permute.xlu0 %2404
  %2407 = vst.msk [vmem:[%s1968] sm:$0x30] %vm1304, %v2405
  %v2408 = vld [vmem:[#allocation2] sm:$0xc]
  %v2409 = vld [vmem:[#allocation2 + $0x8] sm:$0xc]
  %v2410 = vpack.c.bf16 %v2402, %v2402
  %v2412 = vrot.slane %v2410, 2
  %2413 = vrot.lane.b32.xlu0 %v2412, 64
  %v2414 = vpop.permute.xlu0 %2413
  %v2416 = vsel %vm1052, %v2414, 0
  %2418 = vmatprep.subr.bf16.mxu0 0
  %2419 = vmatpush1.bf16.msra.mxu0 0
  %2420 = vmatprep.subr.bf16.mxu0 0
  %2421 = vmatpush1.bf16.msra.mxu0 0
  %2422 = vmatprep.subr.bf16.mxu0 0
  %2423 = vmatpush1.bf16.msra.mxu0 0
  %2424 = vmatprep.subr.bf16.mxu0 0
  %2425 = vmatpush1.bf16.msra.mxu0 0
  %2426 = vmatprep.subr.bf16.mxu0 %v1884
  %2427 = vmatpush1.bf16.msra.mxu0 %v1883
  %2428 = vmatprep.subr.bf16.mxu0 %v1882
  %2429 = vmatpush1.bf16.msra.mxu0 %v1881
  %2430 = vmatprep.subr.bf16.mxu0 %v1880
  %2431 = vmatpush1.bf16.msra.mxu0 %v1879
  %2432 = vmatprep.subr.bf16.mxu0 %v1878
  %2433 = vmatpush1.bf16.msra.mxu0 %v1877
  %2434 = vmatprep.subr.bf16.mxu0 0
  %2435 = vmatpush2.bf16.msra.mxu0 0
  %2436 = vmatprep.subr.bf16.mxu0 0
  %2437 = vmatpush2.bf16.msra.mxu0 0
  %2438 = vmatprep.subr.bf16.mxu0 0
  %2439 = vmatpush2.bf16.msra.mxu0 0
  %2440 = vmatprep.subr.bf16.mxu0 0
  %2441 = vmatpush2.bf16.msra.mxu0 0
  %2442 = vmatprep.subr.bf16.mxu0 0
  %2443 = vmatpush2.bf16.msra.mxu0 0
  %2444 = vmatprep.subr.bf16.mxu0 0
  %2445 = vmatpush2.bf16.msra.mxu0 0
  %2446 = vmatprep.subr.bf16.mxu0 0
  %2447 = vmatpush2.bf16.msra.mxu0 0
  %2448 = vmatprep.subr.bf16.mxu0 0
  %2449 = vmatpush2.bf16.msra.mxu0 0
  %2450 = vmatprep.mubr.bf16.mxu0 0
  %2451 = vmatmul.mubr.bf16.gmra.mxu0 %v2416
  %v2452 = vpop.f32.mrf.mxu0
  %v2453 = vadd.f32 0.0, %v2452
  %v2454 = vpop.f32.mrf.mxu0
  %v2455 = vadd.f32 0.0, %v2454
  %v2456 = vpop.f32.mrf.mxu0
  %v2457 = vpop.f32.mrf.mxu0
  %2458 = vdwg.mxu0
  %v2461 = vrot.slane %v2453, 6
  %v2462 = vrot.slane %v2455, 6
  %v2465 = vadd.f32 %v2408, %v2461
  %v2466 = vadd.f32 %v2409, %v2462
  %v2467 = vxor.u32 %v2465, 2147483648
  %v2468 = vmul.f32 %v2467, 1.442695
  %v2469 = vpow.pop %v2468
  %v2470 = vadd.f32 %v2469, 1.0
  %v2471 = vrcp.pop %v2470
  %v2472 = vmul.f32 1.0, %v2471
  %v2473 = vtanh.pop %v2466
  %v2474 = vxor.u32 %v2466, 2147483648
  %v2475 = vmul.f32 %v2474, 1.442695
  %v2476 = vpow.pop %v2475
  %v2477 = vadd.f32 %v2476, 1.0
  %v2478 = vrcp.pop %v2477
  %v2479 = vmul.f32 1.0, %v2478
  %v2481 = vrot.slane %v2400, 2
  %v2483 = vmul.f32 %v2472, %v2481
  %v2484 = vmul.f32 %v2472, %v2473
  %2486 = vrot.lane.b32.xlu0 %v2484, 64
  %v2487 = vpop.permute.xlu0 %2486
  %v2489 = vadd.f32 %v2483, %v2487
  %v2490 = vtanh.pop %v2489
  %v2491 = vmul.f32 %v2479, %v2490
  %2493 = vrot.lane.b32.xlu0 %v2491, 64
  %v2494 = vpop.permute.xlu0 %2493
  %2496 = vst.msk [vmem:[%s1968] sm:$0xc] %vm1214, %v2494
  %v2497 = vld [vmem:[#allocation2] sm:$0x3]
  %v2498 = vld [vmem:[#allocation2 + $0x8] sm:$0x3]
  %v2499 = vpack.c.bf16 %v2491, %v2491
  %v2501 = vrot.slane %v2499, 1
  %2502 = vrot.lane.b32.xlu0 %v2501, 64
  %v2503 = vpop.permute.xlu0 %2502
  %v2505 = vsel %vm1052, %v2503, 0
  %2507 = vmatprep.subr.bf16.mxu0 0
  %2508 = vmatpush1.bf16.msra.mxu0 0
  %2509 = vmatprep.subr.bf16.mxu0 0
  %2510 = vmatpush1.bf16.msra.mxu0 0
  %2511 = vmatprep.subr.bf16.mxu0 0
  %2512 = vmatpush1.bf16.msra.mxu0 0
  %2513 = vmatprep.subr.bf16.mxu0 0
  %2514 = vmatpush1.bf16.msra.mxu0 0
  %2515 = vmatprep.subr.bf16.mxu0 %v1884
  %2516 = vmatpush1.bf16.msra.mxu0 %v1883
  %2517 = vmatprep.subr.bf16.mxu0 %v1882
  %2518 = vmatpush1.bf16.msra.mxu0 %v1881
  %2519 = vmatprep.subr.bf16.mxu0 %v1880
  %2520 = vmatpush1.bf16.msra.mxu0 %v1879
  %2521 = vmatprep.subr.bf16.mxu0 %v1878
  %2522 = vmatpush1.bf16.msra.mxu0 %v1877
  %2523 = vmatprep.subr.bf16.mxu0 0
  %2524 = vmatpush2.bf16.msra.mxu0 0
  %2525 = vmatprep.subr.bf16.mxu0 0
  %2526 = vmatpush2.bf16.msra.mxu0 0
  %2527 = vmatprep.subr.bf16.mxu0 0
  %2528 = vmatpush2.bf16.msra.mxu0 0
  %2529 = vmatprep.subr.bf16.mxu0 0
  %2530 = vmatpush2.bf16.msra.mxu0 0
  %2531 = vmatprep.subr.bf16.mxu0 0
  %2532 = vmatpush2.bf16.msra.mxu0 0
  %2533 = vmatprep.subr.bf16.mxu0 0
  %2534 = vmatpush2.bf16.msra.mxu0 0
  %2535 = vmatprep.subr.bf16.mxu0 0
  %2536 = vmatpush2.bf16.msra.mxu0 0
  %2537 = vmatprep.subr.bf16.mxu0 0
  %2538 = vmatpush2.bf16.msra.mxu0 0
  %2539 = vmatprep.mubr.bf16.mxu0 0
  %2540 = vmatmul.mubr.bf16.gmra.mxu0 %v2505
  %v2541 = vpop.f32.mrf.mxu0
  %v2542 = vadd.f32 0.0, %v2541
  %v2543 = vpop.f32.mrf.mxu0
  %v2544 = vadd.f32 0.0, %v2543
  %v2545 = vpop.f32.mrf.mxu0
  %v2546 = vpop.f32.mrf.mxu0
  %2547 = vdwg.mxu0
  %v2548 = vadd.f32 %v2497, %v2542
  %v2549 = vadd.f32 %v2498, %v2544
  %v2550 = vxor.u32 %v2548, 2147483648
  %v2551 = vmul.f32 %v2550, 1.442695
  %v2552 = vpow.pop %v2551
  %v2553 = vadd.f32 %v2552, 1.0
  %v2554 = vrcp.pop %v2553
  %v2555 = vmul.f32 1.0, %v2554
  %v2556 = vtanh.pop %v2549
  %v2557 = vxor.u32 %v2549, 2147483648
  %v2558 = vmul.f32 %v2557, 1.442695
  %v2559 = vpow.pop %v2558
  %v2560 = vadd.f32 %v2559, 1.0
  %v2561 = vrcp.pop %v2560
  %v2562 = vmul.f32 1.0, %v2561
  %v2564 = vrot.slane %v2489, 2
  %v2566 = vmul.f32 %v2555, %v2564
  %v2567 = vmul.f32 %v2555, %v2556
  %2569 = vrot.lane.b32.xlu0 %v2567, 64
  %v2570 = vpop.permute.xlu0 %2569
  %v2572 = vadd.f32 %v2566, %v2570
  %v2573 = vtanh.pop %v2572
  %v2574 = vmul.f32 %v2562, %v2573
  %2576 = vrot.lane.b32.xlu0 %v2574, 64
  %v2577 = vpop.permute.xlu0 %2576
  %2579 = vst.msk [vmem:[%s1968] sm:$0x3] %vm1125, %v2577
  %v2580 = vld [vmem:[#allocation3] sm:$0xff]
  %v2581 = vld [vmem:[#allocation3 + $0x8] sm:$0xff]
  %v2582 = vld [vmem:[#allocation3 + $0x10] sm:$0xff]
  %v2583 = vld [vmem:[#allocation3 + $0x18] sm:$0xff]
  %2586 = vrot.lane.b32.xlu0 %v2582, 64
  %v2587 = vpop.permute.xlu0 %2586
  %2588 = vrot.lane.b32.xlu0 %v2583, 64
  %v2589 = vpop.permute.xlu0 %2588
  %v2592 = vsel %vm1052, %v2580, %v2587
  %v2593 = vsel %vm1052, %v2581, %v2589
  %v2594 = vpack.c.bf16 %v2593, %v2592
  %v2595 = vld [vmem:[%s9] sm:$0xf]
  %v2596 = vld [vmem:[%s9 + $0x4] sm:$0xf]
  %v2597 = vld [vmem:[%s9 + $0x8] sm:$0xf]
  %v2598 = vld [vmem:[%s9 + $0xc] sm:$0xf]
  %v2599 = vld [vmem:[%s9 + $0x10] sm:$0xf]
  %v2600 = vld [vmem:[%s9 + $0x14] sm:$0xf]
  %v2601 = vld [vmem:[%s9 + $0x18] sm:$0xf]
  %v2602 = vld [vmem:[%s9 + $0x1c] sm:$0xf]
  %v2603 = vld [vmem:[%s9 + $0x20] sm:$0xf]
  %v2604 = vld [vmem:[%s9 + $0x24] sm:$0xf]
  %v2605 = vld [vmem:[%s9 + $0x28] sm:$0xf]
  %v2606 = vld [vmem:[%s9 + $0x2c] sm:$0xf]
  %v2607 = vld [vmem:[%s9 + $0x30] sm:$0xf]
  %v2608 = vld [vmem:[%s9 + $0x34] sm:$0xf]
  %v2609 = vld [vmem:[%s9 + $0x38] sm:$0xf]
  %v2610 = vld [vmem:[%s9 + $0x3c] sm:$0xf]
  %v2611 = vld [vmem:[%s10] sm:$0x1]
  %v2613 = vlaneseq
  %v2614 = vshrl.u32 %v2613, 7
  %v2615 = vsub.s32 0, %v2614
  %v2616 = vrot.slane %v2611, %v2615
  %v2634 = vunpack.c.l.b16 %v2595
  %v2635 = vunpack.c.l.b16 %v2596
  %v2636 = vunpack.c.l.b16 %v2597
  %v2637 = vunpack.c.l.b16 %v2598
  %v2638 = vunpack.c.l.b16 %v2599
  %v2639 = vunpack.c.l.b16 %v2600
  %v2640 = vunpack.c.l.b16 %v2601
  %v2641 = vunpack.c.l.b16 %v2602
  %v2642 = vunpack.c.l.b16 %v2603
  %v2643 = vunpack.c.l.b16 %v2604
  %v2644 = vunpack.c.l.b16 %v2605
  %v2645 = vunpack.c.l.b16 %v2606
  %v2646 = vunpack.c.l.b16 %v2607
  %v2647 = vunpack.c.l.b16 %v2608
  %v2648 = vunpack.c.l.b16 %v2609
  %v2649 = vunpack.c.l.b16 %v2610
  %v2650 = vpack.c.b16 %v2635, %v2634
  %v2651 = vpack.c.b16 %v2637, %v2636
  %v2652 = vpack.c.b16 %v2639, %v2638
  %v2653 = vpack.c.b16 %v2641, %v2640
  %v2654 = vpack.c.b16 %v2643, %v2642
  %v2655 = vpack.c.b16 %v2645, %v2644
  %v2656 = vpack.c.b16 %v2647, %v2646
  %v2657 = vpack.c.b16 %v2649, %v2648
  %2666 = vmatprep.subr.bf16.mxu0 0
  %2667 = vmatpush1.bf16.msra.mxu0 %v2657
  %2668 = vmatprep.subr.bf16.mxu0 0
  %2669 = vmatpush1.bf16.msra.mxu0 %v2656
  %2670 = vmatprep.subr.bf16.mxu0 0
  %2671 = vmatpush1.bf16.msra.mxu0 %v2655
  %2672 = vmatprep.subr.bf16.mxu0 0
  %2673 = vmatpush1.bf16.msra.mxu0 %v2654
  %2674 = vmatprep.subr.bf16.mxu0 0
  %2675 = vmatpush1.bf16.msra.mxu0 %v2653
  %2676 = vmatprep.subr.bf16.mxu0 0
  %2677 = vmatpush1.bf16.msra.mxu0 %v2652
  %2678 = vmatprep.subr.bf16.mxu0 0
  %2679 = vmatpush1.bf16.msra.mxu0 %v2651
  %2680 = vmatprep.subr.bf16.mxu0 0
  %2681 = vmatpush1.bf16.msra.mxu0 %v2650
  %2682 = vmatprep.subr.bf16.mxu0 0
  %2683 = vmatpush2.bf16.msra.mxu0 0
  %2684 = vmatprep.subr.bf16.mxu0 0
  %2685 = vmatpush2.bf16.msra.mxu0 0
  %2686 = vmatprep.subr.bf16.mxu0 0
  %2687 = vmatpush2.bf16.msra.mxu0 0
  %2688 = vmatprep.subr.bf16.mxu0 0
  %2689 = vmatpush2.bf16.msra.mxu0 0
  %2690 = vmatprep.subr.bf16.mxu0 0
  %2691 = vmatpush2.bf16.msra.mxu0 0
  %2692 = vmatprep.subr.bf16.mxu0 0
  %2693 = vmatpush2.bf16.msra.mxu0 0
  %2694 = vmatprep.subr.bf16.mxu0 0
  %2695 = vmatpush2.bf16.msra.mxu0 0
  %2696 = vmatprep.subr.bf16.mxu0 0
  %2697 = vmatpush2.bf16.msra.mxu0 0
  %2698 = vmatprep.mubr.bf16.mxu0 0
  %2699 = vmatmul.mubr.bf16.gmra.mxu0 %v2594
  %v2700 = vpop.f32.mrf.mxu0
  %v2701 = vadd.f32 %v2616, %v2700
  %v2702 = vpop.f32.mrf.mxu0
  %v2703 = vpop.f32.mrf.mxu0
  %v2704 = vadd.f32 %v2616, %v2703
  %v2705 = vpop.f32.mrf.mxu0
  %2706 = vdwg.mxu0
  %vm2707 = vcmask 89088
  %v2708 = vsel %vm2707, %v2701, -inf
  %2709 = vmax.xlane.f32.xlu0 %v2708
  %v2710 = vpop.xlane.xlu0 %2709
  %v2711 = vsel %vm2707, %v2704, -inf
  %2712 = vmax.xlane.f32.xlu0 %v2711
  %v2713 = vpop.xlane.xlu0 %2712
  %v2714 = vsub.f32 %v2701, %v2710
  %v2715 = vsub.f32 %v2704, %v2713
  %v2716 = vmul.f32 %v2714, 1.442695
  %v2717 = vpow.pop %v2716
  %v2718 = vmul.f32 %v2715, 1.442695
  %v2719 = vpow.pop %v2718
  %v2720 = vsel %vm2707, %v2717, 0.0
  %2721 = vadd.xlane.f32.xlu0 %v2720
  %v2722 = vpop.xlane.xlu0 %2721
  %v2723 = vsel %vm2707, %v2719, 0.0
  %2724 = vadd.xlane.f32.xlu0 %v2723
  %v2725 = vpop.xlane.xlu0 %2724
  %v2726 = vlog2.pop %v2722
  %v2727 = vmul.f32 %v2726, 0.6931472
  %v2728 = vlog2.pop %v2725
  %v2729 = vmul.f32 %v2728, 0.6931472
  %v2730 = vsub.f32 %v2714, %v2727
  %v2731 = vsub.f32 %v2715, %v2729
  %2732 = vst.msk [vmem:[%s11] sm:$0xff] %vm2707, %v2730
  %2733 = vst.msk [vmem:[%s11 + $0x8] sm:$0xff] %vm2707, %v2731
  // Predicated region
  $region46: #{forward.3} parent=0 // pred_check
    _
  $region47: #{forward.3} parent=0 // pred_check_branch
    %2735 = sbr.rel (0) target = $region49
  $region48: #{forward.3} parent=0 // pred_region
    _
  $region49: #{forward.3} parent=0 // pred_fallthru
    _
  // Predicated region
  $region50: #{forward.3} parent=0 // pred_check
    _
  $region51: #{forward.3} parent=0 // pred_check_branch
    %2737 = sbr.rel (0) target = $region53
  $region52: #{forward.3} parent=0 // pred_region
    _
  $region53: #{forward.3} parent=0 // pred_fallthru
    _

</llo_original>
